<compile_context>
chip_gen: v7x
topology: tpu7x:2x2x1
jax: 0.10.0
libtpu: 0.0.40
codegen_flags: <defaults>
</compile_context>

<pallas_src>
import functools

import jax
import jax.numpy as jnp
from jax.experimental import pallas as pl
from jax.experimental.pallas import tpu as pltpu

_BF16 = jnp.bfloat16
_F32 = jnp.float32

_VMEM = pl.BlockSpec(memory_space=pltpu.MemorySpace.VMEM)
_SMEM = pl.BlockSpec(memory_space=pltpu.MemorySpace.SMEM)
_ANY = pl.BlockSpec(memory_space=pl.ANY)


def _row_tile(n):
    # Whole-array rows when small; 256-row tiles otherwise so A streams through VMEM
    # with double buffering instead of requiring the full [N,N] matrix resident
    # (keeps the plan inside v7x's 64 MiB / default scoped VMEM limits).
    return n if n <= 256 else 256


# ---------------------------------------------------------------------------
# Kernel 1: GCN layer 1, o+s branches fused, original/augmented paths share A tiles
# ---------------------------------------------------------------------------

def _enc1_kernel(a_ref, a2_ref, x_ref, wo_ref, bo_ref, ws_ref, bs_ref, o_ref):
    x = x_ref[0]                                                          # (N, F) bf16
    ax = jnp.dot(a_ref[...], x, preferred_element_type=jnp.float32)       # (tm, F) f32
    a2x = jnp.dot(a2_ref[...], x, preferred_element_type=jnp.float32)
    ho = jnp.dot(ax.astype(_BF16), wo_ref[...],
                 preferred_element_type=jnp.float32) + bo_ref[...]
    hs = jnp.dot(a2x.astype(_BF16), ws_ref[...],
                 preferred_element_type=jnp.float32) + bs_ref[...]
    out = jnp.concatenate([jnp.maximum(ho, 0.0), jnp.maximum(hs, 0.0)], axis=1)
    o_ref[0] = out.astype(o_ref.dtype)


def encoder_layer1(a, a2, x_stack, w_o, b_o, w_s, b_s):
    n = a.shape[0]
    f = x_stack.shape[2]
    h1 = w_o.shape[1]
    tm = _row_tile(n)
    gr = pl.cdiv(n, tm)
    return pl.pallas_call(
        _enc1_kernel,
        out_shape=jax.ShapeDtypeStruct((2, n, 2 * h1), _BF16),
        grid_spec=pltpu.PrefetchScalarGridSpec(
            num_scalar_prefetch=0,
            grid=(gr, 2),  # (row tile, path); path inner -> A/A2 tile revisited, DMA'd once
            in_specs=[
                pl.BlockSpec((tm, n), lambda i, p: (i, 0)),       # A row tile
                pl.BlockSpec((tm, n), lambda i, p: (i, 0)),       # A2 row tile
                pl.BlockSpec((1, n, f), lambda i, p: (p, 0, 0)),  # X for this path
                pl.BlockSpec((f, h1), lambda i, p: (0, 0)),       # W_o1 (resident)
                pl.BlockSpec((1, h1), lambda i, p: (0, 0)),       # b_o1
                pl.BlockSpec((f, h1), lambda i, p: (0, 0)),       # W_s1
                pl.BlockSpec((1, h1), lambda i, p: (0, 0)),       # b_s1
            ],
            out_specs=pl.BlockSpec((1, tm, 2 * h1), lambda i, p: (p, i, 0)),
        ),
        compiler_params=pltpu.CompilerParams(
            dimension_semantics=("parallel", "arbitrary")),
    )(a, a2, x_stack, w_o, b_o, w_s, b_s)


# ---------------------------------------------------------------------------
# Kernel 2: GCN layer 2, o+s branches fused, A @ (X W) association, cached X W
# ---------------------------------------------------------------------------

def _enc2_kernel(x1_ref, a_ref, a2_ref, wo_ref, bo_ref, ws_ref, bs_ref,
                 o_ref, xwo_ref, xws_ref):
    # H2 < 2*H1, so multiply the narrower X@W operand against the [N,N] adjacency.
    # X@W is computed once per path (row tile 0) and cached in VMEM scratch.
    @pl.when(pl.program_id(1) == 0)
    def _():
        x1 = x1_ref[0]                                                    # (N, 2H1) bf16
        xwo_ref[...] = jnp.dot(x1, wo_ref[...],
                               preferred_element_type=jnp.float32).astype(_BF16)
        xws_ref[...] = jnp.dot(x1, ws_ref[...],
                               preferred_element_type=jnp.float32).astype(_BF16)

    ho = jnp.dot(a_ref[...], xwo_ref[...],
                 preferred_element_type=jnp.float32) + bo_ref[...]
    hs = jnp.dot(a2_ref[...], xws_ref[...],
                 preferred_element_type=jnp.float32) + bs_ref[...]
    o_ref[0] = jnp.concatenate([ho, hs], axis=1)


def encoder_layer2(x1_all, a, a2, w_o, b_o, w_s, b_s):
    n = a.shape[0]
    h1x2 = x1_all.shape[2]
    h2 = w_o.shape[1]
    tm = _row_tile(n)
    gr = pl.cdiv(n, tm)
    return pl.pallas_call(
        _enc2_kernel,
        out_shape=jax.ShapeDtypeStruct((2, n, 2 * h2), _F32),
        grid_spec=pltpu.PrefetchScalarGridSpec(
            num_scalar_prefetch=0,
            grid=(2, gr),  # (path, row tile); path parallel -> one path per TC on v7x
            in_specs=[
                pl.BlockSpec((1, n, h1x2), lambda p, i: (p, 0, 0)),  # X1 for this path
                pl.BlockSpec((tm, n), lambda p, i: (i, 0)),          # A row tile
                pl.BlockSpec((tm, n), lambda p, i: (i, 0)),          # A2 row tile
                pl.BlockSpec((h1x2, h2), lambda p, i: (0, 0)),       # W_o2
                pl.BlockSpec((1, h2), lambda p, i: (0, 0)),          # b_o2
                pl.BlockSpec((h1x2, h2), lambda p, i: (0, 0)),       # W_s2
                pl.BlockSpec((1, h2), lambda p, i: (0, 0)),          # b_s2
            ],
            out_specs=pl.BlockSpec((1, tm, 2 * h2), lambda p, i: (p, i, 0)),
            scratch_shapes=[pltpu.VMEM((n, h2), _BF16),
                            pltpu.VMEM((n, h2), _BF16)],
        ),
        compiler_params=pltpu.CompilerParams(
            dimension_semantics=("parallel", "arbitrary")),
    )(x1_all, a, a2, w_o, b_o, w_s, b_s)


# ---------------------------------------------------------------------------
# Kernel 3: AvgReadout + sigmoid + both bilinear discriminators fused
# ---------------------------------------------------------------------------

def _disc_kernel(x2_ref, w_ref, b_ref, ro_ref, ra_ref):
    xo = x2_ref[0]                                               # (N, H) f32
    xa = x2_ref[1]
    c_o = jax.nn.sigmoid(jnp.mean(xo, axis=0, keepdims=True))    # (1, H)
    c_a = jax.nn.sigmoid(jnp.mean(xa, axis=0, keepdims=True))
    w = w_ref[...]                                               # (H, H) f32
    # wc = W @ c^T, hoisted: one VPU multiply + XLU row-reduce per summary vector.
    wc_o = jnp.sum(w * c_o, axis=1, keepdims=True)               # (H, 1)
    wc_a = jnp.sum(w * c_a, axis=1, keepdims=True)               # (H, 1)
    v = jnp.concatenate([wc_o, wc_a], axis=1).astype(_BF16)      # (H, 2)
    so = jnp.dot(xo.astype(_BF16), v, preferred_element_type=jnp.float32)  # [xo.Wc_o, xo.Wc_a]
    sa = jnp.dot(xa.astype(_BF16), v, preferred_element_type=jnp.float32)  # [xa.Wc_o, xa.Wc_a]
    bias = b_ref[0, 0]
    # (N, 2) logits layout is dictated by the module's return type; these masked
    # 2-lane stores are negligible next to the fused matmuls above.
    ro_ref[...] = jnp.concatenate([so[:, 0:1], sa[:, 0:1]], axis=1) + bias
    ra_ref[...] = jnp.concatenate([sa[:, 1:2], so[:, 1:2]], axis=1) + bias


def readout_discriminator(x2_all, w_disc, b_disc):
    n = x2_all.shape[1]
    return pl.pallas_call(
        _disc_kernel,
        out_shape=(jax.ShapeDtypeStruct((n, 2), _F32),
                   jax.ShapeDtypeStruct((n, 2), _F32)),
        in_specs=[_VMEM, _VMEM, _SMEM],
        out_specs=(_VMEM, _VMEM),
    )(x2_all, w_disc, b_disc.reshape(1, 1))


# ---------------------------------------------------------------------------
# Kernel 4: edge decoder with in-kernel DMA row gather (idx in SMEM, x2_os in HBM)
# ---------------------------------------------------------------------------

def _decoder_kernel(idx_ref, x_hbm, w1_ref, b1_ref, w2_ref, b2_ref, o_ref,
                    e1_buf, e2_buf, sem, *, n_pairs):
    copies = []
    for i in range(n_pairs):
        c1 = pltpu.make_async_copy(x_hbm.at[pl.ds(idx_ref[0, i], 1), :],
                                   e1_buf.at[pl.ds(i, 1), :], sem.at[0, i])
        c2 = pltpu.make_async_copy(x_hbm.at[pl.ds(idx_ref[1, i], 1), :],
                                   e2_buf.at[pl.ds(i, 1), :], sem.at[1, i])
        c1.start()
        c2.start()
        copies += [c1, c2]
    for c in copies:
        c.wait()

    e1 = e1_buf[...]
    e2 = e2_buf[...]
    feat = jnp.concatenate([e1 + e2, e1 * e2, e1, e2], axis=1).astype(_BF16)  # (P, 8*H2)
    h = jnp.dot(feat, w1_ref[...], preferred_element_type=jnp.float32) + b1_ref[...]
    h = jnp.maximum(h, 0.0)
    o_ref[...] = jnp.dot(h.astype(_BF16), w2_ref[...],
                         preferred_element_type=jnp.float32) + b2_ref[...]


def edge_decoder(idx, x2_os, w1, b1, w2, b2):
    p = idx.shape[1]
    h = x2_os.shape[1]
    return pl.pallas_call(
        functools.partial(_decoder_kernel, n_pairs=p),
        out_shape=jax.ShapeDtypeStruct((p, 1), _F32),
        in_specs=[_SMEM, _ANY, _VMEM, _VMEM, _VMEM, _VMEM],
        out_specs=_VMEM,
        scratch_shapes=[pltpu.VMEM((p, h), _F32),
                        pltpu.VMEM((p, h), _F32),
                        pltpu.SemaphoreType.DMA((2, p))],
    )(idx, x2_os, w1, b1, w2, b2)


# ---------------------------------------------------------------------------
# CSGNN forward (GCN aggregator, eval mode)
# ---------------------------------------------------------------------------

def gcn_normalize(adj_binary):
    # GCNConv: A_hat = A + I, D^{-1/2} A_hat D^{-1/2}
    n = adj_binary.shape[0]
    a_hat = adj_binary + jnp.eye(n, dtype=_F32)
    deg = jnp.sum(a_hat, axis=1)
    dinv = 1.0 / jnp.sqrt(deg)
    return dinv[:, None] * a_hat * dinv[None, :]


def csgnn_forward(params, x_o, x_a, a_norm, a2_norm, idx):
    a_bf = a_norm.astype(_BF16)
    a2_bf = a2_norm.astype(_BF16)
    x_stack = jnp.stack([x_o, x_a], axis=0).astype(_BF16)     # (2, N, F): orig | aug

    # TODO(synk): F.dropout skipped (eval-mode identity; training-mode stochastic dropout not modeled)
    x1_all = encoder_layer1(
        a_bf, a2_bf, x_stack,
        params["w_o1"].astype(_BF16), params["b_o1"].reshape(1, -1),
        params["w_s1"].astype(_BF16), params["b_s1"].reshape(1, -1))

    x2_all = encoder_layer2(
        x1_all, a_bf, a2_bf,
        params["w_o2"].astype(_BF16), params["b_o2"].reshape(1, -1),
        params["w_s2"].astype(_BF16), params["b_s2"].reshape(1, -1))

    x2_os = x2_all[0]                                          # (N, 2*H2) f32 (returned)
    ret_os, ret_os_a = readout_discriminator(x2_all, params["w_disc"], params["b_disc"])

    log = edge_decoder(
        idx.astype(jnp.int32), x2_os,
        params["w_dec1"].astype(_BF16), params["b_dec1"].reshape(1, -1),
        params["w_dec2"].astype(_BF16), params["b_dec2"].reshape(1, -1))
    return log, ret_os, ret_os_a, x2_os


# ---------------------------------------------------------------------------
# Pure-JAX f32 reference (for tolerance check) and input construction
# ---------------------------------------------------------------------------

def csgnn_reference(params, x_o, x_a, a_norm, a2_norm, idx):
    def gcn(a, x, w, b, relu):
        h = jnp.dot(a, jnp.dot(x, w)) + b
        return jnp.maximum(h, 0.0) if relu else h

    def encode(x):
        x1 = jnp.concatenate([gcn(a_norm, x, params["w_o1"], params["b_o1"], True),
                              gcn(a2_norm, x, params["w_s1"], params["b_s1"], True)], axis=1)
        x2 = jnp.concatenate([gcn(a_norm, x1, params["w_o2"], params["b_o2"], False),
                              gcn(a2_norm, x1, params["w_s2"], params["b_s2"], False)], axis=1)
        return x2

    x2_os = encode(x_o)
    x2_os_a = encode(x_a)
    h_os = jax.nn.sigmoid(jnp.mean(x2_os, axis=0))
    h_os_a = jax.nn.sigmoid(jnp.mean(x2_os_a, axis=0))

    def disc(c, hpl, hmi):
        wc = params["w_disc"] @ c
        return jnp.stack([hpl @ wc, hmi @ wc], axis=1) + params["b_disc"][0]

    ret_os = disc(h_os, x2_os, x2_os_a)
    ret_os_a = disc(h_os_a, x2_os_a, x2_os)

    e1 = x2_os[idx[0]]
    e2 = x2_os[idx[1]]
    feat = jnp.concatenate([e1 + e2, e1 * e2, e1, e2], axis=1)
    hdec = jnp.maximum(feat @ params["w_dec1"] + params["b_dec1"], 0.0)
    log = hdec @ params["w_dec2"] + params["b_dec2"]
    return log, ret_os, ret_os_a, x2_os


def init_params(key, feature, hidden1, hidden2, decoder1):
    ks = jax.random.split(key, 12)
    h2x2 = hidden2 * 2

    def glorot(k, shape):
        fan_in, fan_out = shape[0], shape[1]
        std = jnp.sqrt(2.0 / (fan_in + fan_out))
        return (jax.random.normal(k, shape) * std).astype(_F32)

    return {
        # GCN encoders (weights stored as [in, out])
        "w_o1": glorot(ks[0], (feature, hidden1)),
        "b_o1": jnp.zeros((hidden1,), _F32),
        "w_s1": glorot(ks[1], (feature, hidden1)),
        "b_s1": jnp.zeros((hidden1,), _F32),
        "w_o2": glorot(ks[2], (hidden1 * 2, hidden2)),
        "b_o2": jnp.zeros((hidden2,), _F32),
        "w_s2": glorot(ks[3], (hidden1 * 2, hidden2)),
        "b_s2": jnp.zeros((hidden2,), _F32),
        # Discriminator: nn.Bilinear(2*H2, 2*H2, 1), xavier_normal weight, zero bias
        "w_disc": glorot(ks[4], (h2x2, h2x2)),
        "b_disc": jnp.zeros((1,), _F32),
        # decoder1: Linear(2*H2*4, decoder1); decoder2: Linear(decoder1, 1)
        "w_dec1": glorot(ks[5], (h2x2 * 4, decoder1)),
        "b_dec1": (jax.random.normal(ks[6], (decoder1,)) * 0.01).astype(_F32),
        "w_dec2": glorot(ks[7], (decoder1, 1)),
        "b_dec2": (jax.random.normal(ks[8], (1,)) * 0.01).astype(_F32),
    }


def make_adjacency(key, n, p=0.25):
    a = (jax.random.uniform(key, (n, n)) < p).astype(_F32)
    a = jnp.clip(a + a.T, 0.0, 1.0)
    a = a * (1.0 - jnp.eye(n, dtype=_F32))  # no self loops; GCN normalization adds them
    return a


if __name__ == "__main__":
    N, FEAT, H1, H2, DEC1, P = 16, 8, 16, 16, 32, 4

    key = jax.random.PRNGKey(0)
    k_par, k_xo, k_xa, k_a1, k_a2, k_idx = jax.random.split(key, 6)

    params = init_params(k_par, FEAT, H1, H2, DEC1)
    x_o = jax.random.normal(k_xo, (N, FEAT), dtype=_F32)      # data_o.x
    x_a = jax.random.normal(k_xa, (N, FEAT), dtype=_F32)      # data_a.x
    a_norm = gcn_normalize(make_adjacency(k_a1, N))           # from data_o.edge_index
    a2_norm = gcn_normalize(make_adjacency(k_a2, N))          # from data_s.edge_index
    idx = jax.random.randint(k_idx, (2, P), 0, N)             # edge index pairs

    fwd = jax.jit(csgnn_forward)
    log, ret_os, ret_os_a, x2_os = fwd(params, x_o, x_a, a_norm, a2_norm, idx)
    jax.block_until_ready((log, ret_os, ret_os_a, x2_os))

    assert log.shape == (P, 1)
    assert ret_os.shape == (N, 2)
    assert ret_os_a.shape == (N, 2)
    assert x2_os.shape == (N, 2 * H2)

    # bf16-tolerance correctness check against a pure-JAX f32 reference.
    ref = csgnn_reference(params, x_o, x_a, a_norm, a2_norm, idx)
    for got, want in zip((log, ret_os, ret_os_a, x2_os), ref):
        assert jnp.allclose(got, want, rtol=1e-1, atol=1e-1), (
            float(jnp.max(jnp.abs(got - want))))

    print("KERNEL_OK")
</pallas_src>

<mosaic_0001>
module attributes {stable_mosaic.version = 11 : i64} {
  func.func @_enc1_kernel(%arg0: i32, %arg1: i32, %arg2: memref<16x16xbf16, #tpu.memory_space<vmem>>, %arg3: memref<16x16xbf16, #tpu.memory_space<vmem>>, %arg4: memref<1x16x8xbf16, #tpu.memory_space<vmem>>, %arg5: memref<8x16xbf16, #tpu.memory_space<vmem>>, %arg6: memref<1x16xf32, #tpu.memory_space<vmem>>, %arg7: memref<8x16xbf16, #tpu.memory_space<vmem>>, %arg8: memref<1x16xf32, #tpu.memory_space<vmem>>, %arg9: memref<1x16x32xbf16, #tpu.memory_space<vmem>>) attributes {dimension_semantics = [#tpu.dimension_semantics<parallel>, #tpu.dimension_semantics<arbitrary>], iteration_bounds = array<i64: 1, 2>, scalar_prefetch = 0 : i64, scratch_operands = 0 : i64, tpu.core_type = #tpu.core_type<tc>, window_params = [{transform_indices = @transform_0, window_bounds = array<i64: 16, 16>}, {transform_indices = @transform_1, window_bounds = array<i64: 16, 16>}, {transform_indices = @transform_2, window_bounds = array<i64: 1, 16, 8>}, {pipeline_mode = #tpu.pipeline_mode<synchronous>, transform_indices = @transform_3, window_bounds = array<i64: 8, 16>}, {pipeline_mode = #tpu.pipeline_mode<synchronous>, transform_indices = @transform_4, window_bounds = array<i64: 1, 16>}, {pipeline_mode = #tpu.pipeline_mode<synchronous>, transform_indices = @transform_5, window_bounds = array<i64: 8, 16>}, {pipeline_mode = #tpu.pipeline_mode<synchronous>, transform_indices = @transform_6, window_bounds = array<i64: 1, 16>}, {transform_indices = @transform_7, window_bounds = array<i64: 1, 16, 32>}]} {
    %c0 = arith.constant 0 : index
    %c0_0 = arith.constant 0 : index
    %c0_1 = arith.constant 0 : index
    %0 = vector.load %arg4[%c0, %c0_0, %c0_1] : memref<1x16x8xbf16, #tpu.memory_space<vmem>>, vector<1x16x8xbf16>
    %1 = vector.shape_cast %0 : vector<1x16x8xbf16> to vector<16x8xbf16>
    %c0_2 = arith.constant 0 : index
    %c0_3 = arith.constant 0 : index
    %2 = vector.load %arg2[%c0_2, %c0_3] : memref<16x16xbf16, #tpu.memory_space<vmem>>, vector<16x16xbf16>
    %cst = arith.constant dense<0.000000e+00> : vector<16x8xf32>
    %3 = tpu.matmul %2, %1, %cst {dimension_numbers = #tpu.dot_dimension_numbers<[1], [0], [0], [1], [0, 0, 1, 1], [], []>} : vector<16x16xbf16>, vector<16x8xbf16>, vector<16x8xf32> -> vector<16x8xf32>
    %c0_4 = arith.constant 0 : index
    %c0_5 = arith.constant 0 : index
    %4 = vector.load %arg3[%c0_4, %c0_5] : memref<16x16xbf16, #tpu.memory_space<vmem>>, vector<16x16xbf16>
    %cst_6 = arith.constant dense<0.000000e+00> : vector<16x8xf32>
    %5 = tpu.matmul %4, %1, %cst_6 {dimension_numbers = #tpu.dot_dimension_numbers<[1], [0], [0], [1], [0, 0, 1, 1], [], []>} : vector<16x16xbf16>, vector<16x8xbf16>, vector<16x8xf32> -> vector<16x8xf32>
    %6 = arith.truncf %3 : vector<16x8xf32> to vector<16x8xbf16>
    %c0_7 = arith.constant 0 : index
    %c0_8 = arith.constant 0 : index
    %7 = vector.load %arg5[%c0_7, %c0_8] : memref<8x16xbf16, #tpu.memory_space<vmem>>, vector<8x16xbf16>
    %cst_9 = arith.constant dense<0.000000e+00> : vector<16x16xf32>
    %8 = tpu.matmul %6, %7, %cst_9 {dimension_numbers = #tpu.dot_dimension_numbers<[1], [0], [0], [1], [0, 0, 1, 1], [], []>} : vector<16x8xbf16>, vector<8x16xbf16>, vector<16x16xf32> -> vector<16x16xf32>
    %c0_10 = arith.constant 0 : index
    %c0_11 = arith.constant 0 : index
    %9 = vector.load %arg6[%c0_10, %c0_11] : memref<1x16xf32, #tpu.memory_space<vmem>>, vector<1x16xf32>
    %10 = vector.broadcast %9 : vector<1x16xf32> to vector<16x16xf32>
    %11 = arith.addf %8, %10 : vector<16x16xf32>
    %12 = arith.truncf %5 : vector<16x8xf32> to vector<16x8xbf16>
    %c0_12 = arith.constant 0 : index
    %c0_13 = arith.constant 0 : index
    %13 = vector.load %arg7[%c0_12, %c0_13] : memref<8x16xbf16, #tpu.memory_space<vmem>>, vector<8x16xbf16>
    %cst_14 = arith.constant dense<0.000000e+00> : vector<16x16xf32>
    %14 = tpu.matmul %12, %13, %cst_14 {dimension_numbers = #tpu.dot_dimension_numbers<[1], [0], [0], [1], [0, 0, 1, 1], [], []>} : vector<16x8xbf16>, vector<8x16xbf16>, vector<16x16xf32> -> vector<16x16xf32>
    %c0_15 = arith.constant 0 : index
    %c0_16 = arith.constant 0 : index
    %15 = vector.load %arg8[%c0_15, %c0_16] : memref<1x16xf32, #tpu.memory_space<vmem>>, vector<1x16xf32>
    %16 = vector.broadcast %15 : vector<1x16xf32> to vector<16x16xf32>
    %17 = arith.addf %14, %16 : vector<16x16xf32>
    %cst_17 = arith.constant 0.000000e+00 : f32
    %18 = vector.broadcast %cst_17 : f32 to vector<16x16xf32>
    %19 = arith.maximumf %11, %18 : vector<16x16xf32>
    %cst_18 = arith.constant 0.000000e+00 : f32
    %20 = vector.broadcast %cst_18 : f32 to vector<16x16xf32>
    %21 = arith.maximumf %17, %20 : vector<16x16xf32>
    %22 = tpu.concatenate %19, %21 in 1 : vector<16x16xf32>, vector<16x16xf32> -> vector<16x32xf32>
    %23 = arith.truncf %22 : vector<16x32xf32> to vector<16x32xbf16>
    %c0_19 = arith.constant 0 : index
    %c0_20 = arith.constant 0 : index
    %c0_21 = arith.constant 0 : index
    %24 = vector.load %arg9[%c0_19, %c0_20, %c0_21] : memref<1x16x32xbf16, #tpu.memory_space<vmem>>, vector<1x16x32xbf16>
    %25 = vector.shape_cast %24 : vector<1x16x32xbf16> to vector<16x32xbf16>
    %26 = vector.shape_cast %23 : vector<16x32xbf16> to vector<1x16x32xbf16>
    tpu.vector_store %arg9[%c0_19, %c0_20, %c0_21], %26 {strides = array<i32>} : memref<1x16x32xbf16, #tpu.memory_space<vmem>>, vector<1x16x32xbf16>,
    return
  }
  func.func @transform_0(%arg0: i32, %arg1: i32) -> (i32, i32) {
    %c0_i32 = arith.constant 0 : i32
    %c0_i32_0 = arith.constant 0 : i32
    return %arg0, %c0_i32 : i32, i32
  }
  func.func @transform_1(%arg0: i32, %arg1: i32) -> (i32, i32) {
    %c0_i32 = arith.constant 0 : i32
    %c0_i32_0 = arith.constant 0 : i32
    return %arg0, %c0_i32 : i32, i32
  }
  func.func @transform_2(%arg0: i32, %arg1: i32) -> (i32, i32, i32) {
    %c0_i32 = arith.constant 0 : i32
    %c0_i32_0 = arith.constant 0 : i32
    %c0_i32_1 = arith.constant 0 : i32
    return %arg1, %c0_i32, %c0_i32_0 : i32, i32, i32
  }
  func.func @transform_3(%arg0: i32, %arg1: i32) -> (i32, i32) {
    %c0_i32 = arith.constant 0 : i32
    %c0_i32_0 = arith.constant 0 : i32
    %c0_i32_1 = arith.constant 0 : i32
    return %c0_i32, %c0_i32_0 : i32, i32
  }
  func.func @transform_4(%arg0: i32, %arg1: i32) -> (i32, i32) {
    %c0_i32 = arith.constant 0 : i32
    %c0_i32_0 = arith.constant 0 : i32
    %c0_i32_1 = arith.constant 0 : i32
    return %c0_i32, %c0_i32_0 : i32, i32
  }
  func.func @transform_5(%arg0: i32, %arg1: i32) -> (i32, i32) {
    %c0_i32 = arith.constant 0 : i32
    %c0_i32_0 = arith.constant 0 : i32
    %c0_i32_1 = arith.constant 0 : i32
    return %c0_i32, %c0_i32_0 : i32, i32
  }
  func.func @transform_6(%arg0: i32, %arg1: i32) -> (i32, i32) {
    %c0_i32 = arith.constant 0 : i32
    %c0_i32_0 = arith.constant 0 : i32
    %c0_i32_1 = arith.constant 0 : i32
    return %c0_i32, %c0_i32_0 : i32, i32
  }
  func.func @transform_7(%arg0: i32, %arg1: i32) -> (i32, i32, i32) {
    %c0_i32 = arith.constant 0 : i32
    %c0_i32_0 = arith.constant 0 : i32
    return %arg1, %arg0, %c0_i32 : i32, i32, i32
  }
}

module attributes {stable_mosaic.version = 11 : i64} {
  func.func @_enc2_kernel(%arg0: i32, %arg1: i32, %arg2: memref<1x16x32xbf16, #tpu.memory_space<vmem>>, %arg3: memref<16x16xbf16, #tpu.memory_space<vmem>>, %arg4: memref<16x16xbf16, #tpu.memory_space<vmem>>, %arg5: memref<32x16xbf16, #tpu.memory_space<vmem>>, %arg6: memref<1x16xf32, #tpu.memory_space<vmem>>, %arg7: memref<32x16xbf16, #tpu.memory_space<vmem>>, %arg8: memref<1x16xf32, #tpu.memory_space<vmem>>, %arg9: memref<1x16x32xf32, #tpu.memory_space<vmem>>, %arg10: memref<16x16xbf16, #tpu.memory_space<vmem>>, %arg11: memref<16x16xbf16, #tpu.memory_space<vmem>>) attributes {dimension_semantics = [#tpu.dimension_semantics<parallel>, #tpu.dimension_semantics<arbitrary>], iteration_bounds = array<i64: 2, 1>, scalar_prefetch = 0 : i64, scratch_operands = 2 : i64, tpu.core_type = #tpu.core_type<tc>, window_params = [{transform_indices = @transform_0, window_bounds = array<i64: 1, 16, 32>}, {transform_indices = @transform_1, window_bounds = array<i64: 16, 16>}, {transform_indices = @transform_2, window_bounds = array<i64: 16, 16>}, {pipeline_mode = #tpu.pipeline_mode<synchronous>, transform_indices = @transform_3, window_bounds = array<i64: 32, 16>}, {pipeline_mode = #tpu.pipeline_mode<synchronous>, transform_indices = @transform_4, window_bounds = array<i64: 1, 16>}, {pipeline_mode = #tpu.pipeline_mode<synchronous>, transform_indices = @transform_5, window_bounds = array<i64: 32, 16>}, {pipeline_mode = #tpu.pipeline_mode<synchronous>, transform_indices = @transform_6, window_bounds = array<i64: 1, 16>}, {transform_indices = @transform_7, window_bounds = array<i64: 1, 16, 32>}]} {
    %c0_i32 = arith.constant 0 : i32
    %0 = arith.cmpi eq, %arg1, %c0_i32 : i32
    %1 = arith.extui %0 : i1 to i32
    %c0_i32_0 = arith.constant 0 : i32
    %2 = arith.cmpi ne, %1, %c0_i32_0 : i32
    scf.if %2 {
      %c0_16 = arith.constant 0 : index
      %c0_17 = arith.constant 0 : index
      %c0_18 = arith.constant 0 : index
      %19 = vector.load %arg2[%c0_16, %c0_17, %c0_18] : memref<1x16x32xbf16, #tpu.memory_space<vmem>>, vector<1x16x32xbf16>
      %20 = vector.shape_cast %19 : vector<1x16x32xbf16> to vector<16x32xbf16>
      %c0_19 = arith.constant 0 : index
      %c0_20 = arith.constant 0 : index
      %21 = vector.load %arg5[%c0_19, %c0_20] : memref<32x16xbf16, #tpu.memory_space<vmem>>, vector<32x16xbf16>
      %cst_21 = arith.constant dense<0.000000e+00> : vector<16x16xf32>
      %22 = tpu.matmul %20, %21, %cst_21 {dimension_numbers = #tpu.dot_dimension_numbers<[1], [0], [0], [1], [0, 0, 1, 1], [], []>} : vector<16x32xbf16>, vector<32x16xbf16>, vector<16x16xf32> -> vector<16x16xf32>
      %23 = arith.truncf %22 : vector<16x16xf32> to vector<16x16xbf16>
      %c0_22 = arith.constant 0 : index
      %c0_23 = arith.constant 0 : index
      %24 = vector.load %arg10[%c0_22, %c0_23] : memref<16x16xbf16, #tpu.memory_space<vmem>>, vector<16x16xbf16>
      tpu.vector_store %arg10[%c0_22, %c0_23], %23 {strides = array<i32>} : memref<16x16xbf16, #tpu.memory_space<vmem>>, vector<16x16xbf16>,
      %c0_24 = arith.constant 0 : index
      %c0_25 = arith.constant 0 : index
      %25 = vector.load %arg7[%c0_24, %c0_25] : memref<32x16xbf16, #tpu.memory_space<vmem>>, vector<32x16xbf16>
      %cst_26 = arith.constant dense<0.000000e+00> : vector<16x16xf32>
      %26 = tpu.matmul %20, %25, %cst_26 {dimension_numbers = #tpu.dot_dimension_numbers<[1], [0], [0], [1], [0, 0, 1, 1], [], []>} : vector<16x32xbf16>, vector<32x16xbf16>, vector<16x16xf32> -> vector<16x16xf32>
      %27 = arith.truncf %26 : vector<16x16xf32> to vector<16x16xbf16>
      %c0_27 = arith.constant 0 : index
      %c0_28 = arith.constant 0 : index
      %28 = vector.load %arg11[%c0_27, %c0_28] : memref<16x16xbf16, #tpu.memory_space<vmem>>, vector<16x16xbf16>
      tpu.vector_store %arg11[%c0_27, %c0_28], %27 {strides = array<i32>} : memref<16x16xbf16, #tpu.memory_space<vmem>>, vector<16x16xbf16>,
    } else {
    }
    %c0 = arith.constant 0 : index
    %c0_1 = arith.constant 0 : index
    %3 = vector.load %arg3[%c0, %c0_1] : memref<16x16xbf16, #tpu.memory_space<vmem>>, vector<16x16xbf16>
    %c0_2 = arith.constant 0 : index
    %c0_3 = arith.constant 0 : index
    %4 = vector.load %arg10[%c0_2, %c0_3] : memref<16x16xbf16, #tpu.memory_space<vmem>>, vector<16x16xbf16>
    %cst = arith.constant dense<0.000000e+00> : vector<16x16xf32>
    %5 = tpu.matmul %3, %4, %cst {dimension_numbers = #tpu.dot_dimension_numbers<[1], [0], [0], [1], [0, 0, 1, 1], [], []>} : vector<16x16xbf16>, vector<16x16xbf16>, vector<16x16xf32> -> vector<16x16xf32>
    %c0_4 = arith.constant 0 : index
    %c0_5 = arith.constant 0 : index
    %6 = vector.load %arg6[%c0_4, %c0_5] : memref<1x16xf32, #tpu.memory_space<vmem>>, vector<1x16xf32>
    %7 = vector.broadcast %6 : vector<1x16xf32> to vector<16x16xf32>
    %8 = arith.addf %5, %7 : vector<16x16xf32>
    %c0_6 = arith.constant 0 : index
    %c0_7 = arith.constant 0 : index
    %9 = vector.load %arg4[%c0_6, %c0_7] : memref<16x16xbf16, #tpu.memory_space<vmem>>, vector<16x16xbf16>
    %c0_8 = arith.constant 0 : index
    %c0_9 = arith.constant 0 : index
    %10 = vector.load %arg11[%c0_8, %c0_9] : memref<16x16xbf16, #tpu.memory_space<vmem>>, vector<16x16xbf16>
    %cst_10 = arith.constant dense<0.000000e+00> : vector<16x16xf32>
    %11 = tpu.matmul %9, %10, %cst_10 {dimension_numbers = #tpu.dot_dimension_numbers<[1], [0], [0], [1], [0, 0, 1, 1], [], []>} : vector<16x16xbf16>, vector<16x16xbf16>, vector<16x16xf32> -> vector<16x16xf32>
    %c0_11 = arith.constant 0 : index
    %c0_12 = arith.constant 0 : index
    %12 = vector.load %arg8[%c0_11, %c0_12] : memref<1x16xf32, #tpu.memory_space<vmem>>, vector<1x16xf32>
    %13 = vector.broadcast %12 : vector<1x16xf32> to vector<16x16xf32>
    %14 = arith.addf %11, %13 : vector<16x16xf32>
    %15 = tpu.concatenate %8, %14 in 1 : vector<16x16xf32>, vector<16x16xf32> -> vector<16x32xf32>
    %c0_13 = arith.constant 0 : index
    %c0_14 = arith.constant 0 : index
    %c0_15 = arith.constant 0 : index
    %16 = vector.load %arg9[%c0_13, %c0_14, %c0_15] : memref<1x16x32xf32, #tpu.memory_space<vmem>>, vector<1x16x32xf32>
    %17 = vector.shape_cast %16 : vector<1x16x32xf32> to vector<16x32xf32>
    %18 = vector.shape_cast %15 : vector<16x32xf32> to vector<1x16x32xf32>
    tpu.vector_store %arg9[%c0_13, %c0_14, %c0_15], %18 {strides = array<i32>} : memref<1x16x32xf32, #tpu.memory_space<vmem>>, vector<1x16x32xf32>,
    return
  }
  func.func @transform_0(%arg0: i32, %arg1: i32) -> (i32, i32, i32) {
    %c0_i32 = arith.constant 0 : i32
    %c0_i32_0 = arith.constant 0 : i32
    %c0_i32_1 = arith.constant 0 : i32
    return %arg0, %c0_i32, %c0_i32_0 : i32, i32, i32
  }
  func.func @transform_1(%arg0: i32, %arg1: i32) -> (i32, i32) {
    %c0_i32 = arith.constant 0 : i32
    %c0_i32_0 = arith.constant 0 : i32
    return %arg1, %c0_i32 : i32, i32
  }
  func.func @transform_2(%arg0: i32, %arg1: i32) -> (i32, i32) {
    %c0_i32 = arith.constant 0 : i32
    %c0_i32_0 = arith.constant 0 : i32
    return %arg1, %c0_i32 : i32, i32
  }
  func.func @transform_3(%arg0: i32, %arg1: i32) -> (i32, i32) {
    %c0_i32 = arith.constant 0 : i32
    %c0_i32_0 = arith.constant 0 : i32
    %c0_i32_1 = arith.constant 0 : i32
    return %c0_i32, %c0_i32_0 : i32, i32
  }
  func.func @transform_4(%arg0: i32, %arg1: i32) -> (i32, i32) {
    %c0_i32 = arith.constant 0 : i32
    %c0_i32_0 = arith.constant 0 : i32
    %c0_i32_1 = arith.constant 0 : i32
    return %c0_i32, %c0_i32_0 : i32, i32
  }
  func.func @transform_5(%arg0: i32, %arg1: i32) -> (i32, i32) {
    %c0_i32 = arith.constant 0 : i32
    %c0_i32_0 = arith.constant 0 : i32
    %c0_i32_1 = arith.constant 0 : i32
    return %c0_i32, %c0_i32_0 : i32, i32
  }
  func.func @transform_6(%arg0: i32, %arg1: i32) -> (i32, i32) {
    %c0_i32 = arith.constant 0 : i32
    %c0_i32_0 = arith.constant 0 : i32
    %c0_i32_1 = arith.constant 0 : i32
    return %c0_i32, %c0_i32_0 : i32, i32
  }
  func.func @transform_7(%arg0: i32, %arg1: i32) -> (i32, i32, i32) {
    %c0_i32 = arith.constant 0 : i32
    %c0_i32_0 = arith.constant 0 : i32
    return %arg0, %arg1, %c0_i32 : i32, i32, i32
  }
}

module attributes {stable_mosaic.version = 11 : i64} {
  func.func @_disc_kernel(%arg0: memref<2x16x32xf32, #tpu.memory_space<vmem>>, %arg1: memref<32x32xf32, #tpu.memory_space<vmem>>, %arg2: memref<1x1xf32, #tpu.memory_space<smem>>, %arg3: memref<16x2xf32, #tpu.memory_space<vmem>>, %arg4: memref<16x2xf32, #tpu.memory_space<vmem>>) attributes {dimension_semantics = [], scalar_prefetch = 0 : i64, scratch_operands = 0 : i64, tpu.core_type = #tpu.core_type<tc>} {
    %c0 = arith.constant 0 : index
    %c0_0 = arith.constant 0 : index
    %c0_1 = arith.constant 0 : index
    %0 = vector.load %arg0[%c0, %c0_0, %c0_1] : memref<2x16x32xf32, #tpu.memory_space<vmem>>, vector<1x16x32xf32>
    %1 = vector.shape_cast %0 : vector<1x16x32xf32> to vector<16x32xf32>
    %c1 = arith.constant 1 : index
    %c0_2 = arith.constant 0 : index
    %c0_3 = arith.constant 0 : index
    %2 = vector.load %arg0[%c1, %c0_2, %c0_3] : memref<2x16x32xf32, #tpu.memory_space<vmem>>, vector<1x16x32xf32>
    %3 = vector.shape_cast %2 : vector<1x16x32xf32> to vector<16x32xf32>
    %cst = arith.constant dense<0.000000e+00> : vector<32xf32>
    %4 = vector.multi_reduction <add>, %1, %cst [0] : vector<16x32xf32> to vector<32xf32>
    %5 = vector.shape_cast %4 : vector<32xf32> to vector<1x32xf32>
    %cst_4 = arith.constant 1.600000e+01 : f32
    %6 = vector.broadcast %cst_4 : f32 to vector<1x32xf32>
    %7 = arith.divf %5, %6 : vector<1x32xf32>
    %8 = arith.negf %7 : vector<1x32xf32>
    %9 = math.exp %8 : vector<1x32xf32>
    %cst_5 = arith.constant 1.000000e+00 : f32
    %10 = vector.broadcast %cst_5 : f32 to vector<1x32xf32>
    %11 = arith.addf %10, %9 : vector<1x32xf32>
    %12 = arith.divf %10, %11 : vector<1x32xf32>
    %cst_6 = arith.constant dense<0.000000e+00> : vector<32xf32>
    %13 = vector.multi_reduction <add>, %3, %cst_6 [0] : vector<16x32xf32> to vector<32xf32>
    %14 = vector.shape_cast %13 : vector<32xf32> to vector<1x32xf32>
    %cst_7 = arith.constant 1.600000e+01 : f32
    %15 = vector.broadcast %cst_7 : f32 to vector<1x32xf32>
    %16 = arith.divf %14, %15 : vector<1x32xf32>
    %17 = arith.negf %16 : vector<1x32xf32>
    %18 = math.exp %17 : vector<1x32xf32>
    %cst_8 = arith.constant 1.000000e+00 : f32
    %19 = vector.broadcast %cst_8 : f32 to vector<1x32xf32>
    %20 = arith.addf %19, %18 : vector<1x32xf32>
    %21 = arith.divf %19, %20 : vector<1x32xf32>
    %c0_9 = arith.constant 0 : index
    %c0_10 = arith.constant 0 : index
    %22 = vector.load %arg1[%c0_9, %c0_10] : memref<32x32xf32, #tpu.memory_space<vmem>>, vector<32x32xf32>
    %23 = vector.broadcast %12 : vector<1x32xf32> to vector<32x32xf32>
    %24 = arith.mulf %22, %23 : vector<32x32xf32>
    %cst_11 = arith.constant dense<0.000000e+00> : vector<32xf32>
    %25 = vector.multi_reduction <add>, %24, %cst_11 [1] : vector<32x32xf32> to vector<32xf32>
    %26 = vector.shape_cast %25 : vector<32xf32> to vector<32x1xf32>
    %27 = vector.broadcast %21 : vector<1x32xf32> to vector<32x32xf32>
    %28 = arith.mulf %22, %27 : vector<32x32xf32>
    %cst_12 = arith.constant dense<0.000000e+00> : vector<32xf32>
    %29 = vector.multi_reduction <add>, %28, %cst_12 [1] : vector<32x32xf32> to vector<32xf32>
    %30 = vector.shape_cast %29 : vector<32xf32> to vector<32x1xf32>
    %31 = tpu.concatenate %26, %30 in 1 : vector<32x1xf32>, vector<32x1xf32> -> vector<32x2xf32>
    %32 = arith.truncf %31 : vector<32x2xf32> to vector<32x2xbf16>
    %33 = arith.truncf %1 : vector<16x32xf32> to vector<16x32xbf16>
    %cst_13 = arith.constant dense<0.000000e+00> : vector<16x2xf32>
    %34 = tpu.matmul %33, %32, %cst_13 {dimension_numbers = #tpu.dot_dimension_numbers<[1], [0], [0], [1], [0, 0, 1, 1], [], []>} : vector<16x32xbf16>, vector<32x2xbf16>, vector<16x2xf32> -> vector<16x2xf32>
    %35 = arith.truncf %3 : vector<16x32xf32> to vector<16x32xbf16>
    %cst_14 = arith.constant dense<0.000000e+00> : vector<16x2xf32>
    %36 = tpu.matmul %35, %32, %cst_14 {dimension_numbers = #tpu.dot_dimension_numbers<[1], [0], [0], [1], [0, 0, 1, 1], [], []>} : vector<16x32xbf16>, vector<32x2xbf16>, vector<16x2xf32> -> vector<16x2xf32>
    %c0_15 = arith.constant 0 : index
    %c0_16 = arith.constant 0 : index
    %37 = memref.load %arg2[%c0_15, %c0_16] : memref<1x1xf32, #tpu.memory_space<smem>>
    %38 = vector.extract_strided_slice %34 {offsets = [0, 0], sizes = [16, 1], strides = [1, 1]} : vector<16x2xf32> to vector<16x1xf32>
    %39 = vector.extract_strided_slice %36 {offsets = [0, 0], sizes = [16, 1], strides = [1, 1]} : vector<16x2xf32> to vector<16x1xf32>
    %40 = tpu.concatenate %38, %39 in 1 : vector<16x1xf32>, vector<16x1xf32> -> vector<16x2xf32>
    %41 = vector.broadcast %37 : f32 to vector<16x2xf32>
    %42 = arith.addf %40, %41 : vector<16x2xf32>
    %c0_17 = arith.constant 0 : index
    %c0_18 = arith.constant 0 : index
    %43 = vector.load %arg3[%c0_17, %c0_18] : memref<16x2xf32, #tpu.memory_space<vmem>>, vector<16x2xf32>
    tpu.vector_store %arg3[%c0_17, %c0_18], %42 {strides = array<i32>} : memref<16x2xf32, #tpu.memory_space<vmem>>, vector<16x2xf32>,
    %44 = vector.extract_strided_slice %36 {offsets = [0, 1], sizes = [16, 1], strides = [1, 1]} : vector<16x2xf32> to vector<16x1xf32>
    %45 = vector.extract_strided_slice %34 {offsets = [0, 1], sizes = [16, 1], strides = [1, 1]} : vector<16x2xf32> to vector<16x1xf32>
    %46 = tpu.concatenate %44, %45 in 1 : vector<16x1xf32>, vector<16x1xf32> -> vector<16x2xf32>
    %47 = vector.broadcast %37 : f32 to vector<16x2xf32>
    %48 = arith.addf %46, %47 : vector<16x2xf32>
    %c0_19 = arith.constant 0 : index
    %c0_20 = arith.constant 0 : index
    %49 = vector.load %arg4[%c0_19, %c0_20] : memref<16x2xf32, #tpu.memory_space<vmem>>, vector<16x2xf32>
    tpu.vector_store %arg4[%c0_19, %c0_20], %48 {strides = array<i32>} : memref<16x2xf32, #tpu.memory_space<vmem>>, vector<16x2xf32>,
    return
  }
}

module attributes {stable_mosaic.version = 11 : i64} {
  func.func @_decoder_kernel(%arg0: memref<2x4xi32, #tpu.memory_space<smem>>, %arg1: memref<16x32xf32, #tpu.memory_space<any>>, %arg2: memref<128x32xbf16, #tpu.memory_space<vmem>>, %arg3: memref<1x32xf32, #tpu.memory_space<vmem>>, %arg4: memref<32x1xbf16, #tpu.memory_space<vmem>>, %arg5: memref<1x1xf32, #tpu.memory_space<vmem>>, %arg6: memref<4x1xf32, #tpu.memory_space<vmem>>, %arg7: memref<4x32xf32, #tpu.memory_space<vmem>>, %arg8: memref<4x32xf32, #tpu.memory_space<vmem>>, %arg9: memref<2x4x!tpu.dma_semaphore, #tpu.memory_space<semaphore_mem>>) attributes {dimension_semantics = [], scalar_prefetch = 0 : i64, scratch_operands = 3 : i64, tpu.core_type = #tpu.core_type<tc>} {
    %c0 = arith.constant 0 : index
    %c0_0 = arith.constant 0 : index
    %0 = memref.load %arg0[%c0, %c0_0] : memref<2x4xi32, #tpu.memory_space<smem>>
    %c1 = arith.constant 1 : index
    %c0_1 = arith.constant 0 : index
    %1 = memref.load %arg0[%c1, %c0_1] : memref<2x4xi32, #tpu.memory_space<smem>>
    %c0_i32 = arith.constant 0 : i32
    %c0_i32_2 = arith.constant 0 : i32
    %c0_i32_3 = arith.constant 0 : i32
    %2 = tpu.memref_slice %arg1[%0, %c0_i32_3] : memref<16x32xf32, #tpu.memory_space<any>> -> memref<1x32xf32, #tpu.memory_space<any>>
    %c0_i32_4 = arith.constant 0 : i32
    %c0_i32_5 = arith.constant 0 : i32
    %3 = tpu.memref_slice %arg7[%c0_i32_4, %c0_i32_5] : memref<4x32xf32, #tpu.memory_space<vmem>> -> memref<1x32xf32, #tpu.memory_space<vmem>>
    %4 = tpu.memref_slice %arg9[%c0_i32, %c0_i32_2] : memref<2x4x!tpu.dma_semaphore, #tpu.memory_space<semaphore_mem>> -> memref<1x1x!tpu.dma_semaphore, #tpu.memory_space<semaphore_mem>>
    %5 = tpu.memref_squeeze %4 : memref<1x1x!tpu.dma_semaphore, #tpu.memory_space<semaphore_mem>> -> memref<!tpu.dma_semaphore, #tpu.memory_space<semaphore_mem>>
    tpu.enqueue_dma source(%2 : memref<1x32xf32, #tpu.memory_space<any>>) target(%3 : memref<1x32xf32, #tpu.memory_space<vmem>>) target_semaphore(%5 : memref<!tpu.dma_semaphore, #tpu.memory_space<semaphore_mem>>)
    %c1_i32 = arith.constant 1 : i32
    %c0_i32_6 = arith.constant 0 : i32
    %c0_i32_7 = arith.constant 0 : i32
    %6 = tpu.memref_slice %arg1[%1, %c0_i32_7] : memref<16x32xf32, #tpu.memory_space<any>> -> memref<1x32xf32, #tpu.memory_space<any>>
    %c0_i32_8 = arith.constant 0 : i32
    %c0_i32_9 = arith.constant 0 : i32
    %7 = tpu.memref_slice %arg8[%c0_i32_8, %c0_i32_9] : memref<4x32xf32, #tpu.memory_space<vmem>> -> memref<1x32xf32, #tpu.memory_space<vmem>>
    %8 = tpu.memref_slice %arg9[%c1_i32, %c0_i32_6] : memref<2x4x!tpu.dma_semaphore, #tpu.memory_space<semaphore_mem>> -> memref<1x1x!tpu.dma_semaphore, #tpu.memory_space<semaphore_mem>>
    %9 = tpu.memref_squeeze %8 : memref<1x1x!tpu.dma_semaphore, #tpu.memory_space<semaphore_mem>> -> memref<!tpu.dma_semaphore, #tpu.memory_space<semaphore_mem>>
    tpu.enqueue_dma source(%6 : memref<1x32xf32, #tpu.memory_space<any>>) target(%7 : memref<1x32xf32, #tpu.memory_space<vmem>>) target_semaphore(%9 : memref<!tpu.dma_semaphore, #tpu.memory_space<semaphore_mem>>)
    %c0_10 = arith.constant 0 : index
    %c1_11 = arith.constant 1 : index
    %10 = memref.load %arg0[%c0_10, %c1_11] : memref<2x4xi32, #tpu.memory_space<smem>>
    %c1_12 = arith.constant 1 : index
    %c1_13 = arith.constant 1 : index
    %11 = memref.load %arg0[%c1_12, %c1_13] : memref<2x4xi32, #tpu.memory_space<smem>>
    %c0_i32_14 = arith.constant 0 : i32
    %c1_i32_15 = arith.constant 1 : i32
    %c0_i32_16 = arith.constant 0 : i32
    %12 = tpu.memref_slice %arg1[%10, %c0_i32_16] : memref<16x32xf32, #tpu.memory_space<any>> -> memref<1x32xf32, #tpu.memory_space<any>>
    %c1_i32_17 = arith.constant 1 : i32
    %c0_i32_18 = arith.constant 0 : i32
    %13 = tpu.memref_slice %arg7[%c1_i32_17, %c0_i32_18] : memref<4x32xf32, #tpu.memory_space<vmem>> -> memref<1x32xf32, #tpu.memory_space<vmem>>
    %14 = tpu.memref_slice %arg9[%c0_i32_14, %c1_i32_15] : memref<2x4x!tpu.dma_semaphore, #tpu.memory_space<semaphore_mem>> -> memref<1x1x!tpu.dma_semaphore, #tpu.memory_space<semaphore_mem>>
    %15 = tpu.memref_squeeze %14 : memref<1x1x!tpu.dma_semaphore, #tpu.memory_space<semaphore_mem>> -> memref<!tpu.dma_semaphore, #tpu.memory_space<semaphore_mem>>
    tpu.enqueue_dma source(%12 : memref<1x32xf32, #tpu.memory_space<any>>) target(%13 : memref<1x32xf32, #tpu.memory_space<vmem>>) target_semaphore(%15 : memref<!tpu.dma_semaphore, #tpu.memory_space<semaphore_mem>>)
    %c1_i32_19 = arith.constant 1 : i32
    %c1_i32_20 = arith.constant 1 : i32
    %c0_i32_21 = arith.constant 0 : i32
    %16 = tpu.memref_slice %arg1[%11, %c0_i32_21] : memref<16x32xf32, #tpu.memory_space<any>> -> memref<1x32xf32, #tpu.memory_space<any>>
    %c1_i32_22 = arith.constant 1 : i32
    %c0_i32_23 = arith.constant 0 : i32
    %17 = tpu.memref_slice %arg8[%c1_i32_22, %c0_i32_23] : memref<4x32xf32, #tpu.memory_space<vmem>> -> memref<1x32xf32, #tpu.memory_space<vmem>>
    %18 = tpu.memref_slice %arg9[%c1_i32_19, %c1_i32_20] : memref<2x4x!tpu.dma_semaphore, #tpu.memory_space<semaphore_mem>> -> memref<1x1x!tpu.dma_semaphore, #tpu.memory_space<semaphore_mem>>
    %19 = tpu.memref_squeeze %18 : memref<1x1x!tpu.dma_semaphore, #tpu.memory_space<semaphore_mem>> -> memref<!tpu.dma_semaphore, #tpu.memory_space<semaphore_mem>>
    tpu.enqueue_dma source(%16 : memref<1x32xf32, #tpu.memory_space<any>>) target(%17 : memref<1x32xf32, #tpu.memory_space<vmem>>) target_semaphore(%19 : memref<!tpu.dma_semaphore, #tpu.memory_space<semaphore_mem>>)
    %c0_24 = arith.constant 0 : index
    %c2 = arith.constant 2 : index
    %20 = memref.load %arg0[%c0_24, %c2] : memref<2x4xi32, #tpu.memory_space<smem>>
    %c1_25 = arith.constant 1 : index
    %c2_26 = arith.constant 2 : index
    %21 = memref.load %arg0[%c1_25, %c2_26] : memref<2x4xi32, #tpu.memory_space<smem>>
    %c0_i32_27 = arith.constant 0 : i32
    %c2_i32 = arith.constant 2 : i32
    %c0_i32_28 = arith.constant 0 : i32
    %22 = tpu.memref_slice %arg1[%20, %c0_i32_28] : memref<16x32xf32, #tpu.memory_space<any>> -> memref<1x32xf32, #tpu.memory_space<any>>
    %c2_i32_29 = arith.constant 2 : i32
    %c0_i32_30 = arith.constant 0 : i32
    %23 = tpu.memref_slice %arg7[%c2_i32_29, %c0_i32_30] : memref<4x32xf32, #tpu.memory_space<vmem>> -> memref<1x32xf32, #tpu.memory_space<vmem>>
    %24 = tpu.memref_slice %arg9[%c0_i32_27, %c2_i32] : memref<2x4x!tpu.dma_semaphore, #tpu.memory_space<semaphore_mem>> -> memref<1x1x!tpu.dma_semaphore, #tpu.memory_space<semaphore_mem>>
    %25 = tpu.memref_squeeze %24 : memref<1x1x!tpu.dma_semaphore, #tpu.memory_space<semaphore_mem>> -> memref<!tpu.dma_semaphore, #tpu.memory_space<semaphore_mem>>
    tpu.enqueue_dma source(%22 : memref<1x32xf32, #tpu.memory_space<any>>) target(%23 : memref<1x32xf32, #tpu.memory_space<vmem>>) target_semaphore(%25 : memref<!tpu.dma_semaphore, #tpu.memory_space<semaphore_mem>>)
    %c1_i32_31 = arith.constant 1 : i32
    %c2_i32_32 = arith.constant 2 : i32
    %c0_i32_33 = arith.constant 0 : i32
    %26 = tpu.memref_slice %arg1[%21, %c0_i32_33] : memref<16x32xf32, #tpu.memory_space<any>> -> memref<1x32xf32, #tpu.memory_space<any>>
    %c2_i32_34 = arith.constant 2 : i32
    %c0_i32_35 = arith.constant 0 : i32
    %27 = tpu.memref_slice %arg8[%c2_i32_34, %c0_i32_35] : memref<4x32xf32, #tpu.memory_space<vmem>> -> memref<1x32xf32, #tpu.memory_space<vmem>>
    %28 = tpu.memref_slice %arg9[%c1_i32_31, %c2_i32_32] : memref<2x4x!tpu.dma_semaphore, #tpu.memory_space<semaphore_mem>> -> memref<1x1x!tpu.dma_semaphore, #tpu.memory_space<semaphore_mem>>
    %29 = tpu.memref_squeeze %28 : memref<1x1x!tpu.dma_semaphore, #tpu.memory_space<semaphore_mem>> -> memref<!tpu.dma_semaphore, #tpu.memory_space<semaphore_mem>>
    tpu.enqueue_dma source(%26 : memref<1x32xf32, #tpu.memory_space<any>>) target(%27 : memref<1x32xf32, #tpu.memory_space<vmem>>) target_semaphore(%29 : memref<!tpu.dma_semaphore, #tpu.memory_space<semaphore_mem>>)
    %c0_36 = arith.constant 0 : index
    %c3 = arith.constant 3 : index
    %30 = memref.load %arg0[%c0_36, %c3] : memref<2x4xi32, #tpu.memory_space<smem>>
    %c1_37 = arith.constant 1 : index
    %c3_38 = arith.constant 3 : index
    %31 = memref.load %arg0[%c1_37, %c3_38] : memref<2x4xi32, #tpu.memory_space<smem>>
    %c0_i32_39 = arith.constant 0 : i32
    %c3_i32 = arith.constant 3 : i32
    %c0_i32_40 = arith.constant 0 : i32
    %32 = tpu.memref_slice %arg1[%30, %c0_i32_40] : memref<16x32xf32, #tpu.memory_space<any>> -> memref<1x32xf32, #tpu.memory_space<any>>
    %c3_i32_41 = arith.constant 3 : i32
    %c0_i32_42 = arith.constant 0 : i32
    %33 = tpu.memref_slice %arg7[%c3_i32_41, %c0_i32_42] : memref<4x32xf32, #tpu.memory_space<vmem>> -> memref<1x32xf32, #tpu.memory_space<vmem>>
    %34 = tpu.memref_slice %arg9[%c0_i32_39, %c3_i32] : memref<2x4x!tpu.dma_semaphore, #tpu.memory_space<semaphore_mem>> -> memref<1x1x!tpu.dma_semaphore, #tpu.memory_space<semaphore_mem>>
    %35 = tpu.memref_squeeze %34 : memref<1x1x!tpu.dma_semaphore, #tpu.memory_space<semaphore_mem>> -> memref<!tpu.dma_semaphore, #tpu.memory_space<semaphore_mem>>
    tpu.enqueue_dma source(%32 : memref<1x32xf32, #tpu.memory_space<any>>) target(%33 : memref<1x32xf32, #tpu.memory_space<vmem>>) target_semaphore(%35 : memref<!tpu.dma_semaphore, #tpu.memory_space<semaphore_mem>>)
    %c1_i32_43 = arith.constant 1 : i32
    %c3_i32_44 = arith.constant 3 : i32
    %c0_i32_45 = arith.constant 0 : i32
    %36 = tpu.memref_slice %arg1[%31, %c0_i32_45] : memref<16x32xf32, #tpu.memory_space<any>> -> memref<1x32xf32, #tpu.memory_space<any>>
    %c3_i32_46 = arith.constant 3 : i32
    %c0_i32_47 = arith.constant 0 : i32
    %37 = tpu.memref_slice %arg8[%c3_i32_46, %c0_i32_47] : memref<4x32xf32, #tpu.memory_space<vmem>> -> memref<1x32xf32, #tpu.memory_space<vmem>>
    %38 = tpu.memref_slice %arg9[%c1_i32_43, %c3_i32_44] : memref<2x4x!tpu.dma_semaphore, #tpu.memory_space<semaphore_mem>> -> memref<1x1x!tpu.dma_semaphore, #tpu.memory_space<semaphore_mem>>
    %39 = tpu.memref_squeeze %38 : memref<1x1x!tpu.dma_semaphore, #tpu.memory_space<semaphore_mem>> -> memref<!tpu.dma_semaphore, #tpu.memory_space<semaphore_mem>>
    tpu.enqueue_dma source(%36 : memref<1x32xf32, #tpu.memory_space<any>>) target(%37 : memref<1x32xf32, #tpu.memory_space<vmem>>) target_semaphore(%39 : memref<!tpu.dma_semaphore, #tpu.memory_space<semaphore_mem>>)
    %c0_i32_48 = arith.constant 0 : i32
    %c0_i32_49 = arith.constant 0 : i32
    %c0_i32_50 = arith.constant 0 : i32
    %40 = tpu.memref_slice %arg1[%0, %c0_i32_50] : memref<16x32xf32, #tpu.memory_space<any>> -> memref<1x32xf32, #tpu.memory_space<any>>
    %c0_i32_51 = arith.constant 0 : i32
    %c0_i32_52 = arith.constant 0 : i32
    %41 = tpu.memref_slice %arg7[%c0_i32_51, %c0_i32_52] : memref<4x32xf32, #tpu.memory_space<vmem>> -> memref<1x32xf32, #tpu.memory_space<vmem>>
    %42 = tpu.memref_slice %arg9[%c0_i32_48, %c0_i32_49] : memref<2x4x!tpu.dma_semaphore, #tpu.memory_space<semaphore_mem>> -> memref<1x1x!tpu.dma_semaphore, #tpu.memory_space<semaphore_mem>>
    %43 = tpu.memref_squeeze %42 : memref<1x1x!tpu.dma_semaphore, #tpu.memory_space<semaphore_mem>> -> memref<!tpu.dma_semaphore, #tpu.memory_space<semaphore_mem>>
    tpu.wait_dma2 semaphore(%43 : memref<!tpu.dma_semaphore, #tpu.memory_space<semaphore_mem>>) src(%40 : memref<1x32xf32, #tpu.memory_space<any>>) dst(%41 : memref<1x32xf32, #tpu.memory_space<vmem>>)
    %c1_i32_53 = arith.constant 1 : i32
    %c0_i32_54 = arith.constant 0 : i32
    %c0_i32_55 = arith.constant 0 : i32
    %44 = tpu.memref_slice %arg1[%1, %c0_i32_55] : memref<16x32xf32, #tpu.memory_space<any>> -> memref<1x32xf32, #tpu.memory_space<any>>
    %c0_i32_56 = arith.constant 0 : i32
    %c0_i32_57 = arith.constant 0 : i32
    %45 = tpu.memref_slice %arg8[%c0_i32_56, %c0_i32_57] : memref<4x32xf32, #tpu.memory_space<vmem>> -> memref<1x32xf32, #tpu.memory_space<vmem>>
    %46 = tpu.memref_slice %arg9[%c1_i32_53, %c0_i32_54] : memref<2x4x!tpu.dma_semaphore, #tpu.memory_space<semaphore_mem>> -> memref<1x1x!tpu.dma_semaphore, #tpu.memory_space<semaphore_mem>>
    %47 = tpu.memref_squeeze %46 : memref<1x1x!tpu.dma_semaphore, #tpu.memory_space<semaphore_mem>> -> memref<!tpu.dma_semaphore, #tpu.memory_space<semaphore_mem>>
    tpu.wait_dma2 semaphore(%47 : memref<!tpu.dma_semaphore, #tpu.memory_space<semaphore_mem>>) src(%44 : memref<1x32xf32, #tpu.memory_space<any>>) dst(%45 : memref<1x32xf32, #tpu.memory_space<vmem>>)
    %c0_i32_58 = arith.constant 0 : i32
    %c1_i32_59 = arith.constant 1 : i32
    %c0_i32_60 = arith.constant 0 : i32
    %48 = tpu.memref_slice %arg1[%10, %c0_i32_60] : memref<16x32xf32, #tpu.memory_space<any>> -> memref<1x32xf32, #tpu.memory_space<any>>
    %c1_i32_61 = arith.constant 1 : i32
    %c0_i32_62 = arith.constant 0 : i32
    %49 = tpu.memref_slice %arg7[%c1_i32_61, %c0_i32_62] : memref<4x32xf32, #tpu.memory_space<vmem>> -> memref<1x32xf32, #tpu.memory_space<vmem>>
    %50 = tpu.memref_slice %arg9[%c0_i32_58, %c1_i32_59] : memref<2x4x!tpu.dma_semaphore, #tpu.memory_space<semaphore_mem>> -> memref<1x1x!tpu.dma_semaphore, #tpu.memory_space<semaphore_mem>>
    %51 = tpu.memref_squeeze %50 : memref<1x1x!tpu.dma_semaphore, #tpu.memory_space<semaphore_mem>> -> memref<!tpu.dma_semaphore, #tpu.memory_space<semaphore_mem>>
    tpu.wait_dma2 semaphore(%51 : memref<!tpu.dma_semaphore, #tpu.memory_space<semaphore_mem>>) src(%48 : memref<1x32xf32, #tpu.memory_space<any>>) dst(%49 : memref<1x32xf32, #tpu.memory_space<vmem>>)
    %c1_i32_63 = arith.constant 1 : i32
    %c1_i32_64 = arith.constant 1 : i32
    %c0_i32_65 = arith.constant 0 : i32
    %52 = tpu.memref_slice %arg1[%11, %c0_i32_65] : memref<16x32xf32, #tpu.memory_space<any>> -> memref<1x32xf32, #tpu.memory_space<any>>
    %c1_i32_66 = arith.constant 1 : i32
    %c0_i32_67 = arith.constant 0 : i32
    %53 = tpu.memref_slice %arg8[%c1_i32_66, %c0_i32_67] : memref<4x32xf32, #tpu.memory_space<vmem>> -> memref<1x32xf32, #tpu.memory_space<vmem>>
    %54 = tpu.memref_slice %arg9[%c1_i32_63, %c1_i32_64] : memref<2x4x!tpu.dma_semaphore, #tpu.memory_space<semaphore_mem>> -> memref<1x1x!tpu.dma_semaphore, #tpu.memory_space<semaphore_mem>>
    %55 = tpu.memref_squeeze %54 : memref<1x1x!tpu.dma_semaphore, #tpu.memory_space<semaphore_mem>> -> memref<!tpu.dma_semaphore, #tpu.memory_space<semaphore_mem>>
    tpu.wait_dma2 semaphore(%55 : memref<!tpu.dma_semaphore, #tpu.memory_space<semaphore_mem>>) src(%52 : memref<1x32xf32, #tpu.memory_space<any>>) dst(%53 : memref<1x32xf32, #tpu.memory_space<vmem>>)
    %c0_i32_68 = arith.constant 0 : i32
    %c2_i32_69 = arith.constant 2 : i32
    %c0_i32_70 = arith.constant 0 : i32
    %56 = tpu.memref_slice %arg1[%20, %c0_i32_70] : memref<16x32xf32, #tpu.memory_space<any>> -> memref<1x32xf32, #tpu.memory_space<any>>
    %c2_i32_71 = arith.constant 2 : i32
    %c0_i32_72 = arith.constant 0 : i32
    %57 = tpu.memref_slice %arg7[%c2_i32_71, %c0_i32_72] : memref<4x32xf32, #tpu.memory_space<vmem>> -> memref<1x32xf32, #tpu.memory_space<vmem>>
    %58 = tpu.memref_slice %arg9[%c0_i32_68, %c2_i32_69] : memref<2x4x!tpu.dma_semaphore, #tpu.memory_space<semaphore_mem>> -> memref<1x1x!tpu.dma_semaphore, #tpu.memory_space<semaphore_mem>>
    %59 = tpu.memref_squeeze %58 : memref<1x1x!tpu.dma_semaphore, #tpu.memory_space<semaphore_mem>> -> memref<!tpu.dma_semaphore, #tpu.memory_space<semaphore_mem>>
    tpu.wait_dma2 semaphore(%59 : memref<!tpu.dma_semaphore, #tpu.memory_space<semaphore_mem>>) src(%56 : memref<1x32xf32, #tpu.memory_space<any>>) dst(%57 : memref<1x32xf32, #tpu.memory_space<vmem>>)
    %c1_i32_73 = arith.constant 1 : i32
    %c2_i32_74 = arith.constant 2 : i32
    %c0_i32_75 = arith.constant 0 : i32
    %60 = tpu.memref_slice %arg1[%21, %c0_i32_75] : memref<16x32xf32, #tpu.memory_space<any>> -> memref<1x32xf32, #tpu.memory_space<any>>
    %c2_i32_76 = arith.constant 2 : i32
    %c0_i32_77 = arith.constant 0 : i32
    %61 = tpu.memref_slice %arg8[%c2_i32_76, %c0_i32_77] : memref<4x32xf32, #tpu.memory_space<vmem>> -> memref<1x32xf32, #tpu.memory_space<vmem>>
    %62 = tpu.memref_slice %arg9[%c1_i32_73, %c2_i32_74] : memref<2x4x!tpu.dma_semaphore, #tpu.memory_space<semaphore_mem>> -> memref<1x1x!tpu.dma_semaphore, #tpu.memory_space<semaphore_mem>>
    %63 = tpu.memref_squeeze %62 : memref<1x1x!tpu.dma_semaphore, #tpu.memory_space<semaphore_mem>> -> memref<!tpu.dma_semaphore, #tpu.memory_space<semaphore_mem>>
    tpu.wait_dma2 semaphore(%63 : memref<!tpu.dma_semaphore, #tpu.memory_space<semaphore_mem>>) src(%60 : memref<1x32xf32, #tpu.memory_space<any>>) dst(%61 : memref<1x32xf32, #tpu.memory_space<vmem>>)
    %c0_i32_78 = arith.constant 0 : i32
    %c3_i32_79 = arith.constant 3 : i32
    %c0_i32_80 = arith.constant 0 : i32
    %64 = tpu.memref_slice %arg1[%30, %c0_i32_80] : memref<16x32xf32, #tpu.memory_space<any>> -> memref<1x32xf32, #tpu.memory_space<any>>
    %c3_i32_81 = arith.constant 3 : i32
    %c0_i32_82 = arith.constant 0 : i32
    %65 = tpu.memref_slice %arg7[%c3_i32_81, %c0_i32_82] : memref<4x32xf32, #tpu.memory_space<vmem>> -> memref<1x32xf32, #tpu.memory_space<vmem>>
    %66 = tpu.memref_slice %arg9[%c0_i32_78, %c3_i32_79] : memref<2x4x!tpu.dma_semaphore, #tpu.memory_space<semaphore_mem>> -> memref<1x1x!tpu.dma_semaphore, #tpu.memory_space<semaphore_mem>>
    %67 = tpu.memref_squeeze %66 : memref<1x1x!tpu.dma_semaphore, #tpu.memory_space<semaphore_mem>> -> memref<!tpu.dma_semaphore, #tpu.memory_space<semaphore_mem>>
    tpu.wait_dma2 semaphore(%67 : memref<!tpu.dma_semaphore, #tpu.memory_space<semaphore_mem>>) src(%64 : memref<1x32xf32, #tpu.memory_space<any>>) dst(%65 : memref<1x32xf32, #tpu.memory_space<vmem>>)
    %c1_i32_83 = arith.constant 1 : i32
    %c3_i32_84 = arith.constant 3 : i32
    %c0_i32_85 = arith.constant 0 : i32
    %68 = tpu.memref_slice %arg1[%31, %c0_i32_85] : memref<16x32xf32, #tpu.memory_space<any>> -> memref<1x32xf32, #tpu.memory_space<any>>
    %c3_i32_86 = arith.constant 3 : i32
    %c0_i32_87 = arith.constant 0 : i32
    %69 = tpu.memref_slice %arg8[%c3_i32_86, %c0_i32_87] : memref<4x32xf32, #tpu.memory_space<vmem>> -> memref<1x32xf32, #tpu.memory_space<vmem>>
    %70 = tpu.memref_slice %arg9[%c1_i32_83, %c3_i32_84] : memref<2x4x!tpu.dma_semaphore, #tpu.memory_space<semaphore_mem>> -> memref<1x1x!tpu.dma_semaphore, #tpu.memory_space<semaphore_mem>>
    %71 = tpu.memref_squeeze %70 : memref<1x1x!tpu.dma_semaphore, #tpu.memory_space<semaphore_mem>> -> memref<!tpu.dma_semaphore, #tpu.memory_space<semaphore_mem>>
    tpu.wait_dma2 semaphore(%71 : memref<!tpu.dma_semaphore, #tpu.memory_space<semaphore_mem>>) src(%68 : memref<1x32xf32, #tpu.memory_space<any>>) dst(%69 : memref<1x32xf32, #tpu.memory_space<vmem>>)
    %c0_88 = arith.constant 0 : index
    %c0_89 = arith.constant 0 : index
    %72 = vector.load %arg7[%c0_88, %c0_89] : memref<4x32xf32, #tpu.memory_space<vmem>>, vector<4x32xf32>
    %c0_90 = arith.constant 0 : index
    %c0_91 = arith.constant 0 : index
    %73 = vector.load %arg8[%c0_90, %c0_91] : memref<4x32xf32, #tpu.memory_space<vmem>>, vector<4x32xf32>
    %74 = arith.addf %72, %73 : vector<4x32xf32>
    %75 = arith.mulf %72, %73 : vector<4x32xf32>
    %76 = tpu.concatenate %74, %75, %72, %73 in 1 : vector<4x32xf32>, vector<4x32xf32>, vector<4x32xf32>, vector<4x32xf32> -> vector<4x128xf32>
    %77 = arith.truncf %76 : vector<4x128xf32> to vector<4x128xbf16>
    %c0_92 = arith.constant 0 : index
    %c0_93 = arith.constant 0 : index
    %78 = vector.load %arg2[%c0_92, %c0_93] : memref<128x32xbf16, #tpu.memory_space<vmem>>, vector<128x32xbf16>
    %cst = arith.constant dense<0.000000e+00> : vector<4x32xf32>
    %79 = tpu.matmul %77, %78, %cst {dimension_numbers = #tpu.dot_dimension_numbers<[1], [0], [0], [1], [0, 0, 1, 1], [], []>} : vector<4x128xbf16>, vector<128x32xbf16>, vector<4x32xf32> -> vector<4x32xf32>
    %c0_94 = arith.constant 0 : index
    %c0_95 = arith.constant 0 : index
    %80 = vector.load %arg3[%c0_94, %c0_95] : memref<1x32xf32, #tpu.memory_space<vmem>>, vector<1x32xf32>
    %81 = vector.broadcast %80 : vector<1x32xf32> to vector<4x32xf32>
    %82 = arith.addf %79, %81 : vector<4x32xf32>
    %cst_96 = arith.constant 0.000000e+00 : f32
    %83 = vector.broadcast %cst_96 : f32 to vector<4x32xf32>
    %84 = arith.maximumf %82, %83 : vector<4x32xf32>
    %85 = arith.truncf %84 : vector<4x32xf32> to vector<4x32xbf16>
    %c0_97 = arith.constant 0 : index
    %c0_98 = arith.constant 0 : index
    %86 = vector.load %arg4[%c0_97, %c0_98] : memref<32x1xbf16, #tpu.memory_space<vmem>>, vector<32x1xbf16>
    %cst_99 = arith.constant dense<0.000000e+00> : vector<4x1xf32>
    %87 = tpu.matmul %85, %86, %cst_99 {dimension_numbers = #tpu.dot_dimension_numbers<[1], [0], [0], [1], [0, 0, 1, 1], [], []>} : vector<4x32xbf16>, vector<32x1xbf16>, vector<4x1xf32> -> vector<4x1xf32>
    %c0_100 = arith.constant 0 : index
    %c0_101 = arith.constant 0 : index
    %88 = vector.load %arg5[%c0_100, %c0_101] : memref<1x1xf32, #tpu.memory_space<vmem>>, vector<1x1xf32>
    %89 = vector.broadcast %88 : vector<1x1xf32> to vector<4x1xf32>
    %90 = arith.addf %87, %89 : vector<4x1xf32>
    %c0_102 = arith.constant 0 : index
    %c0_103 = arith.constant 0 : index
    %91 = vector.load %arg6[%c0_102, %c0_103] : memref<4x1xf32, #tpu.memory_space<vmem>>, vector<4x1xf32>
    tpu.vector_store %arg6[%c0_102, %c0_103], %90 {strides = array<i32>} : memref<4x1xf32, #tpu.memory_space<vmem>>, vector<4x1xf32>,
    return
  }
}

</mosaic_0001>

<llo_original>
// kernel: csgnn_forward.6
$region0: #{csgnn_forward.6}
  #allocation0 [shape = 'u32[]', space=smem, size = 0x4, offset = 0x4, fixed_abs, tag = 'smem constant byte address 0x4 - core index']
  #allocation1 [shape = 'u32[144,128]{1,0:T(1,128)}', space=vmem, size = 0x12000, scoped, tag = 'internal scratch']
  #allocation2 [shape = 'f32[1,1]{1,0:T(1,128)S(6)}', space=smem, size = 0x200, scoped, tag = 'scoped memory for csgnn_forward.6']
  %s0 = inlined_call_operand.vmem [shape: f32[2,16,32], index: 0, kind: input, shape index: {}]
  %s1 = inlined_call_operand.vmem [shape: f32[32,32], index: 1, kind: input, shape index: {}]
  %s2 = inlined_call_operand.<no memory space> [shape: f32[1,1], index: 2, kind: input, shape index: {}]
  %s3 = inlined_call_operand.vmem [shape: f32[16,2], index: 3, kind: output, shape index: {0}]
  %s4 = inlined_call_operand.vmem [shape: f32[16,2], index: 4, kind: output, shape index: {1}]
  %5 = xla_tuple %s3, %s4
  %s6 = sld [smem:[#allocation0]]
  $region30: #{csgnn_forward.6} parent=0
    _
  %s8 = ssub.s32 1, %s6
  %s9 = scalar_select 0, %s8, %s6
  %10 = sst [smem:[#allocation2]] %s2
  // Predicated region
  $region2: #{csgnn_forward.6} parent=0 // pred_check
    _
  $region3: #{csgnn_forward.6} parent=0 // pred_check_branch
    %12 = sbr.rel (0) target = $region5
  $region4: #{csgnn_forward.6} parent=0 // pred_region
    _
  $region5: #{csgnn_forward.6} parent=0 // pred_fallthru
    _
  // Predicated region
  $region6: #{csgnn_forward.6} parent=0 // pred_check
    _
  $region7: #{csgnn_forward.6} parent=0 // pred_check_branch
    %14 = sbr.rel (0) target = $region9
  $region8: #{csgnn_forward.6} parent=0 // pred_region
    _
  $region9: #{csgnn_forward.6} parent=0 // pred_fallthru
    _
  // Predicated region
  $region10: #{csgnn_forward.6} parent=0 // pred_check
    _
  $region11: #{csgnn_forward.6} parent=0 // pred_check_branch
    %16 = sbr.rel (0) target = $region13
  $region12: #{csgnn_forward.6} parent=0 // pred_region
    _
  $region13: #{csgnn_forward.6} parent=0 // pred_fallthru
    _
  %v18 = vld [vmem:[%s0] sm:$0xff]
  %v19 = vld [vmem:[%s0 + $0x8] sm:$0xff]
  %s20 = scalar_lea.vmem %s0, 16
  %v21 = vld [vmem:[%s20] sm:$0xff]
  %v22 = vld [vmem:[%s20 + $0x8] sm:$0xff]
  %vm23 = vcmask 261120
  %v24 = vsel %vm23, %v18, 0.0
  %v25 = vsel %vm23, %v19, 0.0
  %v26 = vadd.f32 %v24, %v25
  %v27 = vrot.slane %v26, 4
  %v28 = vadd.f32 %v26, %v27
  %v29 = vrot.slane %v28, 2
  %v30 = vadd.f32 %v28, %v29
  %v31 = vrot.slane %v30, 1
  %v32 = vadd.f32 %v30, %v31
  %v33 = vrcp.pop 16.0
  %v34 = vmul.f32 %v32, %v33
  %v35 = vxor.u32 %v34, 2147483648
  %v36 = vmul.f32 %v35, 1.442695
  %v37 = vpow.pop %v36
  %v38 = vadd.f32 %v37, 1.0
  %v39 = vrcp.pop %v38
  %v40 = vmul.f32 1.0, %v39
  %v41 = vsel %vm23, %v21, 0.0
  %v42 = vsel %vm23, %v22, 0.0
  %v43 = vadd.f32 %v41, %v42
  %v44 = vrot.slane %v43, 4
  %v45 = vadd.f32 %v43, %v44
  %v46 = vrot.slane %v45, 2
  %v47 = vadd.f32 %v45, %v46
  %v48 = vrot.slane %v47, 1
  %v49 = vadd.f32 %v47, %v48
  %v50 = vmul.f32 %v49, %v33
  %v51 = vxor.u32 %v50, 2147483648
  %v52 = vmul.f32 %v51, 1.442695
  %v53 = vpow.pop %v52
  %v54 = vadd.f32 %v53, 1.0
  %v55 = vrcp.pop %v54
  %v56 = vmul.f32 1.0, %v55
  %v57 = vld [vmem:[%s1] sm:$0xff]
  %v58 = vld [vmem:[%s1 + $0x8] sm:$0xff]
  %v59 = vld [vmem:[%s1 + $0x10] sm:$0xff]
  %v60 = vld [vmem:[%s1 + $0x18] sm:$0xff]
  %v61 = vmul.f32 %v57, %v40
  %v62 = vmul.f32 %v58, %v40
  %v63 = vmul.f32 %v59, %v40
  %v64 = vmul.f32 %v60, %v40
  %v65 = vsel %vm23, %v61, 0.0
  %66 = vadd.xlane.f32.xlu0 %v65
  %v67 = vpop.xlane.xlu0 %66
  %v68 = vsel %vm23, %v62, 0.0
  %69 = vadd.xlane.f32.xlu0 %v68
  %v70 = vpop.xlane.xlu0 %69
  %v71 = vsel %vm23, %v63, 0.0
  %72 = vadd.xlane.f32.xlu0 %v71
  %v73 = vpop.xlane.xlu0 %72
  %v74 = vsel %vm23, %v64, 0.0
  %75 = vadd.xlane.f32.xlu0 %v74
  %v76 = vpop.xlane.xlu0 %75
  %v77 = vmul.f32 %v57, %v56
  %v78 = vmul.f32 %v58, %v56
  %v79 = vmul.f32 %v59, %v56
  %v80 = vmul.f32 %v60, %v56
  %v81 = vsel %vm23, %v77, 0.0
  %82 = vadd.xlane.f32.xlu0 %v81
  %v83 = vpop.xlane.xlu0 %82
  %v84 = vsel %vm23, %v78, 0.0
  %85 = vadd.xlane.f32.xlu0 %v84
  %v86 = vpop.xlane.xlu0 %85
  %v87 = vsel %vm23, %v79, 0.0
  %88 = vadd.xlane.f32.xlu0 %v87
  %v89 = vpop.xlane.xlu0 %88
  %v90 = vsel %vm23, %v80, 0.0
  %91 = vadd.xlane.f32.xlu0 %v90
  %v92 = vpop.xlane.xlu0 %91
  %vm93 = vcmask 7168
  %v94 = vsel %vm93, %v67, %v83
  %v95 = vsel %vm93, %v70, %v86
  %v96 = vsel %vm93, %v73, %v89
  %v97 = vsel %vm93, %v76, %v92
  %v98 = vpack.c.bf16 %v95, %v94
  %v99 = vpack.c.bf16 %v97, %v96
  %v100 = vpack.c.bf16 %v19, %v18
  %v102 = vsel %vm23, %v100, 0
  %104 = vmatprep.subr.bf16.mxu0 0
  %105 = vmatpush1.bf16.msra.mxu0 %v98
  %106 = vmatprep.subr.bf16.mxu0 0
  %107 = vmatpush1.bf16.msra.mxu0 %v99
  %108 = vmatprep.subr.bf16.mxu0 0
  %109 = vmatpush1.bf16.msra.mxu0 0
  %110 = vmatprep.subr.bf16.mxu0 0
  %111 = vmatpush1.bf16.msra.mxu0 0
  %112 = vmatprep.subr.bf16.mxu0 0
  %113 = vmatpush1.bf16.msra.mxu0 0
  %114 = vmatprep.subr.bf16.mxu0 0
  %115 = vmatpush1.bf16.msra.mxu0 0
  %116 = vmatprep.subr.bf16.mxu0 0
  %117 = vmatpush1.bf16.msra.mxu0 0
  %118 = vmatprep.subr.bf16.mxu0 0
  %119 = vmatpush1.bf16.msra.mxu0 0
  %120 = vmatprep.subr.bf16.mxu0 0
  %121 = vmatpush1.bf16.msra.mxu0 0
  %122 = vmatprep.subr.bf16.mxu0 0
  %123 = vmatpush1.bf16.msra.mxu0 0
  %124 = vmatprep.subr.bf16.mxu0 0
  %125 = vmatpush1.bf16.msra.mxu0 0
  %126 = vmatprep.subr.bf16.mxu0 0
  %127 = vmatpush1.bf16.msra.mxu0 0
  %128 = vmatprep.subr.bf16.mxu0 0
  %129 = vmatpush1.bf16.msra.mxu0 0
  %130 = vmatprep.subr.bf16.mxu0 0
  %131 = vmatpush1.bf16.msra.mxu0 0
  %132 = vmatprep.subr.bf16.mxu0 0
  %133 = vmatpush1.bf16.msra.mxu0 0
  %134 = vmatprep.subr.bf16.mxu0 0
  %135 = vmatpush1.bf16.msra.mxu0 0
  %136 = vmatprep.mubr.bf16.mxu0 0
  %137 = vmatmul.mubr.bf16.gmra.mrb[0].mxu0 %v102
  %v138 = vpop.f32.mrb[0].mxu0
  %v139 = vadd.f32 0.0, %v138
  %v140 = vpop.f32.mrb[0].mxu0
  %v141 = vpop.f32.mrb[0].mxu0
  %v142 = vadd.f32 0.0, %v141
  %v143 = vpop.f32.mrb[0].mxu0
  %144 = vdwg.mxu0
  %v145 = vpack.c.bf16 %v22, %v21
  %v147 = vsel %vm23, %v145, 0
  %149 = vmatprep.subr.bf16.mxu0 0
  %150 = vmatpush1.bf16.msra.mxu0 %v98
  %151 = vmatprep.subr.bf16.mxu0 0
  %152 = vmatpush1.bf16.msra.mxu0 %v99
  %153 = vmatprep.subr.bf16.mxu0 0
  %154 = vmatpush1.bf16.msra.mxu0 0
  %155 = vmatprep.subr.bf16.mxu0 0
  %156 = vmatpush1.bf16.msra.mxu0 0
  %157 = vmatprep.subr.bf16.mxu0 0
  %158 = vmatpush1.bf16.msra.mxu0 0
  %159 = vmatprep.subr.bf16.mxu0 0
  %160 = vmatpush1.bf16.msra.mxu0 0
  %161 = vmatprep.subr.bf16.mxu0 0
  %162 = vmatpush1.bf16.msra.mxu0 0
  %163 = vmatprep.subr.bf16.mxu0 0
  %164 = vmatpush1.bf16.msra.mxu0 0
  %165 = vmatprep.subr.bf16.mxu0 0
  %166 = vmatpush1.bf16.msra.mxu0 0
  %167 = vmatprep.subr.bf16.mxu0 0
  %168 = vmatpush1.bf16.msra.mxu0 0
  %169 = vmatprep.subr.bf16.mxu0 0
  %170 = vmatpush1.bf16.msra.mxu0 0
  %171 = vmatprep.subr.bf16.mxu0 0
  %172 = vmatpush1.bf16.msra.mxu0 0
  %173 = vmatprep.subr.bf16.mxu0 0
  %174 = vmatpush1.bf16.msra.mxu0 0
  %175 = vmatprep.subr.bf16.mxu0 0
  %176 = vmatpush1.bf16.msra.mxu0 0
  %177 = vmatprep.subr.bf16.mxu0 0
  %178 = vmatpush1.bf16.msra.mxu0 0
  %179 = vmatprep.subr.bf16.mxu0 0
  %180 = vmatpush1.bf16.msra.mxu0 0
  %181 = vmatprep.mubr.bf16.mxu0 0
  %182 = vmatmul.mubr.bf16.gmra.mrb[0].mxu0 %v147
  %v183 = vpop.f32.mrb[0].mxu0
  %v184 = vadd.f32 0.0, %v183
  %v185 = vpop.f32.mrb[0].mxu0
  %v186 = vpop.f32.mrb[0].mxu0
  %v187 = vadd.f32 0.0, %v186
  %v188 = vpop.f32.mrb[0].mxu0
  %189 = vdwg.mxu0
  %s190 = sld [smem:[#allocation2]]
  %193 = vrot.lane.b32.xlu0 %v184, 1
  %v194 = vpop.permute.xlu0 %193
  %195 = vrot.lane.b32.xlu0 %v187, 1
  %v196 = vpop.permute.xlu0 %195
  %v199 = vsel %vm93, %v139, %v194
  %v200 = vsel %vm93, %v142, %v196
  %v201 = vstv %s190
  %v202 = vadd.f32 %v199, %v201
  %v203 = vadd.f32 %v200, %v201
  %vm204 = vcmask 15360
  %205 = vst.msk [vmem:[%s3] sm:$0xff] %vm204, %v202
  %206 = vst.msk [vmem:[%s3 + $0x8] sm:$0xff] %vm204, %v203
  %207 = vrot.lane.b32.xlu0 %v184, 127
  %v208 = vpop.permute.xlu0 %207
  %209 = vrot.lane.b32.xlu0 %v187, 127
  %v210 = vpop.permute.xlu0 %209
  %v213 = vsel %vm93, %v208, %v139
  %v214 = vsel %vm93, %v210, %v142
  %v215 = vadd.f32 %v213, %v201
  %v216 = vadd.f32 %v214, %v201
  %217 = vst.msk [vmem:[%s4] sm:$0xff] %vm204, %v215
  %218 = vst.msk [vmem:[%s4 + $0x8] sm:$0xff] %vm204, %v216
  // Predicated region
  $region14: #{csgnn_forward.6} parent=0 // pred_check
    _
  $region15: #{csgnn_forward.6} parent=0 // pred_check_branch
    %220 = sbr.rel (0) target = $region17
  $region16: #{csgnn_forward.6} parent=0 // pred_region
    _
  $region17: #{csgnn_forward.6} parent=0 // pred_fallthru
    _
  // Predicated region
  $region18: #{csgnn_forward.6} parent=0 // pred_check
    _
  $region19: #{csgnn_forward.6} parent=0 // pred_check_branch
    %222 = sbr.rel (0) target = $region21
  $region20: #{csgnn_forward.6} parent=0 // pred_region
    _
  $region21: #{csgnn_forward.6} parent=0 // pred_fallthru
    _
  // Predicated region
  $region22: #{csgnn_forward.6} parent=0 // pred_check
    _
  $region23: #{csgnn_forward.6} parent=0 // pred_check_branch
    %224 = sbr.rel (0) target = $region25
  $region24: #{csgnn_forward.6} parent=0 // pred_region
    _
  $region25: #{csgnn_forward.6} parent=0 // pred_fallthru
    _
  // Predicated region
  $region26: #{csgnn_forward.6} parent=0 // pred_check
    _
  $region27: #{csgnn_forward.6} parent=0 // pred_check_branch
    %226 = sbr.rel (0) target = $region29
  $region28: #{csgnn_forward.6} parent=0 // pred_region
    _
  $region29: #{csgnn_forward.6} parent=0 // pred_fallthru
    _

// kernel: csgnn_forward.4
$region0: #{csgnn_forward.4}
  #allocation0 [shape = 'u32[]', space=smem, size = 0x4, offset = 0x4, fixed_abs, tag = 'smem constant byte address 0x4 - core index']
  #allocation1 [shape = 'u32[144,128]{1,0:T(1,128)}', space=vmem, size = 0x12000, scoped, tag = 'internal scratch']
  %s0 = inlined_call_operand.vmem [shape: bf16[16,16], index: 0, kind: input, shape index: {}]
  %s1 = inlined_call_operand.vmem [shape: bf16[16,16], index: 1, kind: input, shape index: {}]
  %s2 = inlined_call_operand.vmem [shape: bf16[2,16,8], index: 2, kind: input, shape index: {}]
  %s3 = inlined_call_operand.vmem [shape: bf16[8,16], index: 3, kind: input, shape index: {}]
  %s4 = inlined_call_operand.vmem [shape: f32[1,16], index: 4, kind: input, shape index: {}]
  %s5 = inlined_call_operand.vmem [shape: bf16[8,16], index: 5, kind: input, shape index: {}]
  %s6 = inlined_call_operand.vmem [shape: f32[1,16], index: 6, kind: input, shape index: {}]
  %s7 = inlined_call_operand.vmem [shape: bf16[2,16,32], index: 7, kind: output, shape index: {}]
  %s8 = sld [smem:[#allocation0]]
  $region61: #{csgnn_forward.4} parent=0
    _
  %s10 = ssub.s32 1, %s8
  %s11 = scalar_select 0, %s10, %s8
  loop: start=0, step=1, limit=4
  $region2: #{csgnn_forward.4} parent=0 // loop_pre_header
    _
  $region3: #{csgnn_forward.4} parent=0 // loop_header
    %s13 = sphi 0, %s17
    %p14 = scmp.ge.s32.totalorder %s13, 4
    %s20 = sphi 0, %s32
    %s21 = sphi 0, %s28
    %s22 = sphi 0, %s20
    %s23 = sphi 0, %s21
    %s24 = sphi 0, %s22
    %s25 = sphi 0, %s23
    %s35 = sphi 0, %s37
    %s38 = sphi 0, %s35
    %s39 = sphi 0, %s38
    %s55 = sphi 0, %s39
    %s61 = sphi 0, %s63
    %s64 = sphi 0, %s61
    %s65 = sphi 0, %s64
    %s81 = sphi 0, %s65
    %s87 = sphi 0, %s89
    %s90 = sphi 0, %s87
    %s91 = sphi 0, %s90
    %s107 = sphi 0, %s91
    %s111 = sphi 0, %s111
    %s113 = sphi 0, %s111
    %s114 = sphi 0, %s113
    %s128 = sphi 0, %s114
    %s132 = sphi 0, %s132
    %s134 = sphi 0, %s132
    %s135 = sphi 0, %s134
    %s149 = sphi 0, %s135
    %s153 = sphi 0, %s153
    %s155 = sphi 0, %s153
    %s156 = sphi 0, %s155
    %s170 = sphi 0, %s156
    %s174 = sphi 0, %s174
    %s176 = sphi 0, %s174
    %s177 = sphi 0, %s176
    %s191 = sphi 0, %s177
    %s199 = sphi 0, %s201
    %s202 = sphi 0, %s199
    %s203 = sphi 0, %s202
    %s219 = sphi 0, %s203
  $region4: #{csgnn_forward.4} parent=0 // loop_header_branch
    %16 = sbr.rel (%p14) target = $region8
  $region5: #{csgnn_forward.4} parent=0 // loop_body
    %s18 = ssub.s32 %s13, 1
    %s19 = ssub.s32 %s13, 2
    %s26 = sadd.s32 1, %s21
    %p27 = scmp.ge.s32.totalorder %s26, 2
    %s28 = scalar_select %p27, 0, %s26
    %s29 = sadd.s32 1, %s20
    %s30 = scalar_select %p27, %s29, %s20
    %p31 = scmp.ge.s32.totalorder %s30, 1
    %s32 = scalar_select %p31, 0, %s30
    %s33 = ssub.s32 %s20, %s32
    %p34 = scmp.eq.s32.totalorder %s33, 0
    %s36 = sadd.s32 %s35, 1
    %s37 = scalar_select %p34, %s35, %s36
    %p40 = pneg %p34
    %p41 = scmp.eq.s32.totalorder %s13, 1
    %p42 = por %p40, %p41
    %p43 = scmp.ne.s32.totalorder %s35, %s38
    %p44 = scmp.eq.s32.totalorder %s13, 0
    %p45 = por %p43, %p44
    %p46 = scmp.ne.s32.totalorder %s35, %s38
    %p47 = scmp.eq.s32.totalorder %s18, 1
    %p48 = por %p46, %p47
    %p49 = scmp.ne.s32.totalorder %s38, %s39
    %p50 = scmp.eq.s32.totalorder %s18, 0
    %p51 = por %p49, %p50
    %p52 = scmp.ne.s32.totalorder %s38, %s39
    %p53 = scmp.eq.s32.totalorder %s19, 1
    %p54 = por %p52, %p53
    %p56 = scmp.ne.s32.totalorder %s39, %s55
    %p57 = scmp.eq.s32.totalorder %s19, 0
    %p58 = por %p56, %p57
    %s59 = ssub.s32 %s20, %s32
    %p60 = scmp.eq.s32.totalorder %s59, 0
    %s62 = sadd.s32 %s61, 1
    %s63 = scalar_select %p60, %s61, %s62
    %p66 = pneg %p60
    %p67 = scmp.eq.s32.totalorder %s13, 1
    %p68 = por %p66, %p67
    %p69 = scmp.ne.s32.totalorder %s61, %s64
    %p70 = scmp.eq.s32.totalorder %s13, 0
    %p71 = por %p69, %p70
    %p72 = scmp.ne.s32.totalorder %s61, %s64
    %p73 = scmp.eq.s32.totalorder %s18, 1
    %p74 = por %p72, %p73
    %p75 = scmp.ne.s32.totalorder %s64, %s65
    %p76 = scmp.eq.s32.totalorder %s18, 0
    %p77 = por %p75, %p76
    %p78 = scmp.ne.s32.totalorder %s64, %s65
    %p79 = scmp.eq.s32.totalorder %s19, 1
    %p80 = por %p78, %p79
    %p82 = scmp.ne.s32.totalorder %s65, %s81
    %p83 = scmp.eq.s32.totalorder %s19, 0
    %p84 = por %p82, %p83
    %s85 = ssub.s32 %s21, %s28
    %p86 = scmp.eq.s32.totalorder %s85, 0
    %s88 = sadd.s32 %s87, 1
    %s89 = scalar_select %p86, %s87, %s88
    %p92 = pneg %p86
    %p93 = scmp.eq.s32.totalorder %s13, 1
    %p94 = por %p92, %p93
    %p95 = scmp.ne.s32.totalorder %s87, %s90
    %p96 = scmp.eq.s32.totalorder %s13, 0
    %p97 = por %p95, %p96
    %p98 = scmp.ne.s32.totalorder %s87, %s90
    %p99 = scmp.eq.s32.totalorder %s18, 1
    %p100 = por %p98, %p99
    %p101 = scmp.ne.s32.totalorder %s90, %s91
    %p102 = scmp.eq.s32.totalorder %s18, 0
    %p103 = por %p101, %p102
    %p104 = scmp.ne.s32.totalorder %s90, %s91
    %p105 = scmp.eq.s32.totalorder %s19, 1
    %p106 = por %p104, %p105
    %p108 = scmp.ne.s32.totalorder %s91, %s107
    %p109 = scmp.eq.s32.totalorder %s19, 0
    %p110 = por %p108, %p109
    %s112 = sadd.s32 %s111, 1
    %p115 = scmp.eq.s32.totalorder %s13, 1
    %p116 = scmp.ne.s32.totalorder %s111, %s113
    %p117 = scmp.eq.s32.totalorder %s13, 0
    %p118 = por %p116, %p117
    %p119 = scmp.ne.s32.totalorder %s111, %s113
    %p120 = scmp.eq.s32.totalorder %s18, 1
    %p121 = por %p119, %p120
    %p122 = scmp.ne.s32.totalorder %s113, %s114
    %p123 = scmp.eq.s32.totalorder %s18, 0
    %p124 = por %p122, %p123
    %p125 = scmp.ne.s32.totalorder %s113, %s114
    %p126 = scmp.eq.s32.totalorder %s19, 1
    %p127 = por %p125, %p126
    %p129 = scmp.ne.s32.totalorder %s114, %s128
    %p130 = scmp.eq.s32.totalorder %s19, 0
    %p131 = por %p129, %p130
    %s133 = sadd.s32 %s132, 1
    %p136 = scmp.eq.s32.totalorder %s13, 1
    %p137 = scmp.ne.s32.totalorder %s132, %s134
    %p138 = scmp.eq.s32.totalorder %s13, 0
    %p139 = por %p137, %p138
    %p140 = scmp.ne.s32.totalorder %s132, %s134
    %p141 = scmp.eq.s32.totalorder %s18, 1
    %p142 = por %p140, %p141
    %p143 = scmp.ne.s32.totalorder %s134, %s135
    %p144 = scmp.eq.s32.totalorder %s18, 0
    %p145 = por %p143, %p144
    %p146 = scmp.ne.s32.totalorder %s134, %s135
    %p147 = scmp.eq.s32.totalorder %s19, 1
    %p148 = por %p146, %p147
    %p150 = scmp.ne.s32.totalorder %s135, %s149
    %p151 = scmp.eq.s32.totalorder %s19, 0
    %p152 = por %p150, %p151
    %s154 = sadd.s32 %s153, 1
    %p157 = scmp.eq.s32.totalorder %s13, 1
    %p158 = scmp.ne.s32.totalorder %s153, %s155
    %p159 = scmp.eq.s32.totalorder %s13, 0
    %p160 = por %p158, %p159
    %p161 = scmp.ne.s32.totalorder %s153, %s155
    %p162 = scmp.eq.s32.totalorder %s18, 1
    %p163 = por %p161, %p162
    %p164 = scmp.ne.s32.totalorder %s155, %s156
    %p165 = scmp.eq.s32.totalorder %s18, 0
    %p166 = por %p164, %p165
    %p167 = scmp.ne.s32.totalorder %s155, %s156
    %p168 = scmp.eq.s32.totalorder %s19, 1
    %p169 = por %p167, %p168
    %p171 = scmp.ne.s32.totalorder %s156, %s170
    %p172 = scmp.eq.s32.totalorder %s19, 0
    %p173 = por %p171, %p172
    %s175 = sadd.s32 %s174, 1
    %p178 = scmp.eq.s32.totalorder %s13, 1
    %p179 = scmp.ne.s32.totalorder %s174, %s176
    %p180 = scmp.eq.s32.totalorder %s13, 0
    %p181 = por %p179, %p180
    %p182 = scmp.ne.s32.totalorder %s174, %s176
    %p183 = scmp.eq.s32.totalorder %s18, 1
    %p184 = por %p182, %p183
    %p185 = scmp.ne.s32.totalorder %s176, %s177
    %p186 = scmp.eq.s32.totalorder %s18, 0
    %p187 = por %p185, %p186
    %p188 = scmp.ne.s32.totalorder %s176, %s177
    %p189 = scmp.eq.s32.totalorder %s19, 1
    %p190 = por %p188, %p189
    %p192 = scmp.ne.s32.totalorder %s177, %s191
    %p193 = scmp.eq.s32.totalorder %s19, 0
    %p194 = por %p192, %p193
    %s195 = ssub.s32 %s21, %s28
    %s196 = ssub.s32 %s20, %s32
    %s197 = sor.u32 %s195, %s196
    %p198 = scmp.eq.s32.totalorder %s197, 0
    %s200 = sadd.s32 %s199, 1
    %s201 = scalar_select %p198, %s199, %s200
    %p204 = pneg %p198
    %p205 = scmp.eq.s32.totalorder %s13, 1
    %p206 = por %p204, %p205
    %p207 = scmp.ne.s32.totalorder %s199, %s202
    %p208 = scmp.eq.s32.totalorder %s13, 0
    %p209 = por %p207, %p208
    %p210 = scmp.ne.s32.totalorder %s199, %s202
    %p211 = scmp.eq.s32.totalorder %s18, 1
    %p212 = por %p210, %p211
    %p213 = scmp.ne.s32.totalorder %s202, %s203
    %p214 = scmp.eq.s32.totalorder %s18, 0
    %p215 = por %p213, %p214
    %p216 = scmp.ne.s32.totalorder %s202, %s203
    %p217 = scmp.eq.s32.totalorder %s19, 1
    %p218 = por %p216, %p217
    %p220 = scmp.ne.s32.totalorder %s203, %s219
    %p221 = scmp.eq.s32.totalorder %s19, 0
    %p222 = por %p220, %p221
    %p223 = scmp.le.s32.totalorder 1, %s13
    %p224 = scmp.lt.s32.totalorder %s13, 3
    %p225 = pnand %p223, %p224
    %p226 = pneg %p225
    // Predicated region
    $region9: #{csgnn_forward.4} parent=5 // pred_check
      _
    $region10: #{csgnn_forward.4} parent=5 // pred_check_branch
      %228 = sbr.rel (%p225) target = $region12
    $region11: #{csgnn_forward.4} parent=5 // pred_region
      %s229 = ssub.s32 %s13, 1
      // Predicated region
      $region13: #{csgnn_forward.4} parent=11 // pred_check
        %p230 = pneg %p51
      $region14: #{csgnn_forward.4} parent=11 // pred_check_branch
        %232 = sbr.rel (%p230) target = $region16
      $region15: #{csgnn_forward.4} parent=11 // pred_region
        %s233 = smul.u32 2, %s22
        %p234 = scmp.lt.s32.totalorder %s233, 1
        %s235 = scalar_select %p234, %s233, 1
        %s236 = smul.addr %s235, 4
        %s237 = scalar_lea.vmem %s0, %s236
        %s238 = smul.u32 2, %s22
      $region16: #{csgnn_forward.4} parent=11 // pred_fallthru
        _
      // Predicated region
      $region17: #{csgnn_forward.4} parent=11 // pred_check
        %p239 = pneg %p77
      $region18: #{csgnn_forward.4} parent=11 // pred_check_branch
        %241 = sbr.rel (%p239) target = $region20
      $region19: #{csgnn_forward.4} parent=11 // pred_region
        %s242 = smul.u32 2, %s22
        %p243 = scmp.lt.s32.totalorder %s242, 1
        %s244 = scalar_select %p243, %s242, 1
        %s245 = smul.addr %s244, 4
        %s246 = scalar_lea.vmem %s1, %s245
        %s247 = smul.u32 2, %s22
      $region20: #{csgnn_forward.4} parent=11 // pred_fallthru
        _
      // Predicated region
      $region21: #{csgnn_forward.4} parent=11 // pred_check
        %p248 = pneg %p124
      $region22: #{csgnn_forward.4} parent=11 // pred_check_branch
        %250 = sbr.rel (%p248) target = $region24
      $region23: #{csgnn_forward.4} parent=11 // pred_region
        _
      $region24: #{csgnn_forward.4} parent=11 // pred_fallthru
        _
      // Predicated region
      $region25: #{csgnn_forward.4} parent=11 // pred_check
        %p251 = pneg %p145
      $region26: #{csgnn_forward.4} parent=11 // pred_check_branch
        %253 = sbr.rel (%p251) target = $region28
      $region27: #{csgnn_forward.4} parent=11 // pred_region
        _
      $region28: #{csgnn_forward.4} parent=11 // pred_fallthru
        _
      // Predicated region
      $region29: #{csgnn_forward.4} parent=11 // pred_check
        %p254 = pneg %p166
      $region30: #{csgnn_forward.4} parent=11 // pred_check_branch
        %256 = sbr.rel (%p254) target = $region32
      $region31: #{csgnn_forward.4} parent=11 // pred_region
        _
      $region32: #{csgnn_forward.4} parent=11 // pred_fallthru
        _
      // Predicated region
      $region33: #{csgnn_forward.4} parent=11 // pred_check
        %p257 = pneg %p187
      $region34: #{csgnn_forward.4} parent=11 // pred_check_branch
        %259 = sbr.rel (%p257) target = $region36
      $region35: #{csgnn_forward.4} parent=11 // pred_region
        _
      $region36: #{csgnn_forward.4} parent=11 // pred_fallthru
        _
    $region12: #{csgnn_forward.4} parent=5 // pred_fallthru
      _
    %p260 = scmp.lt.s32.totalorder %s13, 2
    // Predicated region
    $region37: #{csgnn_forward.4} parent=5 // pred_check
      %p261 = pneg %p260
    $region38: #{csgnn_forward.4} parent=5 // pred_check_branch
      %263 = sbr.rel (%p261) target = $region40
    $region39: #{csgnn_forward.4} parent=5 // pred_region
      // Predicated region
      $region41: #{csgnn_forward.4} parent=39 // pred_check
        %p264 = pneg %p97
      $region42: #{csgnn_forward.4} parent=39 // pred_check_branch
        %266 = sbr.rel (%p264) target = $region44
      $region43: #{csgnn_forward.4} parent=39 // pred_region
        %p267 = scmp.lt.s32.totalorder %s21, 1
        %s268 = scalar_select %p267, %s21, 1
        %s269 = smul.addr %s268, 2
        %s270 = smul.addr %s269, 4
        %s271 = scalar_lea.vmem %s2, %s270
      $region44: #{csgnn_forward.4} parent=39 // pred_fallthru
        _
    $region40: #{csgnn_forward.4} parent=5 // pred_fallthru
      _
    %p272 = scmp.le.s32.totalorder 1, %s13
    %p273 = scmp.lt.s32.totalorder %s13, 3
    %p274 = pnand %p272, %p273
    %p275 = pneg %p274
    // Predicated region
    $region45: #{csgnn_forward.4} parent=5 // pred_check
      _
    $region46: #{csgnn_forward.4} parent=5 // pred_check_branch
      %277 = sbr.rel (%p274) target = $region48
    $region47: #{csgnn_forward.4} parent=5 // pred_region
      %s278 = ssub.s32 %s13, 1
      %s279 = smul.u32 2, %s22
      %p280 = scmp.lt.s32.totalorder %s279, 1
      %s281 = scalar_select %p280, %s279, 1
      %s282 = smul.addr %s281, 4
      %s283 = scalar_lea.vmem %s0, %s282
      %p284 = pneg %p51
      %p285 = pneg %p48
      %s286 = smul.u32 2, %s22
      %p287 = scmp.lt.s32.totalorder %s286, 1
      %s288 = scalar_select %p287, %s286, 1
      %s289 = smul.addr %s288, 4
      %s290 = scalar_lea.vmem %s1, %s289
      %p291 = pneg %p77
      %p292 = pneg %p74
      %p293 = scmp.lt.s32.totalorder %s23, 1
      %s294 = scalar_select %p293, %s23, 1
      %s295 = smul.addr %s294, 2
      %s296 = smul.addr %s295, 4
      %s297 = scalar_lea.vmem %s2, %s296
      %p298 = pneg %p103
      %p299 = pneg %p100
      %p300 = pneg %p124
      %p301 = pneg %p121
      %p302 = pneg %p145
      %p303 = pneg %p142
      %p304 = pneg %p166
      %p305 = pneg %p163
      %p306 = pneg %p187
      %p307 = pneg %p184
      %p308 = pneg %p215
      %p309 = pneg %p212
      %s310 = smul.u32 2, %s22
      %p311 = scmp.lt.s32.totalorder %s23, 1
      %s312 = scalar_select %p311, %s23, 1
      %p313 = scmp.lt.s32.totalorder %s310, 1
      %s314 = scalar_select %p313, %s310, 1
      %s315 = smul.addr %s312, 2
      %s316 = sadd.s32 %s314, %s315
      %s317 = smul.addr %s316, 4
      %s318 = scalar_lea.vmem %s7, %s317
      %s319 = smul.u32 2, %s22
      %p320 = scmp.lt.s32.totalorder %s319, 1
      %s321 = scalar_select %p320, %s319, 1
      %s322 = smul.addr %s321, 4
      %s323 = scalar_lea.vmem %s0, %s322
      %s324 = smul.u32 2, %s22
      %s325 = smul.u32 2, %s22
      %p326 = scmp.lt.s32.totalorder %s325, 1
      %s327 = scalar_select %p326, %s325, 1
      %s328 = smul.addr %s327, 4
      %s329 = scalar_lea.vmem %s1, %s328
      %s330 = smul.u32 2, %s22
      %p331 = scmp.lt.s32.totalorder %s23, 1
      %s332 = scalar_select %p331, %s23, 1
      %s333 = smul.addr %s332, 2
      %s334 = smul.addr %s333, 4
      %s335 = scalar_lea.vmem %s2, %s334
      %s336 = smul.u32 2, %s22
      %p337 = scmp.lt.s32.totalorder %s23, 1
      %s338 = scalar_select %p337, %s23, 1
      %p339 = scmp.lt.s32.totalorder %s336, 1
      %s340 = scalar_select %p339, %s336, 1
      %s341 = smul.addr %s338, 2
      %s342 = sadd.s32 %s340, %s341
      %s343 = smul.addr %s342, 4
      %s344 = scalar_lea.vmem %s7, %s343
      %s345 = smul.u32 2, %s22
      %v347 = vld [vmem:[%s335] sm:$0xf]
      %v348 = vld [vmem:[%s335 + $0x4] sm:$0xf]
      %v349 = vld [vmem:[%s323] sm:$0xf]
      %v350 = vld [vmem:[%s323 + $0x4] sm:$0xf]
      %v353 = vunpack.c.l.b16 %v349
      %v354 = vunpack.c.l.b16 %v350
      %v355 = vpack.c.b16 %v354, %v353
      %v358 = vunpack.c.l.b16 %v347
      %v359 = vunpack.c.l.b16 %v348
      %v360 = vpack.c.b16 %v359, %v358
      %vm362 = vcmask 130048
      %v364 = vsel %vm362, %v355, 0
      %366 = vmatprep.subr.bf16.mxu0 0
      %367 = vmatpush1.bf16.msra.mxu0 %v360
      %368 = vmatprep.subr.bf16.mxu0 0
      %369 = vmatpush1.bf16.msra.mxu0 0
      %370 = vmatprep.subr.bf16.mxu0 0
      %371 = vmatpush1.bf16.msra.mxu0 0
      %372 = vmatprep.subr.bf16.mxu0 0
      %373 = vmatpush1.bf16.msra.mxu0 0
      %374 = vmatprep.subr.bf16.mxu0 0
      %375 = vmatpush1.bf16.msra.mxu0 0
      %376 = vmatprep.subr.bf16.mxu0 0
      %377 = vmatpush1.bf16.msra.mxu0 0
      %378 = vmatprep.subr.bf16.mxu0 0
      %379 = vmatpush1.bf16.msra.mxu0 0
      %380 = vmatprep.subr.bf16.mxu0 0
      %381 = vmatpush1.bf16.msra.mxu0 0
      %382 = vmatprep.subr.bf16.mxu0 0
      %383 = vmatpush1.bf16.msra.mxu0 0
      %384 = vmatprep.subr.bf16.mxu0 0
      %385 = vmatpush1.bf16.msra.mxu0 0
      %386 = vmatprep.subr.bf16.mxu0 0
      %387 = vmatpush1.bf16.msra.mxu0 0
      %388 = vmatprep.subr.bf16.mxu0 0
      %389 = vmatpush1.bf16.msra.mxu0 0
      %390 = vmatprep.subr.bf16.mxu0 0
      %391 = vmatpush1.bf16.msra.mxu0 0
      %392 = vmatprep.subr.bf16.mxu0 0
      %393 = vmatpush1.bf16.msra.mxu0 0
      %394 = vmatprep.subr.bf16.mxu0 0
      %395 = vmatpush1.bf16.msra.mxu0 0
      %396 = vmatprep.subr.bf16.mxu0 0
      %397 = vmatpush1.bf16.msra.mxu0 0
      %398 = vmatprep.mubr.bf16.mxu0 0
      %399 = vmatmul.mubr.bf16.gmra.mrb[0].mxu0 %v364
      %v400 = vpop.f32.mrb[0].mxu0
      %v401 = vadd.f32 0.0, %v400
      %v402 = vpop.f32.mrb[0].mxu0
      %v403 = vpop.f32.mrb[0].mxu0
      %v404 = vadd.f32 0.0, %v403
      %v405 = vpop.f32.mrb[0].mxu0
      %406 = vdwg.mxu0
      %v407 = vld [vmem:[%s329] sm:$0xf]
      %v408 = vld [vmem:[%s329 + $0x4] sm:$0xf]
      %v411 = vunpack.c.l.b16 %v407
      %v412 = vunpack.c.l.b16 %v408
      %v413 = vpack.c.b16 %v412, %v411
      %v415 = vsel %vm362, %v413, 0
      %417 = vmatprep.subr.bf16.mxu0 0
      %418 = vmatpush1.bf16.msra.mxu0 %v360
      %419 = vmatprep.subr.bf16.mxu0 0
      %420 = vmatpush1.bf16.msra.mxu0 0
      %421 = vmatprep.subr.bf16.mxu0 0
      %422 = vmatpush1.bf16.msra.mxu0 0
      %423 = vmatprep.subr.bf16.mxu0 0
      %424 = vmatpush1.bf16.msra.mxu0 0
      %425 = vmatprep.subr.bf16.mxu0 0
      %426 = vmatpush1.bf16.msra.mxu0 0
      %427 = vmatprep.subr.bf16.mxu0 0
      %428 = vmatpush1.bf16.msra.mxu0 0
      %429 = vmatprep.subr.bf16.mxu0 0
      %430 = vmatpush1.bf16.msra.mxu0 0
      %431 = vmatprep.subr.bf16.mxu0 0
      %432 = vmatpush1.bf16.msra.mxu0 0
      %433 = vmatprep.subr.bf16.mxu0 0
      %434 = vmatpush1.bf16.msra.mxu0 0
      %435 = vmatprep.subr.bf16.mxu0 0
      %436 = vmatpush1.bf16.msra.mxu0 0
      %437 = vmatprep.subr.bf16.mxu0 0
      %438 = vmatpush1.bf16.msra.mxu0 0
      %439 = vmatprep.subr.bf16.mxu0 0
      %440 = vmatpush1.bf16.msra.mxu0 0
      %441 = vmatprep.subr.bf16.mxu0 0
      %442 = vmatpush1.bf16.msra.mxu0 0
      %443 = vmatprep.subr.bf16.mxu0 0
      %444 = vmatpush1.bf16.msra.mxu0 0
      %445 = vmatprep.subr.bf16.mxu0 0
      %446 = vmatpush1.bf16.msra.mxu0 0
      %447 = vmatprep.subr.bf16.mxu0 0
      %448 = vmatpush1.bf16.msra.mxu0 0
      %449 = vmatprep.mubr.bf16.mxu0 0
      %450 = vmatmul.mubr.bf16.gmra.mrb[0].mxu0 %v415
      %v451 = vpop.f32.mrb[0].mxu0
      %v452 = vadd.f32 0.0, %v451
      %v453 = vpop.f32.mrb[0].mxu0
      %v454 = vpop.f32.mrb[0].mxu0
      %v455 = vadd.f32 0.0, %v454
      %v456 = vpop.f32.mrb[0].mxu0
      %457 = vdwg.mxu0
      %v458 = vpack.c.bf16 %v404, %v401
      %v459 = vld [vmem:[%s3] sm:$0xf]
      %v460 = vld [vmem:[%s4] sm:$0x1]
      %v462 = vlaneseq
      %v463 = vshrl.u32 %v462, 7
      %v464 = vsub.s32 0, %v463
      %v465 = vrot.slane %v460, %v464
      %vm467 = vcmask 64512
      %v469 = vsel %vm467, %v458, 0
      %vm471 = vcmask 1043456
      %v473 = vsel %vm471, %v459, 0
      %475 = vmatprep.subr.bf16.mxu0 0
      %476 = vmatpush1.bf16.msra.mxu0 %v473
      %477 = vmatprep.subr.bf16.mxu0 0
      %478 = vmatpush1.bf16.msra.mxu0 0
      %479 = vmatprep.subr.bf16.mxu0 0
      %480 = vmatpush1.bf16.msra.mxu0 0
      %481 = vmatprep.subr.bf16.mxu0 0
      %482 = vmatpush1.bf16.msra.mxu0 0
      %483 = vmatprep.subr.bf16.mxu0 0
      %484 = vmatpush1.bf16.msra.mxu0 0
      %485 = vmatprep.subr.bf16.mxu0 0
      %486 = vmatpush1.bf16.msra.mxu0 0
      %487 = vmatprep.subr.bf16.mxu0 0
      %488 = vmatpush1.bf16.msra.mxu0 0
      %489 = vmatprep.subr.bf16.mxu0 0
      %490 = vmatpush1.bf16.msra.mxu0 0
      %491 = vmatprep.subr.bf16.mxu0 0
      %492 = vmatpush1.bf16.msra.mxu0 0
      %493 = vmatprep.subr.bf16.mxu0 0
      %494 = vmatpush1.bf16.msra.mxu0 0
      %495 = vmatprep.subr.bf16.mxu0 0
      %496 = vmatpush1.bf16.msra.mxu0 0
      %497 = vmatprep.subr.bf16.mxu0 0
      %498 = vmatpush1.bf16.msra.mxu0 0
      %499 = vmatprep.subr.bf16.mxu0 0
      %500 = vmatpush1.bf16.msra.mxu0 0
      %501 = vmatprep.subr.bf16.mxu0 0
      %502 = vmatpush1.bf16.msra.mxu0 0
      %503 = vmatprep.subr.bf16.mxu0 0
      %504 = vmatpush1.bf16.msra.mxu0 0
      %505 = vmatprep.subr.bf16.mxu0 0
      %506 = vmatpush1.bf16.msra.mxu0 0
      %507 = vmatprep.mubr.bf16.mxu0 0
      %508 = vmatmul.mubr.bf16.gmra.mrb[0].mxu0 %v469
      %v509 = vpop.f32.mrb[0].mxu0
      %v510 = vadd.f32 %v465, %v509
      %v511 = vpop.f32.mrb[0].mxu0
      %v512 = vpop.f32.mrb[0].mxu0
      %v513 = vadd.f32 %v465, %v512
      %v514 = vpop.f32.mrb[0].mxu0
      %515 = vdwg.mxu0
      %v516 = vpack.c.bf16 %v455, %v452
      %v517 = vld [vmem:[%s5] sm:$0xf]
      %v518 = vld [vmem:[%s6] sm:$0x1]
      %v520 = vlaneseq
      %v521 = vshrl.u32 %v520, 7
      %v522 = vsub.s32 0, %v521
      %v523 = vrot.slane %v518, %v522
      %v526 = vsel %vm467, %v516, 0
      %v529 = vsel %vm471, %v517, 0
      %531 = vmatprep.subr.bf16.mxu0 0
      %532 = vmatpush1.bf16.msra.mxu0 %v529
      %533 = vmatprep.subr.bf16.mxu0 0
      %534 = vmatpush1.bf16.msra.mxu0 0
      %535 = vmatprep.subr.bf16.mxu0 0
      %536 = vmatpush1.bf16.msra.mxu0 0
      %537 = vmatprep.subr.bf16.mxu0 0
      %538 = vmatpush1.bf16.msra.mxu0 0
      %539 = vmatprep.subr.bf16.mxu0 0
      %540 = vmatpush1.bf16.msra.mxu0 0
      %541 = vmatprep.subr.bf16.mxu0 0
      %542 = vmatpush1.bf16.msra.mxu0 0
      %543 = vmatprep.subr.bf16.mxu0 0
      %544 = vmatpush1.bf16.msra.mxu0 0
      %545 = vmatprep.subr.bf16.mxu0 0
      %546 = vmatpush1.bf16.msra.mxu0 0
      %547 = vmatprep.subr.bf16.mxu0 0
      %548 = vmatpush1.bf16.msra.mxu0 0
      %549 = vmatprep.subr.bf16.mxu0 0
      %550 = vmatpush1.bf16.msra.mxu0 0
      %551 = vmatprep.subr.bf16.mxu0 0
      %552 = vmatpush1.bf16.msra.mxu0 0
      %553 = vmatprep.subr.bf16.mxu0 0
      %554 = vmatpush1.bf16.msra.mxu0 0
      %555 = vmatprep.subr.bf16.mxu0 0
      %556 = vmatpush1.bf16.msra.mxu0 0
      %557 = vmatprep.subr.bf16.mxu0 0
      %558 = vmatpush1.bf16.msra.mxu0 0
      %559 = vmatprep.subr.bf16.mxu0 0
      %560 = vmatpush1.bf16.msra.mxu0 0
      %561 = vmatprep.subr.bf16.mxu0 0
      %562 = vmatpush1.bf16.msra.mxu0 0
      %563 = vmatprep.mubr.bf16.mxu0 0
      %564 = vmatmul.mubr.bf16.gmra.mrb[0].mxu0 %v526
      %v565 = vpop.f32.mrb[0].mxu0
      %v566 = vadd.f32 %v523, %v565
      %v567 = vpop.f32.mrb[0].mxu0
      %v568 = vpop.f32.mrb[0].mxu0
      %v569 = vadd.f32 %v523, %v568
      %v570 = vpop.f32.mrb[0].mxu0
      %571 = vdwg.mxu0
      %v572 = vmax.f32 %v510, 0.0
      %v573 = vmax.f32 %v513, 0.0
      %v574 = vmax.f32 %v566, 0.0
      %v575 = vmax.f32 %v569, 0.0
      %578 = vrot.lane.b32.xlu0 %v574, 16
      %v579 = vpop.permute.xlu0 %578
      %580 = vrot.lane.b32.xlu0 %v575, 16
      %v581 = vpop.permute.xlu0 %580
      %v584 = vsel %vm362, %v572, %v579
      %v585 = vsel %vm362, %v573, %v581
      %v586 = vpack.c.bf16 %v585, %v584
      %v588 = vunpack.c.l.b16 %v586
      %v589 = vunpack.c.h.b16 %v586
      %v590 = vpack.c.b16 %v588, %v588
      %v591 = vpack.c.b16 %v589, %v589
      %vm594 = vcmask 257024
      %595 = vst.msk [vmem:[%s344] sm:$0xf] %vm594, %v590
      %596 = vst.msk [vmem:[%s344 + $0x4] sm:$0xf] %vm594, %v591
      %s597 = smul.u32 2, %s22
      %p598 = scmp.lt.s32.totalorder %s23, 1
      %s599 = scalar_select %p598, %s23, 1
      %p600 = scmp.lt.s32.totalorder %s597, 1
      %s601 = scalar_select %p600, %s597, 1
      %s602 = smul.addr %s599, 2
      %s603 = sadd.s32 %s601, %s602
      %s604 = smul.addr %s603, 4
      %s605 = scalar_lea.vmem %s7, %s604
      // Predicated region
      $region49: #{csgnn_forward.4} parent=47 // pred_check
        %p606 = pneg %p212
      $region50: #{csgnn_forward.4} parent=47 // pred_check_branch
        %608 = sbr.rel (%p606) target = $region52
      $region51: #{csgnn_forward.4} parent=47 // pred_region
        %s609 = smul.u32 2, %s22
      $region52: #{csgnn_forward.4} parent=47 // pred_fallthru
        _
    $region48: #{csgnn_forward.4} parent=5 // pred_fallthru
      _
    %p610 = scmp.le.s32.totalorder 2, %s13
    // Predicated region
    $region53: #{csgnn_forward.4} parent=5 // pred_check
      %p611 = pneg %p610
    $region54: #{csgnn_forward.4} parent=5 // pred_check_branch
      %613 = sbr.rel (%p611) target = $region56
    $region55: #{csgnn_forward.4} parent=5 // pred_region
      %s614 = ssub.s32 %s13, 2
      // Predicated region
      $region57: #{csgnn_forward.4} parent=55 // pred_check
        %p615 = pneg %p218
      $region58: #{csgnn_forward.4} parent=55 // pred_check_branch
        %617 = sbr.rel (%p615) target = $region60
      $region59: #{csgnn_forward.4} parent=55 // pred_region
        %s618 = smul.u32 2, %s24
        %p619 = scmp.lt.s32.totalorder %s25, 1
        %s620 = scalar_select %p619, %s25, 1
        %p621 = scmp.lt.s32.totalorder %s618, 1
        %s622 = scalar_select %p621, %s618, 1
        %s623 = smul.addr %s620, 2
        %s624 = sadd.s32 %s622, %s623
        %s625 = smul.addr %s624, 4
        %s626 = scalar_lea.vmem %s7, %s625
      $region60: #{csgnn_forward.4} parent=55 // pred_fallthru
        _
    $region56: #{csgnn_forward.4} parent=5 // pred_fallthru
      _
  $region6: #{csgnn_forward.4} parent=0 // loop_footer
    %s17 = sadd.s32 1, %s13
  $region7: #{csgnn_forward.4} parent=0 // loop_footer_branch
    %12 = sbr.rel target = $region3
  $region8: #{csgnn_forward.4} parent=0 // loop_exit
    _

// kernel: csgnn_forward.5
$region0: #{csgnn_forward.5}
  #allocation0 [shape = 'u32[]', space=smem, size = 0x4, offset = 0x4, fixed_abs, tag = 'smem constant byte address 0x4 - core index']
  #allocation1 [shape = 'u32[144,128]{1,0:T(1,128)}', space=vmem, size = 0x12000, scoped, tag = 'internal scratch']
  #allocation2 [shape = 'bf16[16,16]{1,0:T(16,128)(2,1)}', space=vmem, size = 0x1000, scoped, tag = 'scratch operand']
  #allocation3 [shape = 'bf16[16,16]{1,0:T(16,128)(2,1)}', space=vmem, size = 0x1000, scoped, tag = 'scratch operand']
  %s0 = inlined_call_operand.vmem [shape: bf16[2,16,32], index: 0, kind: input, shape index: {}]
  %s1 = inlined_call_operand.vmem [shape: bf16[16,16], index: 1, kind: input, shape index: {}]
  %s2 = inlined_call_operand.vmem [shape: bf16[16,16], index: 2, kind: input, shape index: {}]
  %s3 = inlined_call_operand.vmem [shape: bf16[32,16], index: 3, kind: input, shape index: {}]
  %s4 = inlined_call_operand.vmem [shape: f32[1,16], index: 4, kind: input, shape index: {}]
  %s5 = inlined_call_operand.vmem [shape: bf16[32,16], index: 5, kind: input, shape index: {}]
  %s6 = inlined_call_operand.vmem [shape: f32[1,16], index: 6, kind: input, shape index: {}]
  %s7 = inlined_call_operand.vmem [shape: f32[2,16,32], index: 7, kind: output, shape index: {}]
  %s8 = sld [smem:[#allocation0]]
  $region65: #{csgnn_forward.5} parent=0
    _
  %s10 = ssub.s32 1, %s8
  %s11 = scalar_select 0, %s10, %s8
  loop: start=0, step=1, limit=4
  $region2: #{csgnn_forward.5} parent=0 // loop_pre_header
    _
  $region3: #{csgnn_forward.5} parent=0 // loop_header
    %s13 = sphi 0, %s17
    %p14 = scmp.ge.s32.totalorder %s13, 4
    %s20 = sphi 0, %s32
    %s21 = sphi 0, %s28
    %s22 = sphi 0, %s20
    %s23 = sphi 0, %s21
    %s24 = sphi 0, %s22
    %s25 = sphi 0, %s23
    %s35 = sphi 0, %s37
    %s38 = sphi 0, %s35
    %s39 = sphi 0, %s38
    %s55 = sphi 0, %s39
    %s61 = sphi 0, %s63
    %s64 = sphi 0, %s61
    %s65 = sphi 0, %s64
    %s81 = sphi 0, %s65
    %s87 = sphi 0, %s89
    %s90 = sphi 0, %s87
    %s91 = sphi 0, %s90
    %s107 = sphi 0, %s91
    %s111 = sphi 0, %s111
    %s113 = sphi 0, %s111
    %s114 = sphi 0, %s113
    %s128 = sphi 0, %s114
    %s132 = sphi 0, %s132
    %s134 = sphi 0, %s132
    %s135 = sphi 0, %s134
    %s149 = sphi 0, %s135
    %s153 = sphi 0, %s153
    %s155 = sphi 0, %s153
    %s156 = sphi 0, %s155
    %s170 = sphi 0, %s156
    %s174 = sphi 0, %s174
    %s176 = sphi 0, %s174
    %s177 = sphi 0, %s176
    %s191 = sphi 0, %s177
    %s199 = sphi 0, %s201
    %s202 = sphi 0, %s199
    %s203 = sphi 0, %s202
    %s219 = sphi 0, %s203
  $region4: #{csgnn_forward.5} parent=0 // loop_header_branch
    %16 = sbr.rel (%p14) target = $region8
  $region5: #{csgnn_forward.5} parent=0 // loop_body
    %s18 = ssub.s32 %s13, 1
    %s19 = ssub.s32 %s13, 2
    %s26 = sadd.s32 1, %s21
    %p27 = scmp.ge.s32.totalorder %s26, 1
    %s28 = scalar_select %p27, 0, %s26
    %s29 = sadd.s32 1, %s20
    %s30 = scalar_select %p27, %s29, %s20
    %p31 = scmp.ge.s32.totalorder %s30, 2
    %s32 = scalar_select %p31, 0, %s30
    %s33 = ssub.s32 %s20, %s32
    %p34 = scmp.eq.s32.totalorder %s33, 0
    %s36 = sadd.s32 %s35, 1
    %s37 = scalar_select %p34, %s35, %s36
    %p40 = pneg %p34
    %p41 = scmp.eq.s32.totalorder %s13, 1
    %p42 = por %p40, %p41
    %p43 = scmp.ne.s32.totalorder %s35, %s38
    %p44 = scmp.eq.s32.totalorder %s13, 0
    %p45 = por %p43, %p44
    %p46 = scmp.ne.s32.totalorder %s35, %s38
    %p47 = scmp.eq.s32.totalorder %s18, 1
    %p48 = por %p46, %p47
    %p49 = scmp.ne.s32.totalorder %s38, %s39
    %p50 = scmp.eq.s32.totalorder %s18, 0
    %p51 = por %p49, %p50
    %p52 = scmp.ne.s32.totalorder %s38, %s39
    %p53 = scmp.eq.s32.totalorder %s19, 1
    %p54 = por %p52, %p53
    %p56 = scmp.ne.s32.totalorder %s39, %s55
    %p57 = scmp.eq.s32.totalorder %s19, 0
    %p58 = por %p56, %p57
    %s59 = ssub.s32 %s21, %s28
    %p60 = scmp.eq.s32.totalorder %s59, 0
    %s62 = sadd.s32 %s61, 1
    %s63 = scalar_select %p60, %s61, %s62
    %p66 = pneg %p60
    %p67 = scmp.eq.s32.totalorder %s13, 1
    %p68 = por %p66, %p67
    %p69 = scmp.ne.s32.totalorder %s61, %s64
    %p70 = scmp.eq.s32.totalorder %s13, 0
    %p71 = por %p69, %p70
    %p72 = scmp.ne.s32.totalorder %s61, %s64
    %p73 = scmp.eq.s32.totalorder %s18, 1
    %p74 = por %p72, %p73
    %p75 = scmp.ne.s32.totalorder %s64, %s65
    %p76 = scmp.eq.s32.totalorder %s18, 0
    %p77 = por %p75, %p76
    %p78 = scmp.ne.s32.totalorder %s64, %s65
    %p79 = scmp.eq.s32.totalorder %s19, 1
    %p80 = por %p78, %p79
    %p82 = scmp.ne.s32.totalorder %s65, %s81
    %p83 = scmp.eq.s32.totalorder %s19, 0
    %p84 = por %p82, %p83
    %s85 = ssub.s32 %s21, %s28
    %p86 = scmp.eq.s32.totalorder %s85, 0
    %s88 = sadd.s32 %s87, 1
    %s89 = scalar_select %p86, %s87, %s88
    %p92 = pneg %p86
    %p93 = scmp.eq.s32.totalorder %s13, 1
    %p94 = por %p92, %p93
    %p95 = scmp.ne.s32.totalorder %s87, %s90
    %p96 = scmp.eq.s32.totalorder %s13, 0
    %p97 = por %p95, %p96
    %p98 = scmp.ne.s32.totalorder %s87, %s90
    %p99 = scmp.eq.s32.totalorder %s18, 1
    %p100 = por %p98, %p99
    %p101 = scmp.ne.s32.totalorder %s90, %s91
    %p102 = scmp.eq.s32.totalorder %s18, 0
    %p103 = por %p101, %p102
    %p104 = scmp.ne.s32.totalorder %s90, %s91
    %p105 = scmp.eq.s32.totalorder %s19, 1
    %p106 = por %p104, %p105
    %p108 = scmp.ne.s32.totalorder %s91, %s107
    %p109 = scmp.eq.s32.totalorder %s19, 0
    %p110 = por %p108, %p109
    %s112 = sadd.s32 %s111, 1
    %p115 = scmp.eq.s32.totalorder %s13, 1
    %p116 = scmp.ne.s32.totalorder %s111, %s113
    %p117 = scmp.eq.s32.totalorder %s13, 0
    %p118 = por %p116, %p117
    %p119 = scmp.ne.s32.totalorder %s111, %s113
    %p120 = scmp.eq.s32.totalorder %s18, 1
    %p121 = por %p119, %p120
    %p122 = scmp.ne.s32.totalorder %s113, %s114
    %p123 = scmp.eq.s32.totalorder %s18, 0
    %p124 = por %p122, %p123
    %p125 = scmp.ne.s32.totalorder %s113, %s114
    %p126 = scmp.eq.s32.totalorder %s19, 1
    %p127 = por %p125, %p126
    %p129 = scmp.ne.s32.totalorder %s114, %s128
    %p130 = scmp.eq.s32.totalorder %s19, 0
    %p131 = por %p129, %p130
    %s133 = sadd.s32 %s132, 1
    %p136 = scmp.eq.s32.totalorder %s13, 1
    %p137 = scmp.ne.s32.totalorder %s132, %s134
    %p138 = scmp.eq.s32.totalorder %s13, 0
    %p139 = por %p137, %p138
    %p140 = scmp.ne.s32.totalorder %s132, %s134
    %p141 = scmp.eq.s32.totalorder %s18, 1
    %p142 = por %p140, %p141
    %p143 = scmp.ne.s32.totalorder %s134, %s135
    %p144 = scmp.eq.s32.totalorder %s18, 0
    %p145 = por %p143, %p144
    %p146 = scmp.ne.s32.totalorder %s134, %s135
    %p147 = scmp.eq.s32.totalorder %s19, 1
    %p148 = por %p146, %p147
    %p150 = scmp.ne.s32.totalorder %s135, %s149
    %p151 = scmp.eq.s32.totalorder %s19, 0
    %p152 = por %p150, %p151
    %s154 = sadd.s32 %s153, 1
    %p157 = scmp.eq.s32.totalorder %s13, 1
    %p158 = scmp.ne.s32.totalorder %s153, %s155
    %p159 = scmp.eq.s32.totalorder %s13, 0
    %p160 = por %p158, %p159
    %p161 = scmp.ne.s32.totalorder %s153, %s155
    %p162 = scmp.eq.s32.totalorder %s18, 1
    %p163 = por %p161, %p162
    %p164 = scmp.ne.s32.totalorder %s155, %s156
    %p165 = scmp.eq.s32.totalorder %s18, 0
    %p166 = por %p164, %p165
    %p167 = scmp.ne.s32.totalorder %s155, %s156
    %p168 = scmp.eq.s32.totalorder %s19, 1
    %p169 = por %p167, %p168
    %p171 = scmp.ne.s32.totalorder %s156, %s170
    %p172 = scmp.eq.s32.totalorder %s19, 0
    %p173 = por %p171, %p172
    %s175 = sadd.s32 %s174, 1
    %p178 = scmp.eq.s32.totalorder %s13, 1
    %p179 = scmp.ne.s32.totalorder %s174, %s176
    %p180 = scmp.eq.s32.totalorder %s13, 0
    %p181 = por %p179, %p180
    %p182 = scmp.ne.s32.totalorder %s174, %s176
    %p183 = scmp.eq.s32.totalorder %s18, 1
    %p184 = por %p182, %p183
    %p185 = scmp.ne.s32.totalorder %s176, %s177
    %p186 = scmp.eq.s32.totalorder %s18, 0
    %p187 = por %p185, %p186
    %p188 = scmp.ne.s32.totalorder %s176, %s177
    %p189 = scmp.eq.s32.totalorder %s19, 1
    %p190 = por %p188, %p189
    %p192 = scmp.ne.s32.totalorder %s177, %s191
    %p193 = scmp.eq.s32.totalorder %s19, 0
    %p194 = por %p192, %p193
    %s195 = ssub.s32 %s20, %s32
    %s196 = ssub.s32 %s21, %s28
    %s197 = sor.u32 %s195, %s196
    %p198 = scmp.eq.s32.totalorder %s197, 0
    %s200 = sadd.s32 %s199, 1
    %s201 = scalar_select %p198, %s199, %s200
    %p204 = pneg %p198
    %p205 = scmp.eq.s32.totalorder %s13, 1
    %p206 = por %p204, %p205
    %p207 = scmp.ne.s32.totalorder %s199, %s202
    %p208 = scmp.eq.s32.totalorder %s13, 0
    %p209 = por %p207, %p208
    %p210 = scmp.ne.s32.totalorder %s199, %s202
    %p211 = scmp.eq.s32.totalorder %s18, 1
    %p212 = por %p210, %p211
    %p213 = scmp.ne.s32.totalorder %s202, %s203
    %p214 = scmp.eq.s32.totalorder %s18, 0
    %p215 = por %p213, %p214
    %p216 = scmp.ne.s32.totalorder %s202, %s203
    %p217 = scmp.eq.s32.totalorder %s19, 1
    %p218 = por %p216, %p217
    %p220 = scmp.ne.s32.totalorder %s203, %s219
    %p221 = scmp.eq.s32.totalorder %s19, 0
    %p222 = por %p220, %p221
    %p223 = scmp.le.s32.totalorder 1, %s13
    %p224 = scmp.lt.s32.totalorder %s13, 3
    %p225 = pnand %p223, %p224
    %p226 = pneg %p225
    // Predicated region
    $region9: #{csgnn_forward.5} parent=5 // pred_check
      _
    $region10: #{csgnn_forward.5} parent=5 // pred_check_branch
      %228 = sbr.rel (%p225) target = $region12
    $region11: #{csgnn_forward.5} parent=5 // pred_region
      %s229 = ssub.s32 %s13, 1
      // Predicated region
      $region13: #{csgnn_forward.5} parent=11 // pred_check
        %p230 = pneg %p77
      $region14: #{csgnn_forward.5} parent=11 // pred_check_branch
        %232 = sbr.rel (%p230) target = $region16
      $region15: #{csgnn_forward.5} parent=11 // pred_region
        %s233 = smul.u32 2, %s23
        %p234 = scmp.lt.s32.totalorder %s233, 1
        %s235 = scalar_select %p234, %s233, 1
        %s236 = smul.addr %s235, 4
        %s237 = scalar_lea.vmem %s1, %s236
        %s238 = smul.u32 2, %s23
      $region16: #{csgnn_forward.5} parent=11 // pred_fallthru
        _
      // Predicated region
      $region17: #{csgnn_forward.5} parent=11 // pred_check
        %p239 = pneg %p103
      $region18: #{csgnn_forward.5} parent=11 // pred_check_branch
        %241 = sbr.rel (%p239) target = $region20
      $region19: #{csgnn_forward.5} parent=11 // pred_region
        %s242 = smul.u32 2, %s23
        %p243 = scmp.lt.s32.totalorder %s242, 1
        %s244 = scalar_select %p243, %s242, 1
        %s245 = smul.addr %s244, 4
        %s246 = scalar_lea.vmem %s2, %s245
        %s247 = smul.u32 2, %s23
      $region20: #{csgnn_forward.5} parent=11 // pred_fallthru
        _
      // Predicated region
      $region21: #{csgnn_forward.5} parent=11 // pred_check
        %p248 = pneg %p124
      $region22: #{csgnn_forward.5} parent=11 // pred_check_branch
        %250 = sbr.rel (%p248) target = $region24
      $region23: #{csgnn_forward.5} parent=11 // pred_region
        _
      $region24: #{csgnn_forward.5} parent=11 // pred_fallthru
        _
      // Predicated region
      $region25: #{csgnn_forward.5} parent=11 // pred_check
        %p251 = pneg %p145
      $region26: #{csgnn_forward.5} parent=11 // pred_check_branch
        %253 = sbr.rel (%p251) target = $region28
      $region27: #{csgnn_forward.5} parent=11 // pred_region
        _
      $region28: #{csgnn_forward.5} parent=11 // pred_fallthru
        _
      // Predicated region
      $region29: #{csgnn_forward.5} parent=11 // pred_check
        %p254 = pneg %p166
      $region30: #{csgnn_forward.5} parent=11 // pred_check_branch
        %256 = sbr.rel (%p254) target = $region32
      $region31: #{csgnn_forward.5} parent=11 // pred_region
        _
      $region32: #{csgnn_forward.5} parent=11 // pred_fallthru
        _
      // Predicated region
      $region33: #{csgnn_forward.5} parent=11 // pred_check
        %p257 = pneg %p187
      $region34: #{csgnn_forward.5} parent=11 // pred_check_branch
        %259 = sbr.rel (%p257) target = $region36
      $region35: #{csgnn_forward.5} parent=11 // pred_region
        _
      $region36: #{csgnn_forward.5} parent=11 // pred_fallthru
        _
    $region12: #{csgnn_forward.5} parent=5 // pred_fallthru
      _
    %p260 = scmp.lt.s32.totalorder %s13, 2
    // Predicated region
    $region37: #{csgnn_forward.5} parent=5 // pred_check
      %p261 = pneg %p260
    $region38: #{csgnn_forward.5} parent=5 // pred_check_branch
      %263 = sbr.rel (%p261) target = $region40
    $region39: #{csgnn_forward.5} parent=5 // pred_region
      // Predicated region
      $region41: #{csgnn_forward.5} parent=39 // pred_check
        %p264 = pneg %p45
      $region42: #{csgnn_forward.5} parent=39 // pred_check_branch
        %266 = sbr.rel (%p264) target = $region44
      $region43: #{csgnn_forward.5} parent=39 // pred_region
        %p267 = scmp.lt.s32.totalorder %s20, 1
        %s268 = scalar_select %p267, %s20, 1
        %s269 = smul.addr %s268, 2
        %s270 = smul.addr %s269, 4
        %s271 = scalar_lea.vmem %s0, %s270
      $region44: #{csgnn_forward.5} parent=39 // pred_fallthru
        _
    $region40: #{csgnn_forward.5} parent=5 // pred_fallthru
      _
    %p272 = scmp.le.s32.totalorder 1, %s13
    %p273 = scmp.lt.s32.totalorder %s13, 3
    %p274 = pnand %p272, %p273
    %p275 = pneg %p274
    // Predicated region
    $region45: #{csgnn_forward.5} parent=5 // pred_check
      _
    $region46: #{csgnn_forward.5} parent=5 // pred_check_branch
      %277 = sbr.rel (%p274) target = $region48
    $region47: #{csgnn_forward.5} parent=5 // pred_region
      %s278 = ssub.s32 %s13, 1
      %p279 = scmp.lt.s32.totalorder %s22, 1
      %s280 = scalar_select %p279, %s22, 1
      %s281 = smul.addr %s280, 2
      %s282 = smul.addr %s281, 4
      %s283 = scalar_lea.vmem %s0, %s282
      %p284 = pneg %p51
      %p285 = pneg %p48
      %s286 = smul.u32 2, %s23
      %p287 = scmp.lt.s32.totalorder %s286, 1
      %s288 = scalar_select %p287, %s286, 1
      %s289 = smul.addr %s288, 4
      %s290 = scalar_lea.vmem %s1, %s289
      %p291 = pneg %p77
      %p292 = pneg %p74
      %s293 = smul.u32 2, %s23
      %p294 = scmp.lt.s32.totalorder %s293, 1
      %s295 = scalar_select %p294, %s293, 1
      %s296 = smul.addr %s295, 4
      %s297 = scalar_lea.vmem %s2, %s296
      %p298 = pneg %p103
      %p299 = pneg %p100
      %p300 = pneg %p124
      %p301 = pneg %p121
      %p302 = pneg %p145
      %p303 = pneg %p142
      %p304 = pneg %p166
      %p305 = pneg %p163
      %p306 = pneg %p187
      %p307 = pneg %p184
      %p308 = pneg %p215
      %p309 = pneg %p212
      %s310 = smul.u32 2, %s23
      %p311 = scmp.lt.s32.totalorder %s22, 1
      %s312 = scalar_select %p311, %s22, 1
      %p313 = scmp.lt.s32.totalorder %s310, 1
      %s314 = scalar_select %p313, %s310, 1
      %s315 = smul.addr %s312, 2
      %s316 = sadd.s32 %s314, %s315
      %s317 = smul.addr %s316, 8
      %s318 = scalar_lea.vmem %s7, %s317
      %p319 = scmp.lt.s32.totalorder %s22, 1
      %s320 = scalar_select %p319, %s22, 1
      %s321 = smul.addr %s320, 2
      %s322 = smul.addr %s321, 4
      %s323 = scalar_lea.vmem %s0, %s322
      %s324 = smul.u32 2, %s23
      %p325 = scmp.lt.s32.totalorder %s324, 1
      %s326 = scalar_select %p325, %s324, 1
      %s327 = smul.addr %s326, 4
      %s328 = scalar_lea.vmem %s1, %s327
      %s329 = smul.u32 2, %s23
      %s330 = smul.u32 2, %s23
      %p331 = scmp.lt.s32.totalorder %s330, 1
      %s332 = scalar_select %p331, %s330, 1
      %s333 = smul.addr %s332, 4
      %s334 = scalar_lea.vmem %s2, %s333
      %s335 = smul.u32 2, %s23
      %s336 = smul.u32 2, %s23
      %p337 = scmp.lt.s32.totalorder %s22, 1
      %s338 = scalar_select %p337, %s22, 1
      %p339 = scmp.lt.s32.totalorder %s336, 1
      %s340 = scalar_select %p339, %s336, 1
      %s341 = smul.addr %s338, 2
      %s342 = sadd.s32 %s340, %s341
      %s343 = smul.addr %s342, 8
      %s344 = scalar_lea.vmem %s7, %s343
      %s345 = smul.u32 2, %s23
      %p347 = scmp.eq.s32.totalorder %s23, 0
      // Predicated region
      $region49: #{csgnn_forward.5} parent=47 // pred_check
        %p348 = pneg %p347
      $region50: #{csgnn_forward.5} parent=47 // pred_check_branch
        %350 = sbr.rel (%p348) target = $region52
      $region51: #{csgnn_forward.5} parent=47 // pred_region
        %v351 = vld [vmem:[%s323] sm:$0xf]
        %v352 = vld [vmem:[%s323 + $0x4] sm:$0xf]
        %v353 = vld [vmem:[%s3] sm:$0xf]
        %v354 = vld [vmem:[%s3 + $0x4] sm:$0xf]
        %v355 = vld [vmem:[%s3 + $0x8] sm:$0xf]
        %v356 = vld [vmem:[%s3 + $0xc] sm:$0xf]
        %v359 = vunpack.c.l.b16 %v351
        %v360 = vunpack.c.l.b16 %v352
        %v361 = vpack.c.b16 %v360, %v359
        %v366 = vunpack.c.l.b16 %v353
        %v367 = vunpack.c.l.b16 %v354
        %v368 = vunpack.c.l.b16 %v355
        %v369 = vunpack.c.l.b16 %v356
        %v370 = vpack.c.b16 %v367, %v366
        %v371 = vpack.c.b16 %v369, %v368
        %vm374 = vcmask 261120
        %v376 = vsel %vm374, %v361, 0
        %378 = vmatprep.subr.bf16.mxu0 0
        %379 = vmatpush1.bf16.msra.mxu0 %v370
        %380 = vmatprep.subr.bf16.mxu0 0
        %381 = vmatpush1.bf16.msra.mxu0 %v371
        %382 = vmatprep.subr.bf16.mxu0 0
        %383 = vmatpush1.bf16.msra.mxu0 0
        %384 = vmatprep.subr.bf16.mxu0 0
        %385 = vmatpush1.bf16.msra.mxu0 0
        %386 = vmatprep.subr.bf16.mxu0 0
        %387 = vmatpush1.bf16.msra.mxu0 0
        %388 = vmatprep.subr.bf16.mxu0 0
        %389 = vmatpush1.bf16.msra.mxu0 0
        %390 = vmatprep.subr.bf16.mxu0 0
        %391 = vmatpush1.bf16.msra.mxu0 0
        %392 = vmatprep.subr.bf16.mxu0 0
        %393 = vmatpush1.bf16.msra.mxu0 0
        %394 = vmatprep.subr.bf16.mxu0 0
        %395 = vmatpush1.bf16.msra.mxu0 0
        %396 = vmatprep.subr.bf16.mxu0 0
        %397 = vmatpush1.bf16.msra.mxu0 0
        %398 = vmatprep.subr.bf16.mxu0 0
        %399 = vmatpush1.bf16.msra.mxu0 0
        %400 = vmatprep.subr.bf16.mxu0 0
        %401 = vmatpush1.bf16.msra.mxu0 0
        %402 = vmatprep.subr.bf16.mxu0 0
        %403 = vmatpush1.bf16.msra.mxu0 0
        %404 = vmatprep.subr.bf16.mxu0 0
        %405 = vmatpush1.bf16.msra.mxu0 0
        %406 = vmatprep.subr.bf16.mxu0 0
        %407 = vmatpush1.bf16.msra.mxu0 0
        %408 = vmatprep.subr.bf16.mxu0 0
        %409 = vmatpush1.bf16.msra.mxu0 0
        %410 = vmatprep.mubr.bf16.mxu0 0
        %411 = vmatmul.mubr.bf16.gmra.mrb[0].mxu0 %v376
        %v412 = vpop.f32.mrb[0].mxu0
        %v413 = vadd.f32 0.0, %v412
        %v414 = vpop.f32.mrb[0].mxu0
        %v415 = vpop.f32.mrb[0].mxu0
        %v416 = vadd.f32 0.0, %v415
        %v417 = vpop.f32.mrb[0].mxu0
        %418 = vdwg.mxu0
        %v419 = vpack.c.bf16 %v416, %v413
        %vm420 = vcmask 130048
        %421 = vst.msk [vmem:[#allocation2] sm:$0xff] %vm420, %v419
        %v422 = vld [vmem:[%s5] sm:$0xf]
        %v423 = vld [vmem:[%s5 + $0x4] sm:$0xf]
        %v424 = vld [vmem:[%s5 + $0x8] sm:$0xf]
        %v425 = vld [vmem:[%s5 + $0xc] sm:$0xf]
        %v430 = vunpack.c.l.b16 %v422
        %v431 = vunpack.c.l.b16 %v423
        %v432 = vunpack.c.l.b16 %v424
        %v433 = vunpack.c.l.b16 %v425
        %v434 = vpack.c.b16 %v431, %v430
        %v435 = vpack.c.b16 %v433, %v432
        %438 = vmatprep.subr.bf16.mxu0 0
        %439 = vmatpush1.bf16.msra.mxu0 %v434
        %440 = vmatprep.subr.bf16.mxu0 0
        %441 = vmatpush1.bf16.msra.mxu0 %v435
        %442 = vmatprep.subr.bf16.mxu0 0
        %443 = vmatpush1.bf16.msra.mxu0 0
        %444 = vmatprep.subr.bf16.mxu0 0
        %445 = vmatpush1.bf16.msra.mxu0 0
        %446 = vmatprep.subr.bf16.mxu0 0
        %447 = vmatpush1.bf16.msra.mxu0 0
        %448 = vmatprep.subr.bf16.mxu0 0
        %449 = vmatpush1.bf16.msra.mxu0 0
        %450 = vmatprep.subr.bf16.mxu0 0
        %451 = vmatpush1.bf16.msra.mxu0 0
        %452 = vmatprep.subr.bf16.mxu0 0
        %453 = vmatpush1.bf16.msra.mxu0 0
        %454 = vmatprep.subr.bf16.mxu0 0
        %455 = vmatpush1.bf16.msra.mxu0 0
        %456 = vmatprep.subr.bf16.mxu0 0
        %457 = vmatpush1.bf16.msra.mxu0 0
        %458 = vmatprep.subr.bf16.mxu0 0
        %459 = vmatpush1.bf16.msra.mxu0 0
        %460 = vmatprep.subr.bf16.mxu0 0
        %461 = vmatpush1.bf16.msra.mxu0 0
        %462 = vmatprep.subr.bf16.mxu0 0
        %463 = vmatpush1.bf16.msra.mxu0 0
        %464 = vmatprep.subr.bf16.mxu0 0
        %465 = vmatpush1.bf16.msra.mxu0 0
        %466 = vmatprep.subr.bf16.mxu0 0
        %467 = vmatpush1.bf16.msra.mxu0 0
        %468 = vmatprep.subr.bf16.mxu0 0
        %469 = vmatpush1.bf16.msra.mxu0 0
        %470 = vmatprep.mubr.bf16.mxu0 0
        %471 = vmatmul.mubr.bf16.gmra.mrb[0].mxu0 %v376
        %v472 = vpop.f32.mrb[0].mxu0
        %v473 = vadd.f32 0.0, %v472
        %v474 = vpop.f32.mrb[0].mxu0
        %v475 = vpop.f32.mrb[0].mxu0
        %v476 = vadd.f32 0.0, %v475
        %v477 = vpop.f32.mrb[0].mxu0
        %478 = vdwg.mxu0
        %v479 = vpack.c.bf16 %v476, %v473
        %480 = vst.msk [vmem:[#allocation3] sm:$0xff] %vm420, %v479
      $region52: #{csgnn_forward.5} parent=47 // pred_fallthru
        _
      %v481 = vld [vmem:[%s328] sm:$0xf]
      %v482 = vld [vmem:[%s328 + $0x4] sm:$0xf]
      %v483 = vld [vmem:[#allocation2] sm:$0xff]
      %v484 = vld [vmem:[%s4] sm:$0x1]
      %v486 = vlaneseq
      %v487 = vshrl.u32 %v486, 7
      %v488 = vsub.s32 0, %v487
      %v489 = vrot.slane %v484, %v488
      %v493 = vunpack.c.l.b16 %v481
      %v494 = vunpack.c.l.b16 %v482
      %v495 = vpack.c.b16 %v494, %v493
      %vm496 = vcmask 130048
      %v498 = vsel %vm496, %v495, 0
      %500 = vmatprep.subr.bf16.mxu0 0
      %501 = vmatpush1.bf16.msra.mxu0 %v483
      %502 = vmatprep.subr.bf16.mxu0 0
      %503 = vmatpush1.bf16.msra.mxu0 0
      %504 = vmatprep.subr.bf16.mxu0 0
      %505 = vmatpush1.bf16.msra.mxu0 0
      %506 = vmatprep.subr.bf16.mxu0 0
      %507 = vmatpush1.bf16.msra.mxu0 0
      %508 = vmatprep.subr.bf16.mxu0 0
      %509 = vmatpush1.bf16.msra.mxu0 0
      %510 = vmatprep.subr.bf16.mxu0 0
      %511 = vmatpush1.bf16.msra.mxu0 0
      %512 = vmatprep.subr.bf16.mxu0 0
      %513 = vmatpush1.bf16.msra.mxu0 0
      %514 = vmatprep.subr.bf16.mxu0 0
      %515 = vmatpush1.bf16.msra.mxu0 0
      %516 = vmatprep.subr.bf16.mxu0 0
      %517 = vmatpush1.bf16.msra.mxu0 0
      %518 = vmatprep.subr.bf16.mxu0 0
      %519 = vmatpush1.bf16.msra.mxu0 0
      %520 = vmatprep.subr.bf16.mxu0 0
      %521 = vmatpush1.bf16.msra.mxu0 0
      %522 = vmatprep.subr.bf16.mxu0 0
      %523 = vmatpush1.bf16.msra.mxu0 0
      %524 = vmatprep.subr.bf16.mxu0 0
      %525 = vmatpush1.bf16.msra.mxu0 0
      %526 = vmatprep.subr.bf16.mxu0 0
      %527 = vmatpush1.bf16.msra.mxu0 0
      %528 = vmatprep.subr.bf16.mxu0 0
      %529 = vmatpush1.bf16.msra.mxu0 0
      %530 = vmatprep.subr.bf16.mxu0 0
      %531 = vmatpush1.bf16.msra.mxu0 0
      %532 = vmatprep.mubr.bf16.mxu0 0
      %533 = vmatmul.mubr.bf16.gmra.mrb[0].mxu0 %v498
      %v534 = vpop.f32.mrb[0].mxu0
      %v535 = vadd.f32 %v489, %v534
      %v536 = vpop.f32.mrb[0].mxu0
      %v537 = vpop.f32.mrb[0].mxu0
      %v538 = vadd.f32 %v489, %v537
      %v539 = vpop.f32.mrb[0].mxu0
      %540 = vdwg.mxu0
      %v541 = vld [vmem:[%s334] sm:$0xf]
      %v542 = vld [vmem:[%s334 + $0x4] sm:$0xf]
      %v543 = vld [vmem:[#allocation3] sm:$0xff]
      %v544 = vld [vmem:[%s6] sm:$0x1]
      %v546 = vlaneseq
      %v547 = vshrl.u32 %v546, 7
      %v548 = vsub.s32 0, %v547
      %v549 = vrot.slane %v544, %v548
      %v553 = vunpack.c.l.b16 %v541
      %v554 = vunpack.c.l.b16 %v542
      %v555 = vpack.c.b16 %v554, %v553
      %v557 = vsel %vm496, %v555, 0
      %559 = vmatprep.subr.bf16.mxu0 0
      %560 = vmatpush1.bf16.msra.mxu0 %v543
      %561 = vmatprep.subr.bf16.mxu0 0
      %562 = vmatpush1.bf16.msra.mxu0 0
      %563 = vmatprep.subr.bf16.mxu0 0
      %564 = vmatpush1.bf16.msra.mxu0 0
      %565 = vmatprep.subr.bf16.mxu0 0
      %566 = vmatpush1.bf16.msra.mxu0 0
      %567 = vmatprep.subr.bf16.mxu0 0
      %568 = vmatpush1.bf16.msra.mxu0 0
      %569 = vmatprep.subr.bf16.mxu0 0
      %570 = vmatpush1.bf16.msra.mxu0 0
      %571 = vmatprep.subr.bf16.mxu0 0
      %572 = vmatpush1.bf16.msra.mxu0 0
      %573 = vmatprep.subr.bf16.mxu0 0
      %574 = vmatpush1.bf16.msra.mxu0 0
      %575 = vmatprep.subr.bf16.mxu0 0
      %576 = vmatpush1.bf16.msra.mxu0 0
      %577 = vmatprep.subr.bf16.mxu0 0
      %578 = vmatpush1.bf16.msra.mxu0 0
      %579 = vmatprep.subr.bf16.mxu0 0
      %580 = vmatpush1.bf16.msra.mxu0 0
      %581 = vmatprep.subr.bf16.mxu0 0
      %582 = vmatpush1.bf16.msra.mxu0 0
      %583 = vmatprep.subr.bf16.mxu0 0
      %584 = vmatpush1.bf16.msra.mxu0 0
      %585 = vmatprep.subr.bf16.mxu0 0
      %586 = vmatpush1.bf16.msra.mxu0 0
      %587 = vmatprep.subr.bf16.mxu0 0
      %588 = vmatpush1.bf16.msra.mxu0 0
      %589 = vmatprep.subr.bf16.mxu0 0
      %590 = vmatpush1.bf16.msra.mxu0 0
      %591 = vmatprep.mubr.bf16.mxu0 0
      %592 = vmatmul.mubr.bf16.gmra.mrb[0].mxu0 %v557
      %v593 = vpop.f32.mrb[0].mxu0
      %v594 = vadd.f32 %v549, %v593
      %v595 = vpop.f32.mrb[0].mxu0
      %v596 = vpop.f32.mrb[0].mxu0
      %v597 = vadd.f32 %v549, %v596
      %v598 = vpop.f32.mrb[0].mxu0
      %599 = vdwg.mxu0
      %602 = vrot.lane.b32.xlu0 %v594, 16
      %v603 = vpop.permute.xlu0 %602
      %604 = vrot.lane.b32.xlu0 %v597, 16
      %v605 = vpop.permute.xlu0 %604
      %v608 = vsel %vm496, %v535, %v603
      %v609 = vsel %vm496, %v538, %v605
      %vm610 = vcmask 261120
      %611 = vst.msk [vmem:[%s344] sm:$0xff] %vm610, %v608
      %612 = vst.msk [vmem:[%s344 + $0x8] sm:$0xff] %vm610, %v609
      %s613 = smul.u32 2, %s23
      %p614 = scmp.lt.s32.totalorder %s22, 1
      %s615 = scalar_select %p614, %s22, 1
      %p616 = scmp.lt.s32.totalorder %s613, 1
      %s617 = scalar_select %p616, %s613, 1
      %s618 = smul.addr %s615, 2
      %s619 = sadd.s32 %s617, %s618
      %s620 = smul.addr %s619, 8
      %s621 = scalar_lea.vmem %s7, %s620
      // Predicated region
      $region53: #{csgnn_forward.5} parent=47 // pred_check
        %p622 = pneg %p212
      $region54: #{csgnn_forward.5} parent=47 // pred_check_branch
        %624 = sbr.rel (%p622) target = $region56
      $region55: #{csgnn_forward.5} parent=47 // pred_region
        %s625 = smul.u32 2, %s23
      $region56: #{csgnn_forward.5} parent=47 // pred_fallthru
        _
    $region48: #{csgnn_forward.5} parent=5 // pred_fallthru
      _
    %p626 = scmp.le.s32.totalorder 2, %s13
    // Predicated region
    $region57: #{csgnn_forward.5} parent=5 // pred_check
      %p627 = pneg %p626
    $region58: #{csgnn_forward.5} parent=5 // pred_check_branch
      %629 = sbr.rel (%p627) target = $region60
    $region59: #{csgnn_forward.5} parent=5 // pred_region
      %s630 = ssub.s32 %s13, 2
      // Predicated region
      $region61: #{csgnn_forward.5} parent=59 // pred_check
        %p631 = pneg %p218
      $region62: #{csgnn_forward.5} parent=59 // pred_check_branch
        %633 = sbr.rel (%p631) target = $region64
      $region63: #{csgnn_forward.5} parent=59 // pred_region
        %s634 = smul.u32 2, %s25
        %p635 = scmp.lt.s32.totalorder %s24, 1
        %s636 = scalar_select %p635, %s24, 1
        %p637 = scmp.lt.s32.totalorder %s634, 1
        %s638 = scalar_select %p637, %s634, 1
        %s639 = smul.addr %s636, 2
        %s640 = sadd.s32 %s638, %s639
        %s641 = smul.addr %s640, 8
        %s642 = scalar_lea.vmem %s7, %s641
      $region64: #{csgnn_forward.5} parent=59 // pred_fallthru
        _
    $region60: #{csgnn_forward.5} parent=5 // pred_fallthru
      _
  $region6: #{csgnn_forward.5} parent=0 // loop_footer
    %s17 = sadd.s32 1, %s13
  $region7: #{csgnn_forward.5} parent=0 // loop_footer_branch
    %12 = sbr.rel target = $region3
  $region8: #{csgnn_forward.5} parent=0 // loop_exit
    _

// kernel: csgnn_forward.7
$region0: #{csgnn_forward.7}
  #allocation0 [shape = 'u32[]', space=smem, size = 0x4, offset = 0x4, fixed_abs, tag = 'smem constant byte address 0x4 - core index']
  #allocation1 [shape = 'u32[144,128]{1,0:T(1,128)}', space=vmem, size = 0x12000, scoped, tag = 'internal scratch']
  #allocation2 [shape = 'f32[4,32]{1,0:T(4,128)}', space=vmem, size = 0x800, scoped, tag = 'scratch operand']
  #allocation3 [shape = 'f32[4,32]{1,0:T(4,128)}', space=vmem, size = 0x800, scoped, tag = 'scratch operand']
  #allocation4 [shape = 's32[8]{0}', space=sflag, size = 0x20, scoped, tag = 'scratch operand']
  #allocation5 [shape = 'f32[1,1]{1,0:T(1,128)S(1)}', space=vmem, size = 0x200, scoped, tag = 'scoped memory for csgnn_forward.7']
  #allocation8 [shape = 's32[]', space=sflag, size = 0x4, offset = 0, fixed_abs, tag = 'sflag constant byte address 0x0 - dummy sync flag']
  #allocation9 [shape = 's32[]', space=sflag, size = 0x4, offset = 0, fixed_abs, tag = 'sflag constant byte address 0x0 - dummy sync flag']
  #allocation10 [shape = 's32[]', space=sflag, size = 0x4, offset = 0, fixed_abs, tag = 'sflag constant byte address 0x0 - dummy sync flag']
  #allocation11 [shape = 's32[]', space=sflag, size = 0x4, offset = 0, fixed_abs, tag = 'sflag constant byte address 0x0 - dummy sync flag']
  #allocation12 [shape = 's32[]', space=sflag, size = 0x4, offset = 0, fixed_abs, tag = 'sflag constant byte address 0x0 - dummy sync flag']
  #allocation13 [shape = 's32[]', space=sflag, size = 0x4, offset = 0, fixed_abs, tag = 'sflag constant byte address 0x0 - dummy sync flag']
  #allocation14 [shape = 's32[]', space=sflag, size = 0x4, offset = 0, fixed_abs, tag = 'sflag constant byte address 0x0 - dummy sync flag']
  #allocation15 [shape = 's32[]', space=sflag, size = 0x4, offset = 0, fixed_abs, tag = 'sflag constant byte address 0x0 - dummy sync flag']
  %s0 = inlined_call_operand.vmem [shape: s32[2,4], index: 0, kind: input, shape index: {}]
  %s1 = inlined_call_operand.vmem [shape: f32[16,32], index: 1, kind: input, shape index: {}]
  %s2 = inlined_call_operand.vmem [shape: bf16[128,32], index: 2, kind: input, shape index: {}]
  %s3 = inlined_call_operand.vmem [shape: f32[1,32], index: 3, kind: input, shape index: {}]
  %s4 = inlined_call_operand.vmem [shape: bf16[32,1], index: 4, kind: input, shape index: {}]
  %s5 = inlined_call_operand.<no memory space> [shape: f32[1,1], index: 5, kind: input, shape index: {}]
  %s6 = inlined_call_operand.vmem [shape: f32[4,1], index: 6, kind: output, shape index: {}]
  %s7 = sld [smem:[#allocation0]]
  $region274: #{csgnn_forward.7} parent=0
    _
  %s9 = ssub.s32 1, %s7
  %s10 = scalar_select 0, %s9, %s7
  %v11 = vstv %s5
  %12 = vst [vmem:[#allocation5] sm:$0x1] %v11
  $region1: #{csgnn_forward.7} parent=0
    #allocation6 [shape = 'u8[1024]{0}', space=smem, size = 0x400, scoped, tag = 'input window, operand 0, single buffered']
    #allocation7 [shape = 's32[1]{0}', space=sflag, size = 0x4, scoped, tag = 'scoped memory for csgnn_forward.7']
    %13 = vsyncpa [#allocation7], 0
    // Predicated region
    $region2: #{csgnn_forward.7} parent=1 // pred_check
      _
    $region3: #{csgnn_forward.7} parent=1 // pred_check_branch
      %15 = sbr.rel (0) target = $region5
    $region4: #{csgnn_forward.7} parent=1 // pred_region
      %s17 = ssub.s32 32, 32
      %18 = vsyncadd [#allocation7], %s17
      %s20 = sshll.u32 %s0, 4
      %s21 = int_to_ptr.vmem [resolvable:$true] %s20
      %23 = dma.vmem_to_smem %s21, 32, [#allocation6], [#allocation7]
    $region5: #{csgnn_forward.7} parent=1 // pred_fallthru
      _
    // Predicated region
    $region6: #{csgnn_forward.7} parent=1 // pred_check
      _
    $region7: #{csgnn_forward.7} parent=1 // pred_check_branch
      %25 = sbr.rel (0) target = $region9
    $region8: #{csgnn_forward.7} parent=1 // pred_region
      _
    $region9: #{csgnn_forward.7} parent=1 // pred_fallthru
      _
    // Predicated region
    $region10: #{csgnn_forward.7} parent=1 // pred_check
      _
    $region11: #{csgnn_forward.7} parent=1 // pred_check_branch
      %27 = sbr.rel (0) target = $region13
    $region12: #{csgnn_forward.7} parent=1 // pred_region
      _
    $region13: #{csgnn_forward.7} parent=1 // pred_fallthru
      _
    // Predicated region
    $region14: #{csgnn_forward.7} parent=1 // pred_check
      _
    $region15: #{csgnn_forward.7} parent=1 // pred_check_branch
      %29 = sbr.rel (0) target = $region17
    $region16: #{csgnn_forward.7} parent=1 // pred_region
      _
    $region17: #{csgnn_forward.7} parent=1 // pred_fallthru
      _
    // Predicated region
    $region18: #{csgnn_forward.7} parent=1 // pred_check
      _
    $region19: #{csgnn_forward.7} parent=1 // pred_check_branch
      %31 = sbr.rel (0) target = $region21
    $region20: #{csgnn_forward.7} parent=1 // pred_region
      _
    $region21: #{csgnn_forward.7} parent=1 // pred_fallthru
      _
    // Predicated region
    $region22: #{csgnn_forward.7} parent=1 // pred_check
      _
    $region23: #{csgnn_forward.7} parent=1 // pred_check_branch
      %33 = sbr.rel (0) target = $region25
    $region24: #{csgnn_forward.7} parent=1 // pred_region
      %34 = dma.done [#allocation7], 32
    $region25: #{csgnn_forward.7} parent=1 // pred_fallthru
      _
    %35 = sfence
    %s37 = sld [smem:[#allocation6]]
    %s38 = sld [smem:[#allocation6 + $0x80]]
    %s39 = scalar_lea.vmem %s1, %s37
    %p41 = scmp.lt.u32.totalorder 1, 8
    %p42 = pneg %p41
    // Predicated region
    $region26: #{csgnn_forward.7} parent=1 // pred_check
      _
    $region27: #{csgnn_forward.7} parent=1 // pred_check_branch
      %44 = sbr.rel (%p41) target = $region29
    $region28: #{csgnn_forward.7} parent=1 // pred_region
      %s59 = sand.u32 1, 7
      %p60 = scmp.eq.s32.totalorder %s59, 0
      %p61 = pneg %p60
      // Predicated region
      $region41: #{csgnn_forward.7} parent=28 // pred_check
        _
      $region42: #{csgnn_forward.7} parent=28 // pred_check_branch
        %63 = sbr.rel (%p60) target = $region44
      $region43: #{csgnn_forward.7} parent=28 // pred_region
        %s64 = sand.u32 1, 7
        %s65 = ssub.s32 1, %s64
        %s66 = scalar_lea.vmem %s39, %s65
        %s67 = ssub.s32 1, %s64
        %s68 = scalar_lea.vmem [#allocation2], %s67
        %s69 = sshllo.u32 0, %s64
        loop: start=0, step=1, limit=1
        $region45: #{csgnn_forward.7} parent=43 // loop_pre_header
          _
        $region46: #{csgnn_forward.7} parent=43 // loop_header
          %s71 = sphi 0, %s75
          %p72 = scmp.ge.s32.totalorder %s71, 1
          %s76 = sphi %s66, %s66
          %s77 = sphi %s68, %s68
        $region47: #{csgnn_forward.7} parent=43 // loop_header_branch
          %74 = sbr.rel (%p72) target = $region51
        $region48: #{csgnn_forward.7} parent=43 // loop_body
          %v78 = vld [vmem:[%s76] sm:%s69]
          %79 = vst [vmem:[%s77] sm:%s69] %v78
        $region49: #{csgnn_forward.7} parent=43 // loop_footer
          %s75 = sadd.s32 1, %s71
        $region50: #{csgnn_forward.7} parent=43 // loop_footer_branch
          %70 = sbr.rel target = $region46
        $region51: #{csgnn_forward.7} parent=43 // loop_exit
          _
      $region44: #{csgnn_forward.7} parent=28 // pred_fallthru
        _
    $region29: #{csgnn_forward.7} parent=1 // pred_fallthru
      _
    // Predicated region
    $region30: #{csgnn_forward.7} parent=1 // pred_check
      %p45 = pneg %p41
    $region31: #{csgnn_forward.7} parent=1 // pred_check_branch
      %47 = sbr.rel (%p45) target = $region33
    $region32: #{csgnn_forward.7} parent=1 // pred_region
      %s48 = sshllo.u32 0, 1
      loop: start=0, step=1, limit=1
      $region34: #{csgnn_forward.7} parent=32 // loop_pre_header
        _
      $region35: #{csgnn_forward.7} parent=32 // loop_header
        %s50 = sphi 0, %s54
        %p51 = scmp.ge.s32.totalorder %s50, 1
        %s55 = sphi %s39, %s39
        %s56 = sphi [#allocation2], [#allocation2]
      $region36: #{csgnn_forward.7} parent=32 // loop_header_branch
        %53 = sbr.rel (%p51) target = $region40
      $region37: #{csgnn_forward.7} parent=32 // loop_body
        %v57 = vld [vmem:[%s55] sm:%s48]
        %58 = vst [vmem:[%s56] sm:%s48] %v57
      $region38: #{csgnn_forward.7} parent=32 // loop_footer
        %s54 = sadd.s32 1, %s50
      $region39: #{csgnn_forward.7} parent=32 // loop_footer_branch
        %49 = sbr.rel target = $region35
      $region40: #{csgnn_forward.7} parent=32 // loop_exit
        _
    $region33: #{csgnn_forward.7} parent=1 // pred_fallthru
      _
    // Predicated region
    $region52: #{csgnn_forward.7} parent=1 // pred_check
      _
    $region53: #{csgnn_forward.7} parent=1 // pred_check_branch
      %82 = sbr.rel (0) target = $region55
    $region54: #{csgnn_forward.7} parent=1 // pred_region
      %83 = vsyncadd [#allocation4], 16
    $region55: #{csgnn_forward.7} parent=1 // pred_fallthru
      _
    %s84 = scalar_lea.vmem %s1, %s38
    %s85 = scalar_lea.sflag [#allocation4], 4
    %p87 = scmp.lt.u32.totalorder 1, 8
    %p88 = pneg %p87
    // Predicated region
    $region56: #{csgnn_forward.7} parent=1 // pred_check
      _
    $region57: #{csgnn_forward.7} parent=1 // pred_check_branch
      %90 = sbr.rel (%p87) target = $region59
    $region58: #{csgnn_forward.7} parent=1 // pred_region
      %s105 = sand.u32 1, 7
      %p106 = scmp.eq.s32.totalorder %s105, 0
      %p107 = pneg %p106
      // Predicated region
      $region71: #{csgnn_forward.7} parent=58 // pred_check
        _
      $region72: #{csgnn_forward.7} parent=58 // pred_check_branch
        %109 = sbr.rel (%p106) target = $region74
      $region73: #{csgnn_forward.7} parent=58 // pred_region
        %s110 = sand.u32 1, 7
        %s111 = ssub.s32 1, %s110
        %s112 = scalar_lea.vmem %s84, %s111
        %s113 = ssub.s32 1, %s110
        %s114 = scalar_lea.vmem [#allocation3], %s113
        %s115 = sshllo.u32 0, %s110
        loop: start=0, step=1, limit=1
        $region75: #{csgnn_forward.7} parent=73 // loop_pre_header
          _
        $region76: #{csgnn_forward.7} parent=73 // loop_header
          %s117 = sphi 0, %s121
          %p118 = scmp.ge.s32.totalorder %s117, 1
          %s122 = sphi %s112, %s112
          %s123 = sphi %s114, %s114
        $region77: #{csgnn_forward.7} parent=73 // loop_header_branch
          %120 = sbr.rel (%p118) target = $region81
        $region78: #{csgnn_forward.7} parent=73 // loop_body
          %v124 = vld [vmem:[%s122] sm:%s115]
          %125 = vst [vmem:[%s123] sm:%s115] %v124
        $region79: #{csgnn_forward.7} parent=73 // loop_footer
          %s121 = sadd.s32 1, %s117
        $region80: #{csgnn_forward.7} parent=73 // loop_footer_branch
          %116 = sbr.rel target = $region76
        $region81: #{csgnn_forward.7} parent=73 // loop_exit
          _
      $region74: #{csgnn_forward.7} parent=58 // pred_fallthru
        _
    $region59: #{csgnn_forward.7} parent=1 // pred_fallthru
      _
    // Predicated region
    $region60: #{csgnn_forward.7} parent=1 // pred_check
      %p91 = pneg %p87
    $region61: #{csgnn_forward.7} parent=1 // pred_check_branch
      %93 = sbr.rel (%p91) target = $region63
    $region62: #{csgnn_forward.7} parent=1 // pred_region
      %s94 = sshllo.u32 0, 1
      loop: start=0, step=1, limit=1
      $region64: #{csgnn_forward.7} parent=62 // loop_pre_header
        _
      $region65: #{csgnn_forward.7} parent=62 // loop_header
        %s96 = sphi 0, %s100
        %p97 = scmp.ge.s32.totalorder %s96, 1
        %s101 = sphi %s84, %s84
        %s102 = sphi [#allocation3], [#allocation3]
      $region66: #{csgnn_forward.7} parent=62 // loop_header_branch
        %99 = sbr.rel (%p97) target = $region70
      $region67: #{csgnn_forward.7} parent=62 // loop_body
        %v103 = vld [vmem:[%s101] sm:%s94]
        %104 = vst [vmem:[%s102] sm:%s94] %v103
      $region68: #{csgnn_forward.7} parent=62 // loop_footer
        %s100 = sadd.s32 1, %s96
      $region69: #{csgnn_forward.7} parent=62 // loop_footer_branch
        %95 = sbr.rel target = $region65
      $region70: #{csgnn_forward.7} parent=62 // loop_exit
        _
    $region63: #{csgnn_forward.7} parent=1 // pred_fallthru
      _
    // Predicated region
    $region82: #{csgnn_forward.7} parent=1 // pred_check
      _
    $region83: #{csgnn_forward.7} parent=1 // pred_check_branch
      %128 = sbr.rel (0) target = $region85
    $region84: #{csgnn_forward.7} parent=1 // pred_region
      %129 = vsyncadd %s85, 16
    $region85: #{csgnn_forward.7} parent=1 // pred_fallthru
      _
    %s130 = sld [smem:[#allocation6 + $0x1]]
    %s131 = sld [smem:[#allocation6 + $0x81]]
    %s132 = scalar_lea.vmem %s1, %s130
    %s133 = scalar_lea.vmem [#allocation2], 1
    %s134 = scalar_lea.sflag [#allocation4], 1
    %p136 = scmp.lt.u32.totalorder 1, 8
    %p137 = pneg %p136
    // Predicated region
    $region86: #{csgnn_forward.7} parent=1 // pred_check
      _
    $region87: #{csgnn_forward.7} parent=1 // pred_check_branch
      %139 = sbr.rel (%p136) target = $region89
    $region88: #{csgnn_forward.7} parent=1 // pred_region
      %s154 = sand.u32 1, 7
      %p155 = scmp.eq.s32.totalorder %s154, 0
      %p156 = pneg %p155
      // Predicated region
      $region101: #{csgnn_forward.7} parent=88 // pred_check
        _
      $region102: #{csgnn_forward.7} parent=88 // pred_check_branch
        %158 = sbr.rel (%p155) target = $region104
      $region103: #{csgnn_forward.7} parent=88 // pred_region
        %s159 = sand.u32 1, 7
        %s160 = ssub.s32 1, %s159
        %s161 = scalar_lea.vmem %s132, %s160
        %s162 = ssub.s32 1, %s159
        %s163 = scalar_lea.vmem %s133, %s162 [#allocation2]
        %s164 = sshllo.u32 0, %s159
        loop: start=0, step=1, limit=1
        $region105: #{csgnn_forward.7} parent=103 // loop_pre_header
          _
        $region106: #{csgnn_forward.7} parent=103 // loop_header
          %s166 = sphi 0, %s170
          %p167 = scmp.ge.s32.totalorder %s166, 1
          %s171 = sphi %s161, %s161
          %s172 = sphi %s163, %s163
        $region107: #{csgnn_forward.7} parent=103 // loop_header_branch
          %169 = sbr.rel (%p167) target = $region111
        $region108: #{csgnn_forward.7} parent=103 // loop_body
          %v173 = vld [vmem:[%s171] sm:%s164]
          %174 = vst [vmem:[%s172] sm:%s164] %v173
        $region109: #{csgnn_forward.7} parent=103 // loop_footer
          %s170 = sadd.s32 1, %s166
        $region110: #{csgnn_forward.7} parent=103 // loop_footer_branch
          %165 = sbr.rel target = $region106
        $region111: #{csgnn_forward.7} parent=103 // loop_exit
          _
      $region104: #{csgnn_forward.7} parent=88 // pred_fallthru
        _
    $region89: #{csgnn_forward.7} parent=1 // pred_fallthru
      _
    // Predicated region
    $region90: #{csgnn_forward.7} parent=1 // pred_check
      %p140 = pneg %p136
    $region91: #{csgnn_forward.7} parent=1 // pred_check_branch
      %142 = sbr.rel (%p140) target = $region93
    $region92: #{csgnn_forward.7} parent=1 // pred_region
      %s143 = sshllo.u32 0, 1
      loop: start=0, step=1, limit=1
      $region94: #{csgnn_forward.7} parent=92 // loop_pre_header
        _
      $region95: #{csgnn_forward.7} parent=92 // loop_header
        %s145 = sphi 0, %s149
        %p146 = scmp.ge.s32.totalorder %s145, 1
        %s150 = sphi %s132, %s132
        %s151 = sphi %s133, %s133
      $region96: #{csgnn_forward.7} parent=92 // loop_header_branch
        %148 = sbr.rel (%p146) target = $region100
      $region97: #{csgnn_forward.7} parent=92 // loop_body
        %v152 = vld [vmem:[%s150] sm:%s143]
        %153 = vst [vmem:[%s151] sm:%s143] %v152
      $region98: #{csgnn_forward.7} parent=92 // loop_footer
        %s149 = sadd.s32 1, %s145
      $region99: #{csgnn_forward.7} parent=92 // loop_footer_branch
        %144 = sbr.rel target = $region95
      $region100: #{csgnn_forward.7} parent=92 // loop_exit
        _
    $region93: #{csgnn_forward.7} parent=1 // pred_fallthru
      _
    // Predicated region
    $region112: #{csgnn_forward.7} parent=1 // pred_check
      _
    $region113: #{csgnn_forward.7} parent=1 // pred_check_branch
      %177 = sbr.rel (0) target = $region115
    $region114: #{csgnn_forward.7} parent=1 // pred_region
      %178 = vsyncadd %s134, 16
    $region115: #{csgnn_forward.7} parent=1 // pred_fallthru
      _
    %s179 = scalar_lea.vmem %s1, %s131
    %s180 = scalar_lea.vmem [#allocation3], 1
    %s181 = scalar_lea.sflag [#allocation4], 5
    %p183 = scmp.lt.u32.totalorder 1, 8
    %p184 = pneg %p183
    // Predicated region
    $region116: #{csgnn_forward.7} parent=1 // pred_check
      _
    $region117: #{csgnn_forward.7} parent=1 // pred_check_branch
      %186 = sbr.rel (%p183) target = $region119
    $region118: #{csgnn_forward.7} parent=1 // pred_region
      %s201 = sand.u32 1, 7
      %p202 = scmp.eq.s32.totalorder %s201, 0
      %p203 = pneg %p202
      // Predicated region
      $region131: #{csgnn_forward.7} parent=118 // pred_check
        _
      $region132: #{csgnn_forward.7} parent=118 // pred_check_branch
        %205 = sbr.rel (%p202) target = $region134
      $region133: #{csgnn_forward.7} parent=118 // pred_region
        %s206 = sand.u32 1, 7
        %s207 = ssub.s32 1, %s206
        %s208 = scalar_lea.vmem %s179, %s207
        %s209 = ssub.s32 1, %s206
        %s210 = scalar_lea.vmem %s180, %s209 [#allocation3]
        %s211 = sshllo.u32 0, %s206
        loop: start=0, step=1, limit=1
        $region135: #{csgnn_forward.7} parent=133 // loop_pre_header
          _
        $region136: #{csgnn_forward.7} parent=133 // loop_header
          %s213 = sphi 0, %s217
          %p214 = scmp.ge.s32.totalorder %s213, 1
          %s218 = sphi %s208, %s208
          %s219 = sphi %s210, %s210
        $region137: #{csgnn_forward.7} parent=133 // loop_header_branch
          %216 = sbr.rel (%p214) target = $region141
        $region138: #{csgnn_forward.7} parent=133 // loop_body
          %v220 = vld [vmem:[%s218] sm:%s211]
          %221 = vst [vmem:[%s219] sm:%s211] %v220
        $region139: #{csgnn_forward.7} parent=133 // loop_footer
          %s217 = sadd.s32 1, %s213
        $region140: #{csgnn_forward.7} parent=133 // loop_footer_branch
          %212 = sbr.rel target = $region136
        $region141: #{csgnn_forward.7} parent=133 // loop_exit
          _
      $region134: #{csgnn_forward.7} parent=118 // pred_fallthru
        _
    $region119: #{csgnn_forward.7} parent=1 // pred_fallthru
      _
    // Predicated region
    $region120: #{csgnn_forward.7} parent=1 // pred_check
      %p187 = pneg %p183
    $region121: #{csgnn_forward.7} parent=1 // pred_check_branch
      %189 = sbr.rel (%p187) target = $region123
    $region122: #{csgnn_forward.7} parent=1 // pred_region
      %s190 = sshllo.u32 0, 1
      loop: start=0, step=1, limit=1
      $region124: #{csgnn_forward.7} parent=122 // loop_pre_header
        _
      $region125: #{csgnn_forward.7} parent=122 // loop_header
        %s192 = sphi 0, %s196
        %p193 = scmp.ge.s32.totalorder %s192, 1
        %s197 = sphi %s179, %s179
        %s198 = sphi %s180, %s180
      $region126: #{csgnn_forward.7} parent=122 // loop_header_branch
        %195 = sbr.rel (%p193) target = $region130
      $region127: #{csgnn_forward.7} parent=122 // loop_body
        %v199 = vld [vmem:[%s197] sm:%s190]
        %200 = vst [vmem:[%s198] sm:%s190] %v199
      $region128: #{csgnn_forward.7} parent=122 // loop_footer
        %s196 = sadd.s32 1, %s192
      $region129: #{csgnn_forward.7} parent=122 // loop_footer_branch
        %191 = sbr.rel target = $region125
      $region130: #{csgnn_forward.7} parent=122 // loop_exit
        _
    $region123: #{csgnn_forward.7} parent=1 // pred_fallthru
      _
    // Predicated region
    $region142: #{csgnn_forward.7} parent=1 // pred_check
      _
    $region143: #{csgnn_forward.7} parent=1 // pred_check_branch
      %224 = sbr.rel (0) target = $region145
    $region144: #{csgnn_forward.7} parent=1 // pred_region
      %225 = vsyncadd %s181, 16
    $region145: #{csgnn_forward.7} parent=1 // pred_fallthru
      _
    %s226 = sld [smem:[#allocation6 + $0x2]]
    %s227 = sld [smem:[#allocation6 + $0x82]]
    %s228 = scalar_lea.vmem %s1, %s226
    %s229 = scalar_lea.vmem [#allocation2], 2
    %s230 = scalar_lea.sflag [#allocation4], 2
    %p232 = scmp.lt.u32.totalorder 1, 8
    %p233 = pneg %p232
    // Predicated region
    $region146: #{csgnn_forward.7} parent=1 // pred_check
      _
    $region147: #{csgnn_forward.7} parent=1 // pred_check_branch
      %235 = sbr.rel (%p232) target = $region149
    $region148: #{csgnn_forward.7} parent=1 // pred_region
      %s250 = sand.u32 1, 7
      %p251 = scmp.eq.s32.totalorder %s250, 0
      %p252 = pneg %p251
      // Predicated region
      $region161: #{csgnn_forward.7} parent=148 // pred_check
        _
      $region162: #{csgnn_forward.7} parent=148 // pred_check_branch
        %254 = sbr.rel (%p251) target = $region164
      $region163: #{csgnn_forward.7} parent=148 // pred_region
        %s255 = sand.u32 1, 7
        %s256 = ssub.s32 1, %s255
        %s257 = scalar_lea.vmem %s228, %s256
        %s258 = ssub.s32 1, %s255
        %s259 = scalar_lea.vmem %s229, %s258 [#allocation2]
        %s260 = sshllo.u32 0, %s255
        loop: start=0, step=1, limit=1
        $region165: #{csgnn_forward.7} parent=163 // loop_pre_header
          _
        $region166: #{csgnn_forward.7} parent=163 // loop_header
          %s262 = sphi 0, %s266
          %p263 = scmp.ge.s32.totalorder %s262, 1
          %s267 = sphi %s257, %s257
          %s268 = sphi %s259, %s259
        $region167: #{csgnn_forward.7} parent=163 // loop_header_branch
          %265 = sbr.rel (%p263) target = $region171
        $region168: #{csgnn_forward.7} parent=163 // loop_body
          %v269 = vld [vmem:[%s267] sm:%s260]
          %270 = vst [vmem:[%s268] sm:%s260] %v269
        $region169: #{csgnn_forward.7} parent=163 // loop_footer
          %s266 = sadd.s32 1, %s262
        $region170: #{csgnn_forward.7} parent=163 // loop_footer_branch
          %261 = sbr.rel target = $region166
        $region171: #{csgnn_forward.7} parent=163 // loop_exit
          _
      $region164: #{csgnn_forward.7} parent=148 // pred_fallthru
        _
    $region149: #{csgnn_forward.7} parent=1 // pred_fallthru
      _
    // Predicated region
    $region150: #{csgnn_forward.7} parent=1 // pred_check
      %p236 = pneg %p232
    $region151: #{csgnn_forward.7} parent=1 // pred_check_branch
      %238 = sbr.rel (%p236) target = $region153
    $region152: #{csgnn_forward.7} parent=1 // pred_region
      %s239 = sshllo.u32 0, 1
      loop: start=0, step=1, limit=1
      $region154: #{csgnn_forward.7} parent=152 // loop_pre_header
        _
      $region155: #{csgnn_forward.7} parent=152 // loop_header
        %s241 = sphi 0, %s245
        %p242 = scmp.ge.s32.totalorder %s241, 1
        %s246 = sphi %s228, %s228
        %s247 = sphi %s229, %s229
      $region156: #{csgnn_forward.7} parent=152 // loop_header_branch
        %244 = sbr.rel (%p242) target = $region160
      $region157: #{csgnn_forward.7} parent=152 // loop_body
        %v248 = vld [vmem:[%s246] sm:%s239]
        %249 = vst [vmem:[%s247] sm:%s239] %v248
      $region158: #{csgnn_forward.7} parent=152 // loop_footer
        %s245 = sadd.s32 1, %s241
      $region159: #{csgnn_forward.7} parent=152 // loop_footer_branch
        %240 = sbr.rel target = $region155
      $region160: #{csgnn_forward.7} parent=152 // loop_exit
        _
    $region153: #{csgnn_forward.7} parent=1 // pred_fallthru
      _
    // Predicated region
    $region172: #{csgnn_forward.7} parent=1 // pred_check
      _
    $region173: #{csgnn_forward.7} parent=1 // pred_check_branch
      %273 = sbr.rel (0) target = $region175
    $region174: #{csgnn_forward.7} parent=1 // pred_region
      %274 = vsyncadd %s230, 16
    $region175: #{csgnn_forward.7} parent=1 // pred_fallthru
      _
    %s275 = scalar_lea.vmem %s1, %s227
    %s276 = scalar_lea.vmem [#allocation3], 2
    %s277 = scalar_lea.sflag [#allocation4], 6
    %p279 = scmp.lt.u32.totalorder 1, 8
    %p280 = pneg %p279
    // Predicated region
    $region176: #{csgnn_forward.7} parent=1 // pred_check
      _
    $region177: #{csgnn_forward.7} parent=1 // pred_check_branch
      %282 = sbr.rel (%p279) target = $region179
    $region178: #{csgnn_forward.7} parent=1 // pred_region
      %s297 = sand.u32 1, 7
      %p298 = scmp.eq.s32.totalorder %s297, 0
      %p299 = pneg %p298
      // Predicated region
      $region191: #{csgnn_forward.7} parent=178 // pred_check
        _
      $region192: #{csgnn_forward.7} parent=178 // pred_check_branch
        %301 = sbr.rel (%p298) target = $region194
      $region193: #{csgnn_forward.7} parent=178 // pred_region
        %s302 = sand.u32 1, 7
        %s303 = ssub.s32 1, %s302
        %s304 = scalar_lea.vmem %s275, %s303
        %s305 = ssub.s32 1, %s302
        %s306 = scalar_lea.vmem %s276, %s305 [#allocation3]
        %s307 = sshllo.u32 0, %s302
        loop: start=0, step=1, limit=1
        $region195: #{csgnn_forward.7} parent=193 // loop_pre_header
          _
        $region196: #{csgnn_forward.7} parent=193 // loop_header
          %s309 = sphi 0, %s313
          %p310 = scmp.ge.s32.totalorder %s309, 1
          %s314 = sphi %s304, %s304
          %s315 = sphi %s306, %s306
        $region197: #{csgnn_forward.7} parent=193 // loop_header_branch
          %312 = sbr.rel (%p310) target = $region201
        $region198: #{csgnn_forward.7} parent=193 // loop_body
          %v316 = vld [vmem:[%s314] sm:%s307]
          %317 = vst [vmem:[%s315] sm:%s307] %v316
        $region199: #{csgnn_forward.7} parent=193 // loop_footer
          %s313 = sadd.s32 1, %s309
        $region200: #{csgnn_forward.7} parent=193 // loop_footer_branch
          %308 = sbr.rel target = $region196
        $region201: #{csgnn_forward.7} parent=193 // loop_exit
          _
      $region194: #{csgnn_forward.7} parent=178 // pred_fallthru
        _
    $region179: #{csgnn_forward.7} parent=1 // pred_fallthru
      _
    // Predicated region
    $region180: #{csgnn_forward.7} parent=1 // pred_check
      %p283 = pneg %p279
    $region181: #{csgnn_forward.7} parent=1 // pred_check_branch
      %285 = sbr.rel (%p283) target = $region183
    $region182: #{csgnn_forward.7} parent=1 // pred_region
      %s286 = sshllo.u32 0, 1
      loop: start=0, step=1, limit=1
      $region184: #{csgnn_forward.7} parent=182 // loop_pre_header
        _
      $region185: #{csgnn_forward.7} parent=182 // loop_header
        %s288 = sphi 0, %s292
        %p289 = scmp.ge.s32.totalorder %s288, 1
        %s293 = sphi %s275, %s275
        %s294 = sphi %s276, %s276
      $region186: #{csgnn_forward.7} parent=182 // loop_header_branch
        %291 = sbr.rel (%p289) target = $region190
      $region187: #{csgnn_forward.7} parent=182 // loop_body
        %v295 = vld [vmem:[%s293] sm:%s286]
        %296 = vst [vmem:[%s294] sm:%s286] %v295
      $region188: #{csgnn_forward.7} parent=182 // loop_footer
        %s292 = sadd.s32 1, %s288
      $region189: #{csgnn_forward.7} parent=182 // loop_footer_branch
        %287 = sbr.rel target = $region185
      $region190: #{csgnn_forward.7} parent=182 // loop_exit
        _
    $region183: #{csgnn_forward.7} parent=1 // pred_fallthru
      _
    // Predicated region
    $region202: #{csgnn_forward.7} parent=1 // pred_check
      _
    $region203: #{csgnn_forward.7} parent=1 // pred_check_branch
      %320 = sbr.rel (0) target = $region205
    $region204: #{csgnn_forward.7} parent=1 // pred_region
      %321 = vsyncadd %s277, 16
    $region205: #{csgnn_forward.7} parent=1 // pred_fallthru
      _
    %s322 = sld [smem:[#allocation6 + $0x3]]
    %s323 = sld [smem:[#allocation6 + $0x83]]
    %s324 = scalar_lea.vmem %s1, %s322
    %s325 = scalar_lea.vmem [#allocation2], 3
    %s326 = scalar_lea.sflag [#allocation4], 3
    %p328 = scmp.lt.u32.totalorder 1, 8
    %p329 = pneg %p328
    // Predicated region
    $region206: #{csgnn_forward.7} parent=1 // pred_check
      _
    $region207: #{csgnn_forward.7} parent=1 // pred_check_branch
      %331 = sbr.rel (%p328) target = $region209
    $region208: #{csgnn_forward.7} parent=1 // pred_region
      %s346 = sand.u32 1, 7
      %p347 = scmp.eq.s32.totalorder %s346, 0
      %p348 = pneg %p347
      // Predicated region
      $region221: #{csgnn_forward.7} parent=208 // pred_check
        _
      $region222: #{csgnn_forward.7} parent=208 // pred_check_branch
        %350 = sbr.rel (%p347) target = $region224
      $region223: #{csgnn_forward.7} parent=208 // pred_region
        %s351 = sand.u32 1, 7
        %s352 = ssub.s32 1, %s351
        %s353 = scalar_lea.vmem %s324, %s352
        %s354 = ssub.s32 1, %s351
        %s355 = scalar_lea.vmem %s325, %s354 [#allocation2]
        %s356 = sshllo.u32 0, %s351
        loop: start=0, step=1, limit=1
        $region225: #{csgnn_forward.7} parent=223 // loop_pre_header
          _
        $region226: #{csgnn_forward.7} parent=223 // loop_header
          %s358 = sphi 0, %s362
          %p359 = scmp.ge.s32.totalorder %s358, 1
          %s363 = sphi %s353, %s353
          %s364 = sphi %s355, %s355
        $region227: #{csgnn_forward.7} parent=223 // loop_header_branch
          %361 = sbr.rel (%p359) target = $region231
        $region228: #{csgnn_forward.7} parent=223 // loop_body
          %v365 = vld [vmem:[%s363] sm:%s356]
          %366 = vst [vmem:[%s364] sm:%s356] %v365
        $region229: #{csgnn_forward.7} parent=223 // loop_footer
          %s362 = sadd.s32 1, %s358
        $region230: #{csgnn_forward.7} parent=223 // loop_footer_branch
          %357 = sbr.rel target = $region226
        $region231: #{csgnn_forward.7} parent=223 // loop_exit
          _
      $region224: #{csgnn_forward.7} parent=208 // pred_fallthru
        _
    $region209: #{csgnn_forward.7} parent=1 // pred_fallthru
      _
    // Predicated region
    $region210: #{csgnn_forward.7} parent=1 // pred_check
      %p332 = pneg %p328
    $region211: #{csgnn_forward.7} parent=1 // pred_check_branch
      %334 = sbr.rel (%p332) target = $region213
    $region212: #{csgnn_forward.7} parent=1 // pred_region
      %s335 = sshllo.u32 0, 1
      loop: start=0, step=1, limit=1
      $region214: #{csgnn_forward.7} parent=212 // loop_pre_header
        _
      $region215: #{csgnn_forward.7} parent=212 // loop_header
        %s337 = sphi 0, %s341
        %p338 = scmp.ge.s32.totalorder %s337, 1
        %s342 = sphi %s324, %s324
        %s343 = sphi %s325, %s325
      $region216: #{csgnn_forward.7} parent=212 // loop_header_branch
        %340 = sbr.rel (%p338) target = $region220
      $region217: #{csgnn_forward.7} parent=212 // loop_body
        %v344 = vld [vmem:[%s342] sm:%s335]
        %345 = vst [vmem:[%s343] sm:%s335] %v344
      $region218: #{csgnn_forward.7} parent=212 // loop_footer
        %s341 = sadd.s32 1, %s337
      $region219: #{csgnn_forward.7} parent=212 // loop_footer_branch
        %336 = sbr.rel target = $region215
      $region220: #{csgnn_forward.7} parent=212 // loop_exit
        _
    $region213: #{csgnn_forward.7} parent=1 // pred_fallthru
      _
    // Predicated region
    $region232: #{csgnn_forward.7} parent=1 // pred_check
      _
    $region233: #{csgnn_forward.7} parent=1 // pred_check_branch
      %369 = sbr.rel (0) target = $region235
    $region234: #{csgnn_forward.7} parent=1 // pred_region
      %370 = vsyncadd %s326, 16
    $region235: #{csgnn_forward.7} parent=1 // pred_fallthru
      _
    %s371 = scalar_lea.vmem %s1, %s323
    %s372 = scalar_lea.vmem [#allocation3], 3
    %s373 = scalar_lea.sflag [#allocation4], 7
    %p375 = scmp.lt.u32.totalorder 1, 8
    %p376 = pneg %p375
    // Predicated region
    $region236: #{csgnn_forward.7} parent=1 // pred_check
      _
    $region237: #{csgnn_forward.7} parent=1 // pred_check_branch
      %378 = sbr.rel (%p375) target = $region239
    $region238: #{csgnn_forward.7} parent=1 // pred_region
      %s393 = sand.u32 1, 7
      %p394 = scmp.eq.s32.totalorder %s393, 0
      %p395 = pneg %p394
      // Predicated region
      $region251: #{csgnn_forward.7} parent=238 // pred_check
        _
      $region252: #{csgnn_forward.7} parent=238 // pred_check_branch
        %397 = sbr.rel (%p394) target = $region254
      $region253: #{csgnn_forward.7} parent=238 // pred_region
        %s398 = sand.u32 1, 7
        %s399 = ssub.s32 1, %s398
        %s400 = scalar_lea.vmem %s371, %s399
        %s401 = ssub.s32 1, %s398
        %s402 = scalar_lea.vmem %s372, %s401 [#allocation3]
        %s403 = sshllo.u32 0, %s398
        loop: start=0, step=1, limit=1
        $region255: #{csgnn_forward.7} parent=253 // loop_pre_header
          _
        $region256: #{csgnn_forward.7} parent=253 // loop_header
          %s405 = sphi 0, %s409
          %p406 = scmp.ge.s32.totalorder %s405, 1
          %s410 = sphi %s400, %s400
          %s411 = sphi %s402, %s402
        $region257: #{csgnn_forward.7} parent=253 // loop_header_branch
          %408 = sbr.rel (%p406) target = $region261
        $region258: #{csgnn_forward.7} parent=253 // loop_body
          %v412 = vld [vmem:[%s410] sm:%s403]
          %413 = vst [vmem:[%s411] sm:%s403] %v412
        $region259: #{csgnn_forward.7} parent=253 // loop_footer
          %s409 = sadd.s32 1, %s405
        $region260: #{csgnn_forward.7} parent=253 // loop_footer_branch
          %404 = sbr.rel target = $region256
        $region261: #{csgnn_forward.7} parent=253 // loop_exit
          _
      $region254: #{csgnn_forward.7} parent=238 // pred_fallthru
        _
    $region239: #{csgnn_forward.7} parent=1 // pred_fallthru
      _
    // Predicated region
    $region240: #{csgnn_forward.7} parent=1 // pred_check
      %p379 = pneg %p375
    $region241: #{csgnn_forward.7} parent=1 // pred_check_branch
      %381 = sbr.rel (%p379) target = $region243
    $region242: #{csgnn_forward.7} parent=1 // pred_region
      %s382 = sshllo.u32 0, 1
      loop: start=0, step=1, limit=1
      $region244: #{csgnn_forward.7} parent=242 // loop_pre_header
        _
      $region245: #{csgnn_forward.7} parent=242 // loop_header
        %s384 = sphi 0, %s388
        %p385 = scmp.ge.s32.totalorder %s384, 1
        %s389 = sphi %s371, %s371
        %s390 = sphi %s372, %s372
      $region246: #{csgnn_forward.7} parent=242 // loop_header_branch
        %387 = sbr.rel (%p385) target = $region250
      $region247: #{csgnn_forward.7} parent=242 // loop_body
        %v391 = vld [vmem:[%s389] sm:%s382]
        %392 = vst [vmem:[%s390] sm:%s382] %v391
      $region248: #{csgnn_forward.7} parent=242 // loop_footer
        %s388 = sadd.s32 1, %s384
      $region249: #{csgnn_forward.7} parent=242 // loop_footer_branch
        %383 = sbr.rel target = $region245
      $region250: #{csgnn_forward.7} parent=242 // loop_exit
        _
    $region243: #{csgnn_forward.7} parent=1 // pred_fallthru
      _
    // Predicated region
    $region262: #{csgnn_forward.7} parent=1 // pred_check
      _
    $region263: #{csgnn_forward.7} parent=1 // pred_check_branch
      %416 = sbr.rel (0) target = $region265
    $region264: #{csgnn_forward.7} parent=1 // pred_region
      %417 = vsyncadd %s373, 16
    $region265: #{csgnn_forward.7} parent=1 // pred_fallthru
      _
    %s418 = smul.u32 1, 1
    %s419 = sshll.u32 %s418, 4
    %420 = dma.done [#allocation4], %s419
    %s421 = sshll.u32 %s418, 4
    %422 = dma.done %s85, %s421
    %s423 = sshll.u32 %s418, 4
    %424 = dma.done %s134, %s423
    %s425 = sshll.u32 %s418, 4
    %426 = dma.done %s181, %s425
    %s427 = sshll.u32 %s418, 4
    %428 = dma.done %s230, %s427
    %s429 = sshll.u32 %s418, 4
    %430 = dma.done %s277, %s429
    %s431 = sshll.u32 %s418, 4
    %432 = dma.done %s326, %s431
    %s433 = sshll.u32 %s418, 4
    %434 = dma.done %s373, %s433
    %v435 = vld [vmem:[#allocation2] sm:$0xf]
    %v436 = vld [vmem:[#allocation3] sm:$0xf]
    %v437 = vadd.f32 %v435, %v436
    %v438 = vmul.f32 %v435, %v436
    %440 = vrot.lane.b32.xlu0 %v438, 32
    %v441 = vpop.permute.xlu0 %440
    %444 = vrot.lane.b32.xlu0 %v435, 64
    %v445 = vpop.permute.xlu0 %444
    %448 = vrot.lane.b32.xlu0 %v436, 96
    %v449 = vpop.permute.xlu0 %448
    %vm451 = vcmask 261120
    %v452 = vsel %vm451, %v437, %v441
    %vm453 = vcmask 523264
    %v454 = vsel %vm453, %v452, %v445
    %vm455 = vcmask 785408
    %v456 = vsel %vm455, %v454, %v449
    %v457 = vpack.c.bf16 %v456, %v456
    %v458 = vld [vmem:[%s2] sm:$0xf]
    %v459 = vld [vmem:[%s2 + $0x4] sm:$0xf]
    %v460 = vld [vmem:[%s2 + $0x8] sm:$0xf]
    %v461 = vld [vmem:[%s2 + $0xc] sm:$0xf]
    %v462 = vld [vmem:[%s2 + $0x10] sm:$0xf]
    %v463 = vld [vmem:[%s2 + $0x14] sm:$0xf]
    %v464 = vld [vmem:[%s2 + $0x18] sm:$0xf]
    %v465 = vld [vmem:[%s2 + $0x1c] sm:$0xf]
    %v466 = vld [vmem:[%s2 + $0x20] sm:$0xf]
    %v467 = vld [vmem:[%s2 + $0x24] sm:$0xf]
    %v468 = vld [vmem:[%s2 + $0x28] sm:$0xf]
    %v469 = vld [vmem:[%s2 + $0x2c] sm:$0xf]
    %v470 = vld [vmem:[%s2 + $0x30] sm:$0xf]
    %v471 = vld [vmem:[%s2 + $0x34] sm:$0xf]
    %v472 = vld [vmem:[%s2 + $0x38] sm:$0xf]
    %v473 = vld [vmem:[%s2 + $0x3c] sm:$0xf]
    %v474 = vld [vmem:[%s3] sm:$0x1]
    %v476 = vlaneseq
    %v477 = vshrl.u32 %v476, 7
    %v478 = vsub.s32 0, %v477
    %v479 = vrot.slane %v474, %v478
    %v497 = vunpack.c.l.b16 %v458
    %v498 = vunpack.c.l.b16 %v459
    %v499 = vunpack.c.l.b16 %v460
    %v500 = vunpack.c.l.b16 %v461
    %v501 = vunpack.c.l.b16 %v462
    %v502 = vunpack.c.l.b16 %v463
    %v503 = vunpack.c.l.b16 %v464
    %v504 = vunpack.c.l.b16 %v465
    %v505 = vunpack.c.l.b16 %v466
    %v506 = vunpack.c.l.b16 %v467
    %v507 = vunpack.c.l.b16 %v468
    %v508 = vunpack.c.l.b16 %v469
    %v509 = vunpack.c.l.b16 %v470
    %v510 = vunpack.c.l.b16 %v471
    %v511 = vunpack.c.l.b16 %v472
    %v512 = vunpack.c.l.b16 %v473
    %v513 = vpack.c.b16 %v498, %v497
    %v514 = vpack.c.b16 %v500, %v499
    %v515 = vpack.c.b16 %v502, %v501
    %v516 = vpack.c.b16 %v504, %v503
    %v517 = vpack.c.b16 %v506, %v505
    %v518 = vpack.c.b16 %v508, %v507
    %v519 = vpack.c.b16 %v510, %v509
    %v520 = vpack.c.b16 %v512, %v511
    %529 = vmatprep.subr.bf16.mxu0 0
    %530 = vmatpush1.bf16.msra.mxu0 %v513
    %531 = vmatprep.subr.bf16.mxu0 0
    %532 = vmatpush1.bf16.msra.mxu0 %v514
    %533 = vmatprep.subr.bf16.mxu0 0
    %534 = vmatpush1.bf16.msra.mxu0 %v515
    %535 = vmatprep.subr.bf16.mxu0 0
    %536 = vmatpush1.bf16.msra.mxu0 %v516
    %537 = vmatprep.subr.bf16.mxu0 0
    %538 = vmatpush1.bf16.msra.mxu0 %v517
    %539 = vmatprep.subr.bf16.mxu0 0
    %540 = vmatpush1.bf16.msra.mxu0 %v518
    %541 = vmatprep.subr.bf16.mxu0 0
    %542 = vmatpush1.bf16.msra.mxu0 %v519
    %543 = vmatprep.subr.bf16.mxu0 0
    %544 = vmatpush1.bf16.msra.mxu0 %v520
    %545 = vmatprep.subr.bf16.mxu0 0
    %546 = vmatpush1.bf16.msra.mxu0 0
    %547 = vmatprep.subr.bf16.mxu0 0
    %548 = vmatpush1.bf16.msra.mxu0 0
    %549 = vmatprep.subr.bf16.mxu0 0
    %550 = vmatpush1.bf16.msra.mxu0 0
    %551 = vmatprep.subr.bf16.mxu0 0
    %552 = vmatpush1.bf16.msra.mxu0 0
    %553 = vmatprep.subr.bf16.mxu0 0
    %554 = vmatpush1.bf16.msra.mxu0 0
    %555 = vmatprep.subr.bf16.mxu0 0
    %556 = vmatpush1.bf16.msra.mxu0 0
    %557 = vmatprep.subr.bf16.mxu0 0
    %558 = vmatpush1.bf16.msra.mxu0 0
    %559 = vmatprep.subr.bf16.mxu0 0
    %560 = vmatpush1.bf16.msra.mxu0 0
    %561 = vmatprep.mubr.bf16.mxu0 0
    %562 = vmatmul.mubr.bf16.gmra.mrb[0].mxu0 %v457
    %v563 = vpop.f32.mrb[0].mxu0
    %v564 = vadd.f32 %v479, %v563
    %v565 = vpop.f32.mrb[0].mxu0
    %v566 = vpop.f32.mrb[0].mxu0
    %v567 = vpop.f32.mrb[0].mxu0
    %568 = vdwg.mxu0
    %v569 = vmax.f32 %v564, 0.0
    %v570 = vpack.c.bf16 %v569, %v569
    %v571 = vld [vmem:[%s4] sm:$0xf]
    %v572 = vld [vmem:[%s4 + $0x4] sm:$0xf]
    %v573 = vld [vmem:[%s4 + $0x8] sm:$0xf]
    %v574 = vld [vmem:[%s4 + $0xc] sm:$0xf]
    %v575 = vld [vmem:[#allocation5] sm:$0x1]
    %v577 = vlaneseq
    %v578 = vshrl.u32 %v577, 7
    %v579 = vsub.s32 0, %v578
    %v580 = vrot.slane %v575, %v579
    %v586 = vunpack.c.l.b16 %v571
    %v587 = vunpack.c.l.b16 %v572
    %v588 = vunpack.c.l.b16 %v573
    %v589 = vunpack.c.l.b16 %v574
    %v590 = vpack.c.b16 %v587, %v586
    %v591 = vpack.c.b16 %v589, %v588
    %v595 = vsel %vm451, %v570, 0
    %597 = vmatprep.subr.bf16.mxu0 0
    %598 = vmatpush1.bf16.msra.mxu0 %v590
    %599 = vmatprep.subr.bf16.mxu0 0
    %600 = vmatpush1.bf16.msra.mxu0 %v591
    %601 = vmatprep.subr.bf16.mxu0 0
    %602 = vmatpush1.bf16.msra.mxu0 0
    %603 = vmatprep.subr.bf16.mxu0 0
    %604 = vmatpush1.bf16.msra.mxu0 0
    %605 = vmatprep.subr.bf16.mxu0 0
    %606 = vmatpush1.bf16.msra.mxu0 0
    %607 = vmatprep.subr.bf16.mxu0 0
    %608 = vmatpush1.bf16.msra.mxu0 0
    %609 = vmatprep.subr.bf16.mxu0 0
    %610 = vmatpush1.bf16.msra.mxu0 0
    %611 = vmatprep.subr.bf16.mxu0 0
    %612 = vmatpush1.bf16.msra.mxu0 0
    %613 = vmatprep.subr.bf16.mxu0 0
    %614 = vmatpush1.bf16.msra.mxu0 0
    %615 = vmatprep.subr.bf16.mxu0 0
    %616 = vmatpush1.bf16.msra.mxu0 0
    %617 = vmatprep.subr.bf16.mxu0 0
    %618 = vmatpush1.bf16.msra.mxu0 0
    %619 = vmatprep.subr.bf16.mxu0 0
    %620 = vmatpush1.bf16.msra.mxu0 0
    %621 = vmatprep.subr.bf16.mxu0 0
    %622 = vmatpush1.bf16.msra.mxu0 0
    %623 = vmatprep.subr.bf16.mxu0 0
    %624 = vmatpush1.bf16.msra.mxu0 0
    %625 = vmatprep.subr.bf16.mxu0 0
    %626 = vmatpush1.bf16.msra.mxu0 0
    %627 = vmatprep.subr.bf16.mxu0 0
    %628 = vmatpush1.bf16.msra.mxu0 0
    %629 = vmatprep.mubr.bf16.mxu0 0
    %630 = vmatmul.mubr.bf16.gmra.mrb[0].mxu0 %v595
    %v631 = vpop.f32.mrb[0].mxu0
    %v632 = vadd.f32 %v580, %v631
    %v633 = vpop.f32.mrb[0].mxu0
    %v634 = vpop.f32.mrb[0].mxu0
    %v635 = vpop.f32.mrb[0].mxu0
    %636 = vdwg.mxu0
    %vm637 = vcmask 3072
    %638 = vst.msk [vmem:[%s6] sm:$0xf] %vm637, %v632
    // Predicated region
    $region266: #{csgnn_forward.7} parent=1 // pred_check
      _
    $region267: #{csgnn_forward.7} parent=1 // pred_check_branch
      %640 = sbr.rel (0) target = $region269
    $region268: #{csgnn_forward.7} parent=1 // pred_region
      _
    $region269: #{csgnn_forward.7} parent=1 // pred_fallthru
      _
    // Predicated region
    $region270: #{csgnn_forward.7} parent=1 // pred_check
      _
    $region271: #{csgnn_forward.7} parent=1 // pred_check_branch
      %642 = sbr.rel (0) target = $region273
    $region272: #{csgnn_forward.7} parent=1 // pred_region
      _
    $region273: #{csgnn_forward.7} parent=1 // pred_fallthru
      _
    %643 = vsyncpa [#allocation7], 1
  %644 = vsyncmov [#allocation4]
  %s645 = vpop.sfrf %644
  %p646 = scmp.eq.s32.totalorder %s645, 0
  %p647 = pneg %p646
  %649 = shalt.err (%p647)
  %s650 = scalar_lea.sflag [#allocation4], 1
  %651 = vsyncmov %s650
  %s652 = vpop.sfrf %651
  %p653 = scmp.eq.s32.totalorder %s652, 0
  %p654 = pneg %p653
  %656 = shalt.err (%p654)
  %s657 = scalar_lea.sflag [#allocation4], 2
  %658 = vsyncmov %s657
  %s659 = vpop.sfrf %658
  %p660 = scmp.eq.s32.totalorder %s659, 0
  %p661 = pneg %p660
  %663 = shalt.err (%p661)
  %s664 = scalar_lea.sflag [#allocation4], 3
  %665 = vsyncmov %s664
  %s666 = vpop.sfrf %665
  %p667 = scmp.eq.s32.totalorder %s666, 0
  %p668 = pneg %p667
  %670 = shalt.err (%p668)
  %s671 = scalar_lea.sflag [#allocation4], 4
  %672 = vsyncmov %s671
  %s673 = vpop.sfrf %672
  %p674 = scmp.eq.s32.totalorder %s673, 0
  %p675 = pneg %p674
  %677 = shalt.err (%p675)
  %s678 = scalar_lea.sflag [#allocation4], 5
  %679 = vsyncmov %s678
  %s680 = vpop.sfrf %679
  %p681 = scmp.eq.s32.totalorder %s680, 0
  %p682 = pneg %p681
  %684 = shalt.err (%p682)
  %s685 = scalar_lea.sflag [#allocation4], 6
  %686 = vsyncmov %s685
  %s687 = vpop.sfrf %686
  %p688 = scmp.eq.s32.totalorder %s687, 0
  %p689 = pneg %p688
  %691 = shalt.err (%p689)
  %s692 = scalar_lea.sflag [#allocation4], 7
  %693 = vsyncmov %s692
  %s694 = vpop.sfrf %693
  %p695 = scmp.eq.s32.totalorder %s694, 0
  %p696 = pneg %p695
  %698 = shalt.err (%p696)

</llo_original>
